<compile_context>
chip_gen: v6e
topology: v6e:2x2x1
jax: 0.10.0
libtpu: 0.0.40
codegen_flags: <defaults>
</compile_context>

<pallas_src>
import math

import jax
import jax.numpy as jnp
import numpy as np
from jax import lax
from jax.experimental import pallas as pl
from jax.experimental.pallas import tpu as pltpu

# Module-consistent small shapes.
N, S, E = 2, 8, 32              # batch, seq, embed_size
HEADS, HEAD_DIM = 4, 8          # heads, embed_size // heads
FF_HIDDEN = 64                  # ff_hidden_size
VOCAB = 50                      # vocab_size
MAX_LEN = 16                    # max_length
NUM_LAYERS = 2                  # num_layers
EPS = 1e-5                      # nn.LayerNorm default eps
NS = N * S                      # flattened (batch * seq) rows


def gpt2_kernel(x_ref, bias_ref, wqkv_ref, wo_ref, w1_ref, w2_ref, vec_ref,
                o_ref):
    h = x_ref[...]                       # (NS, E)
    bias = bias_ref[...]                 # (NS, NS) additive mask (0 / -1e20)

    for l in range(NUM_LAYERS):          # static unroll over layers
        wqkv = wqkv_ref[l]               # (E, 3E), Q columns pre-scaled
        wo = wo_ref[l]                   # (E, E)
        w1 = w1_ref[l]                   # (E, FF)
        w2 = w2_ref[l]                   # (FF, E)
        vec = vec_ref[l]                 # (8, FF) packed vector params
        bo = vec[0:1, 0:E]               # fc_out bias
        g1 = vec[1:2, 0:E]               # LN1 gamma
        b1 = vec[2:3, 0:E]               # LN1 beta
        bf1 = vec[3:4, :]                # fc1 bias (FF wide)
        bf2 = vec[4:5, 0:E]              # fc2 bias
        g2 = vec[5:6, 0:E]               # LN2 gamma
        b2 = vec[6:7, 0:E]               # LN2 beta

        # Fused Q|K|V projection (block-diagonal per-head linears, no bias).
        qkv = jnp.dot(h, wqkv, preferred_element_type=jnp.float32)  # (NS, 3E)

        head_outs = []
        for hd in range(HEADS):          # static unroll over heads
            lo = hd * HEAD_DIM
            q_h = qkv[:, lo:lo + HEAD_DIM]
            k_h = qkv[:, E + lo:E + lo + HEAD_DIM]
            v_h = qkv[:, 2 * E + lo:2 * E + lo + HEAD_DIM]
            e = jnp.dot(q_h, k_h.T, preferred_element_type=jnp.float32) + bias
            e = e - jnp.max(e, axis=-1, keepdims=True)
            p = jnp.exp(e)
            p = p * pl.reciprocal(jnp.sum(p, axis=-1, keepdims=True),
                                  approx=True)
            head_outs.append(
                jnp.dot(p, v_h, preferred_element_type=jnp.float32))
        attn = jnp.concatenate(head_outs, axis=-1)                   # (NS, E)
        attn = jnp.dot(attn, wo, preferred_element_type=jnp.float32) + bo

        # Residual + LayerNorm 1
        h1 = attn + h
        mu1 = jnp.mean(h1, axis=-1, keepdims=True)
        var1 = jnp.mean((h1 - mu1) ** 2, axis=-1, keepdims=True)
        y1 = (h1 - mu1) * lax.rsqrt(var1 + EPS) * g1 + b1

        # FeedForward
        f = jnp.dot(y1, w1, preferred_element_type=jnp.float32) + bf1
        f = jnp.maximum(f, 0.0)
        f = jnp.dot(f, w2, preferred_element_type=jnp.float32) + bf2

        # Residual + LayerNorm 2
        h2 = f + y1
        mu2 = jnp.mean(h2, axis=-1, keepdims=True)
        var2 = jnp.mean((h2 - mu2) ** 2, axis=-1, keepdims=True)
        h = (h2 - mu2) * lax.rsqrt(var2 + EPS) * g2 + b2

    o_ref[...] = h


def gpt2_forward(x_flat, bias, wqkv, wo, w1, w2, vec):
    args = (x_flat, bias, wqkv, wo, w1, w2, vec)

    def full_spec(a):
        zeros = (0,) * a.ndim
        return pl.BlockSpec(a.shape, lambda i, z=zeros: z)

    return pl.pallas_call(
        gpt2_kernel,
        out_shape=jax.ShapeDtypeStruct((NS, E), jnp.float32),
        grid=(1,),
        in_specs=[full_spec(a) for a in args],
        out_specs=pl.BlockSpec((NS, E), lambda i: (0, 0)),
        compiler_params=pltpu.CompilerParams(
            dimension_semantics=("arbitrary",)),
    )(*args)


def make_pos_encoding(embed_size, max_len):
    pe = np.zeros((max_len, embed_size), dtype=np.float32)
    for pos in range(max_len):
        for i in range(0, embed_size, 2):
            pe[pos, i] = math.sin(pos / 10000 ** (2 * i / embed_size))
            pe[pos, i + 1] = math.cos(pos / 10000 ** (2 * (i + 1) / embed_size))
    return jnp.asarray(pe)[None]            # (1, max_len, E)


def layernorm_ref(x):
    mu = jnp.mean(x, axis=-1, keepdims=True)
    var = jnp.mean((x - mu) ** 2, axis=-1, keepdims=True)
    return (x - mu) / jnp.sqrt(var + EPS)


def ref_block(x, mask, p):
    """Pure-JAX reference mirroring the PyTorch TransformerBlock."""
    Wq, Wk, Wv, Wo, bo, W1, bf1, W2, bf2 = p
    xs = x.reshape(N, S, HEADS, HEAD_DIM)
    q = xs @ Wq.T
    k = xs @ Wk.T
    v = xs @ Wv.T
    energy = jnp.einsum('nqhd,nkhd->nhqk', q, k)
    energy = jnp.where(mask[None, None] == 0, jnp.float32(-1e20), energy)
    attention = jax.nn.softmax(energy / (E ** 0.5), axis=3)
    out = jnp.einsum('nhql,nlhd->nqhd', attention, v).reshape(N, S, E)
    out = out @ Wo.T + bo
    y1 = layernorm_ref(out + x)
    f = jnp.maximum(y1 @ W1.T + bf1, 0.0) @ W2.T + bf2
    return layernorm_ref(f + y1)


if __name__ == "__main__":
    key = jax.random.PRNGKey(0)
    k_tok, k_emb, *layer_keys = jax.random.split(key, 2 + NUM_LAYERS)

    tokens = jax.random.randint(k_tok, (N, S), 0, VOCAB)
    emb_table = jax.random.normal(k_emb, (VOCAB, E), dtype=jnp.float32)
    pe = make_pos_encoding(E, MAX_LEN)
    mask = jnp.tril(jnp.ones((S, S), dtype=jnp.float32))   # causal mask

    def u(k, shape, fan_in):
        bnd = 1.0 / math.sqrt(fan_in)
        return jax.random.uniform(k, shape, jnp.float32, -bnd, bnd)

    eye_h = jnp.eye(HEADS, dtype=jnp.float32)
    inv_sqrt_e = jnp.float32(1.0 / math.sqrt(E))

    ref_params, wqkv_l, wo_l, w1_l, w2_l, vec_l = [], [], [], [], [], []
    for lk in layer_keys:
        ks = jax.random.split(lk, 9)
        Wq = u(ks[0], (HEAD_DIM, HEAD_DIM), HEAD_DIM)   # nn.Linear(head_dim, head_dim)
        Wk = u(ks[1], (HEAD_DIM, HEAD_DIM), HEAD_DIM)
        Wv = u(ks[2], (HEAD_DIM, HEAD_DIM), HEAD_DIM)
        Wo = u(ks[3], (E, E), E)                        # fc_out
        bo = u(ks[4], (E,), E)
        W1 = u(ks[5], (FF_HIDDEN, E), E)                # fc1
        bf1 = u(ks[6], (FF_HIDDEN,), E)
        W2 = u(ks[7], (E, FF_HIDDEN), FF_HIDDEN)        # fc2
        bf2 = u(ks[8], (E,), FF_HIDDEN)
        ref_params.append((Wq, Wk, Wv, Wo, bo, W1, bf1, W2, bf2))

        # Packed kernel weights (block-diagonal per-head QKV, Q pre-scaled).
        wqkv_l.append(jnp.concatenate(
            [jnp.kron(eye_h, Wq.T) * inv_sqrt_e,
             jnp.kron(eye_h, Wk.T),
             jnp.kron(eye_h, Wv.T)], axis=1))           # (E, 3E)
        wo_l.append(Wo.T)                               # (E, E)
        w1_l.append(W1.T)                               # (E, FF)
        w2_l.append(W2.T)                               # (FF, E)
        v = jnp.zeros((8, FF_HIDDEN), jnp.float32)
        v = v.at[0, :E].set(bo)
        v = v.at[1, :E].set(1.0)    # LN1 gamma
        # row 2: LN1 beta = 0
        v = v.at[3, :].set(bf1)
        v = v.at[4, :E].set(bf2)
        v = v.at[5, :E].set(1.0)    # LN2 gamma
        # row 6: LN2 beta = 0
        vec_l.append(v)

    wqkv = jnp.stack(wqkv_l)
    wo = jnp.stack(wo_l)
    w1 = jnp.stack(w1_l)
    w2 = jnp.stack(w2_l)
    vec = jnp.stack(vec_l)

    # Additive attention bias over the flattened (N*S, N*S) score matrix:
    # 0 where (same batch element AND causal), -1e20 elsewhere.  This makes
    # one softmax over the flattened rows exactly equal to per-batch softmax.
    big_mask = jnp.kron(jnp.eye(N, dtype=jnp.float32), mask)
    bias = jnp.where(big_mask == 0, jnp.float32(-1e20), jnp.float32(0.0))

    # word embedding (gather stays as JAX glue) + positional encoding
    x = jnp.take(emb_table, tokens, axis=0) + pe[:, :S]          # (N, S, E)

    out = gpt2_forward(x.reshape(NS, E), bias, wqkv, wo, w1, w2, vec)
    out = jax.block_until_ready(out).reshape(N, S, E)

    x_ref = x
    for p in ref_params:
        x_ref = ref_block(x_ref, mask, p)

    # approx-reciprocal softmax => slightly looser tolerance than exact math
    assert np.allclose(np.asarray(out), np.asarray(x_ref), atol=2e-3, rtol=2e-3)
    print("KERNEL_OK")
</pallas_src>

<mosaic_0001>
module attributes {stable_mosaic.version = 11 : i64} {
  func.func @gpt2_kernel(%arg0: i32, %arg1: memref<16x32xf32, #tpu.memory_space<vmem>>, %arg2: memref<16x16xf32, #tpu.memory_space<vmem>>, %arg3: memref<2x32x96xf32, #tpu.memory_space<vmem>>, %arg4: memref<2x32x32xf32, #tpu.memory_space<vmem>>, %arg5: memref<2x32x64xf32, #tpu.memory_space<vmem>>, %arg6: memref<2x64x32xf32, #tpu.memory_space<vmem>>, %arg7: memref<2x8x64xf32, #tpu.memory_space<vmem>>, %arg8: memref<16x32xf32, #tpu.memory_space<vmem>>) attributes {dimension_semantics = [#tpu.dimension_semantics<arbitrary>], iteration_bounds = array<i64: 1>, scalar_prefetch = 0 : i64, scratch_operands = 0 : i64, tpu.core_type = #tpu.core_type<tc>, window_params = [{pipeline_mode = #tpu.pipeline_mode<synchronous>, transform_indices = @transform_0, window_bounds = array<i64: 16, 32>}, {pipeline_mode = #tpu.pipeline_mode<synchronous>, transform_indices = @transform_1, window_bounds = array<i64: 16, 16>}, {pipeline_mode = #tpu.pipeline_mode<synchronous>, transform_indices = @transform_2, window_bounds = array<i64: 2, 32, 96>}, {pipeline_mode = #tpu.pipeline_mode<synchronous>, transform_indices = @transform_3, window_bounds = array<i64: 2, 32, 32>}, {pipeline_mode = #tpu.pipeline_mode<synchronous>, transform_indices = @transform_4, window_bounds = array<i64: 2, 32, 64>}, {pipeline_mode = #tpu.pipeline_mode<synchronous>, transform_indices = @transform_5, window_bounds = array<i64: 2, 64, 32>}, {pipeline_mode = #tpu.pipeline_mode<synchronous>, transform_indices = @transform_6, window_bounds = array<i64: 2, 8, 64>}, {pipeline_mode = #tpu.pipeline_mode<synchronous>, transform_indices = @transform_7, window_bounds = array<i64: 16, 32>}]} {
    %c0 = arith.constant 0 : index
    %c0_0 = arith.constant 0 : index
    %0 = vector.load %arg1[%c0, %c0_0] : memref<16x32xf32, #tpu.memory_space<vmem>>, vector<16x32xf32>
    %c0_1 = arith.constant 0 : index
    %c0_2 = arith.constant 0 : index
    %1 = vector.load %arg2[%c0_1, %c0_2] : memref<16x16xf32, #tpu.memory_space<vmem>>, vector<16x16xf32>
    %c0_3 = arith.constant 0 : index
    %c0_4 = arith.constant 0 : index
    %c0_5 = arith.constant 0 : index
    %2 = vector.load %arg3[%c0_3, %c0_4, %c0_5] : memref<2x32x96xf32, #tpu.memory_space<vmem>>, vector<1x32x96xf32>
    %3 = vector.shape_cast %2 : vector<1x32x96xf32> to vector<32x96xf32>
    %c0_6 = arith.constant 0 : index
    %c0_7 = arith.constant 0 : index
    %c0_8 = arith.constant 0 : index
    %4 = vector.load %arg4[%c0_6, %c0_7, %c0_8] : memref<2x32x32xf32, #tpu.memory_space<vmem>>, vector<1x32x32xf32>
    %5 = vector.shape_cast %4 : vector<1x32x32xf32> to vector<32x32xf32>
    %c0_9 = arith.constant 0 : index
    %c0_10 = arith.constant 0 : index
    %c0_11 = arith.constant 0 : index
    %6 = vector.load %arg5[%c0_9, %c0_10, %c0_11] : memref<2x32x64xf32, #tpu.memory_space<vmem>>, vector<1x32x64xf32>
    %7 = vector.shape_cast %6 : vector<1x32x64xf32> to vector<32x64xf32>
    %c0_12 = arith.constant 0 : index
    %c0_13 = arith.constant 0 : index
    %c0_14 = arith.constant 0 : index
    %8 = vector.load %arg6[%c0_12, %c0_13, %c0_14] : memref<2x64x32xf32, #tpu.memory_space<vmem>>, vector<1x64x32xf32>
    %9 = vector.shape_cast %8 : vector<1x64x32xf32> to vector<64x32xf32>
    %c0_15 = arith.constant 0 : index
    %c0_16 = arith.constant 0 : index
    %c0_17 = arith.constant 0 : index
    %10 = vector.load %arg7[%c0_15, %c0_16, %c0_17] : memref<2x8x64xf32, #tpu.memory_space<vmem>>, vector<1x8x64xf32>
    %11 = vector.shape_cast %10 : vector<1x8x64xf32> to vector<8x64xf32>
    %12 = vector.extract_strided_slice %11 {offsets = [0, 0], sizes = [1, 32], strides = [1, 1]} : vector<8x64xf32> to vector<1x32xf32>
    %13 = vector.extract_strided_slice %11 {offsets = [1, 0], sizes = [1, 32], strides = [1, 1]} : vector<8x64xf32> to vector<1x32xf32>
    %14 = vector.extract_strided_slice %11 {offsets = [2, 0], sizes = [1, 32], strides = [1, 1]} : vector<8x64xf32> to vector<1x32xf32>
    %15 = vector.extract_strided_slice %11 {offsets = [3, 0], sizes = [1, 64], strides = [1, 1]} : vector<8x64xf32> to vector<1x64xf32>
    %16 = vector.extract_strided_slice %11 {offsets = [4, 0], sizes = [1, 32], strides = [1, 1]} : vector<8x64xf32> to vector<1x32xf32>
    %17 = vector.extract_strided_slice %11 {offsets = [5, 0], sizes = [1, 32], strides = [1, 1]} : vector<8x64xf32> to vector<1x32xf32>
    %18 = vector.extract_strided_slice %11 {offsets = [6, 0], sizes = [1, 32], strides = [1, 1]} : vector<8x64xf32> to vector<1x32xf32>
    %cst = arith.constant dense<0.000000e+00> : vector<16x96xf32>
    %19 = tpu.matmul %0, %3, %cst {dimension_numbers = #tpu.dot_dimension_numbers<[1], [0], [0], [1], [0, 0, 1, 1], [], []>} : vector<16x32xf32>, vector<32x96xf32>, vector<16x96xf32> -> vector<16x96xf32>
    %20 = vector.extract_strided_slice %19 {offsets = [0, 0], sizes = [16, 8], strides = [1, 1]} : vector<16x96xf32> to vector<16x8xf32>
    %21 = vector.extract_strided_slice %19 {offsets = [0, 32], sizes = [16, 8], strides = [1, 1]} : vector<16x96xf32> to vector<16x8xf32>
    %22 = vector.extract_strided_slice %19 {offsets = [0, 64], sizes = [16, 8], strides = [1, 1]} : vector<16x96xf32> to vector<16x8xf32>
    %23 = tpu.transpose %21, [1, 0] : vector<16x8xf32> -> vector<8x16xf32>
    %cst_18 = arith.constant dense<0.000000e+00> : vector<16x16xf32>
    %24 = tpu.matmul %20, %23, %cst_18 {dimension_numbers = #tpu.dot_dimension_numbers<[1], [0], [0], [1], [0, 0, 1, 1], [], []>} : vector<16x8xf32>, vector<8x16xf32>, vector<16x16xf32> -> vector<16x16xf32>
    %25 = arith.addf %24, %1 : vector<16x16xf32>
    %cst_19 = arith.constant dense<0xFF800000> : vector<16xf32>
    %26 = vector.multi_reduction <maximumf>, %25, %cst_19 [1] : vector<16x16xf32> to vector<16xf32>
    %27 = vector.shape_cast %26 : vector<16xf32> to vector<16x1xf32>
    %28 = vector.broadcast %27 : vector<16x1xf32> to vector<16x16xf32>
    %29 = arith.subf %25, %28 : vector<16x16xf32>
    %30 = math.exp %29 : vector<16x16xf32>
    %cst_20 = arith.constant dense<0.000000e+00> : vector<16xf32>
    %31 = vector.multi_reduction <add>, %30, %cst_20 [1] : vector<16x16xf32> to vector<16xf32>
    %32 = vector.shape_cast %31 : vector<16xf32> to vector<16x1xf32>
    %33 = tpu.reciprocal %32 {approx = true} : vector<16x1xf32> -> vector<16x1xf32>
    %34 = vector.broadcast %33 : vector<16x1xf32> to vector<16x16xf32>
    %35 = arith.mulf %30, %34 : vector<16x16xf32>
    %cst_21 = arith.constant dense<0.000000e+00> : vector<16x8xf32>
    %36 = tpu.matmul %35, %22, %cst_21 {dimension_numbers = #tpu.dot_dimension_numbers<[1], [0], [0], [1], [0, 0, 1, 1], [], []>} : vector<16x16xf32>, vector<16x8xf32>, vector<16x8xf32> -> vector<16x8xf32>
    %37 = vector.extract_strided_slice %19 {offsets = [0, 8], sizes = [16, 8], strides = [1, 1]} : vector<16x96xf32> to vector<16x8xf32>
    %38 = vector.extract_strided_slice %19 {offsets = [0, 40], sizes = [16, 8], strides = [1, 1]} : vector<16x96xf32> to vector<16x8xf32>
    %39 = vector.extract_strided_slice %19 {offsets = [0, 72], sizes = [16, 8], strides = [1, 1]} : vector<16x96xf32> to vector<16x8xf32>
    %40 = tpu.transpose %38, [1, 0] : vector<16x8xf32> -> vector<8x16xf32>
    %cst_22 = arith.constant dense<0.000000e+00> : vector<16x16xf32>
    %41 = tpu.matmul %37, %40, %cst_22 {dimension_numbers = #tpu.dot_dimension_numbers<[1], [0], [0], [1], [0, 0, 1, 1], [], []>} : vector<16x8xf32>, vector<8x16xf32>, vector<16x16xf32> -> vector<16x16xf32>
    %42 = arith.addf %41, %1 : vector<16x16xf32>
    %cst_23 = arith.constant dense<0xFF800000> : vector<16xf32>
    %43 = vector.multi_reduction <maximumf>, %42, %cst_23 [1] : vector<16x16xf32> to vector<16xf32>
    %44 = vector.shape_cast %43 : vector<16xf32> to vector<16x1xf32>
    %45 = vector.broadcast %44 : vector<16x1xf32> to vector<16x16xf32>
    %46 = arith.subf %42, %45 : vector<16x16xf32>
    %47 = math.exp %46 : vector<16x16xf32>
    %cst_24 = arith.constant dense<0.000000e+00> : vector<16xf32>
    %48 = vector.multi_reduction <add>, %47, %cst_24 [1] : vector<16x16xf32> to vector<16xf32>
    %49 = vector.shape_cast %48 : vector<16xf32> to vector<16x1xf32>
    %50 = tpu.reciprocal %49 {approx = true} : vector<16x1xf32> -> vector<16x1xf32>
    %51 = vector.broadcast %50 : vector<16x1xf32> to vector<16x16xf32>
    %52 = arith.mulf %47, %51 : vector<16x16xf32>
    %cst_25 = arith.constant dense<0.000000e+00> : vector<16x8xf32>
    %53 = tpu.matmul %52, %39, %cst_25 {dimension_numbers = #tpu.dot_dimension_numbers<[1], [0], [0], [1], [0, 0, 1, 1], [], []>} : vector<16x16xf32>, vector<16x8xf32>, vector<16x8xf32> -> vector<16x8xf32>
    %54 = vector.extract_strided_slice %19 {offsets = [0, 16], sizes = [16, 8], strides = [1, 1]} : vector<16x96xf32> to vector<16x8xf32>
    %55 = vector.extract_strided_slice %19 {offsets = [0, 48], sizes = [16, 8], strides = [1, 1]} : vector<16x96xf32> to vector<16x8xf32>
    %56 = vector.extract_strided_slice %19 {offsets = [0, 80], sizes = [16, 8], strides = [1, 1]} : vector<16x96xf32> to vector<16x8xf32>
    %57 = tpu.transpose %55, [1, 0] : vector<16x8xf32> -> vector<8x16xf32>
    %cst_26 = arith.constant dense<0.000000e+00> : vector<16x16xf32>
    %58 = tpu.matmul %54, %57, %cst_26 {dimension_numbers = #tpu.dot_dimension_numbers<[1], [0], [0], [1], [0, 0, 1, 1], [], []>} : vector<16x8xf32>, vector<8x16xf32>, vector<16x16xf32> -> vector<16x16xf32>
    %59 = arith.addf %58, %1 : vector<16x16xf32>
    %cst_27 = arith.constant dense<0xFF800000> : vector<16xf32>
    %60 = vector.multi_reduction <maximumf>, %59, %cst_27 [1] : vector<16x16xf32> to vector<16xf32>
    %61 = vector.shape_cast %60 : vector<16xf32> to vector<16x1xf32>
    %62 = vector.broadcast %61 : vector<16x1xf32> to vector<16x16xf32>
    %63 = arith.subf %59, %62 : vector<16x16xf32>
    %64 = math.exp %63 : vector<16x16xf32>
    %cst_28 = arith.constant dense<0.000000e+00> : vector<16xf32>
    %65 = vector.multi_reduction <add>, %64, %cst_28 [1] : vector<16x16xf32> to vector<16xf32>
    %66 = vector.shape_cast %65 : vector<16xf32> to vector<16x1xf32>
    %67 = tpu.reciprocal %66 {approx = true} : vector<16x1xf32> -> vector<16x1xf32>
    %68 = vector.broadcast %67 : vector<16x1xf32> to vector<16x16xf32>
    %69 = arith.mulf %64, %68 : vector<16x16xf32>
    %cst_29 = arith.constant dense<0.000000e+00> : vector<16x8xf32>
    %70 = tpu.matmul %69, %56, %cst_29 {dimension_numbers = #tpu.dot_dimension_numbers<[1], [0], [0], [1], [0, 0, 1, 1], [], []>} : vector<16x16xf32>, vector<16x8xf32>, vector<16x8xf32> -> vector<16x8xf32>
    %71 = vector.extract_strided_slice %19 {offsets = [0, 24], sizes = [16, 8], strides = [1, 1]} : vector<16x96xf32> to vector<16x8xf32>
    %72 = vector.extract_strided_slice %19 {offsets = [0, 56], sizes = [16, 8], strides = [1, 1]} : vector<16x96xf32> to vector<16x8xf32>
    %73 = vector.extract_strided_slice %19 {offsets = [0, 88], sizes = [16, 8], strides = [1, 1]} : vector<16x96xf32> to vector<16x8xf32>
    %74 = tpu.transpose %72, [1, 0] : vector<16x8xf32> -> vector<8x16xf32>
    %cst_30 = arith.constant dense<0.000000e+00> : vector<16x16xf32>
    %75 = tpu.matmul %71, %74, %cst_30 {dimension_numbers = #tpu.dot_dimension_numbers<[1], [0], [0], [1], [0, 0, 1, 1], [], []>} : vector<16x8xf32>, vector<8x16xf32>, vector<16x16xf32> -> vector<16x16xf32>
    %76 = arith.addf %75, %1 : vector<16x16xf32>
    %cst_31 = arith.constant dense<0xFF800000> : vector<16xf32>
    %77 = vector.multi_reduction <maximumf>, %76, %cst_31 [1] : vector<16x16xf32> to vector<16xf32>
    %78 = vector.shape_cast %77 : vector<16xf32> to vector<16x1xf32>
    %79 = vector.broadcast %78 : vector<16x1xf32> to vector<16x16xf32>
    %80 = arith.subf %76, %79 : vector<16x16xf32>
    %81 = math.exp %80 : vector<16x16xf32>
    %cst_32 = arith.constant dense<0.000000e+00> : vector<16xf32>
    %82 = vector.multi_reduction <add>, %81, %cst_32 [1] : vector<16x16xf32> to vector<16xf32>
    %83 = vector.shape_cast %82 : vector<16xf32> to vector<16x1xf32>
    %84 = tpu.reciprocal %83 {approx = true} : vector<16x1xf32> -> vector<16x1xf32>
    %85 = vector.broadcast %84 : vector<16x1xf32> to vector<16x16xf32>
    %86 = arith.mulf %81, %85 : vector<16x16xf32>
    %cst_33 = arith.constant dense<0.000000e+00> : vector<16x8xf32>
    %87 = tpu.matmul %86, %73, %cst_33 {dimension_numbers = #tpu.dot_dimension_numbers<[1], [0], [0], [1], [0, 0, 1, 1], [], []>} : vector<16x16xf32>, vector<16x8xf32>, vector<16x8xf32> -> vector<16x8xf32>
    %88 = tpu.concatenate %36, %53, %70, %87 in 1 : vector<16x8xf32>, vector<16x8xf32>, vector<16x8xf32>, vector<16x8xf32> -> vector<16x32xf32>
    %cst_34 = arith.constant dense<0.000000e+00> : vector<16x32xf32>
    %89 = tpu.matmul %88, %5, %cst_34 {dimension_numbers = #tpu.dot_dimension_numbers<[1], [0], [0], [1], [0, 0, 1, 1], [], []>} : vector<16x32xf32>, vector<32x32xf32>, vector<16x32xf32> -> vector<16x32xf32>
    %90 = vector.broadcast %12 : vector<1x32xf32> to vector<16x32xf32>
    %91 = arith.addf %89, %90 : vector<16x32xf32>
    %92 = arith.addf %91, %0 : vector<16x32xf32>
    %cst_35 = arith.constant dense<0.000000e+00> : vector<16xf32>
    %93 = vector.multi_reduction <add>, %92, %cst_35 [1] : vector<16x32xf32> to vector<16xf32>
    %94 = vector.shape_cast %93 : vector<16xf32> to vector<16x1xf32>
    %cst_36 = arith.constant 3.200000e+01 : f32
    %95 = vector.broadcast %cst_36 : f32 to vector<16x1xf32>
    %96 = arith.divf %94, %95 : vector<16x1xf32>
    %97 = vector.broadcast %96 : vector<16x1xf32> to vector<16x32xf32>
    %98 = arith.subf %92, %97 : vector<16x32xf32>
    %99 = arith.mulf %98, %98 : vector<16x32xf32>
    %cst_37 = arith.constant dense<0.000000e+00> : vector<16xf32>
    %100 = vector.multi_reduction <add>, %99, %cst_37 [1] : vector<16x32xf32> to vector<16xf32>
    %101 = vector.shape_cast %100 : vector<16xf32> to vector<16x1xf32>
    %cst_38 = arith.constant 3.200000e+01 : f32
    %102 = vector.broadcast %cst_38 : f32 to vector<16x1xf32>
    %103 = arith.divf %101, %102 : vector<16x1xf32>
    %104 = vector.broadcast %96 : vector<16x1xf32> to vector<16x32xf32>
    %105 = arith.subf %92, %104 : vector<16x32xf32>
    %cst_39 = arith.constant 9.99999974E-6 : f32
    %106 = vector.broadcast %cst_39 : f32 to vector<16x1xf32>
    %107 = arith.addf %103, %106 : vector<16x1xf32>
    %108 = math.rsqrt %107 : vector<16x1xf32>
    %109 = vector.broadcast %108 : vector<16x1xf32> to vector<16x32xf32>
    %110 = arith.mulf %105, %109 : vector<16x32xf32>
    %111 = vector.broadcast %13 : vector<1x32xf32> to vector<16x32xf32>
    %112 = arith.mulf %110, %111 : vector<16x32xf32>
    %113 = vector.broadcast %14 : vector<1x32xf32> to vector<16x32xf32>
    %114 = arith.addf %112, %113 : vector<16x32xf32>
    %cst_40 = arith.constant dense<0.000000e+00> : vector<16x64xf32>
    %115 = tpu.matmul %114, %7, %cst_40 {dimension_numbers = #tpu.dot_dimension_numbers<[1], [0], [0], [1], [0, 0, 1, 1], [], []>} : vector<16x32xf32>, vector<32x64xf32>, vector<16x64xf32> -> vector<16x64xf32>
    %116 = vector.broadcast %15 : vector<1x64xf32> to vector<16x64xf32>
    %117 = arith.addf %115, %116 : vector<16x64xf32>
    %cst_41 = arith.constant 0.000000e+00 : f32
    %118 = vector.broadcast %cst_41 : f32 to vector<16x64xf32>
    %119 = arith.maximumf %117, %118 : vector<16x64xf32>
    %cst_42 = arith.constant dense<0.000000e+00> : vector<16x32xf32>
    %120 = tpu.matmul %119, %9, %cst_42 {dimension_numbers = #tpu.dot_dimension_numbers<[1], [0], [0], [1], [0, 0, 1, 1], [], []>} : vector<16x64xf32>, vector<64x32xf32>, vector<16x32xf32> -> vector<16x32xf32>
    %121 = vector.broadcast %16 : vector<1x32xf32> to vector<16x32xf32>
    %122 = arith.addf %120, %121 : vector<16x32xf32>
    %123 = arith.addf %122, %114 : vector<16x32xf32>
    %cst_43 = arith.constant dense<0.000000e+00> : vector<16xf32>
    %124 = vector.multi_reduction <add>, %123, %cst_43 [1] : vector<16x32xf32> to vector<16xf32>
    %125 = vector.shape_cast %124 : vector<16xf32> to vector<16x1xf32>
    %cst_44 = arith.constant 3.200000e+01 : f32
    %126 = vector.broadcast %cst_44 : f32 to vector<16x1xf32>
    %127 = arith.divf %125, %126 : vector<16x1xf32>
    %128 = vector.broadcast %127 : vector<16x1xf32> to vector<16x32xf32>
    %129 = arith.subf %123, %128 : vector<16x32xf32>
    %130 = arith.mulf %129, %129 : vector<16x32xf32>
    %cst_45 = arith.constant dense<0.000000e+00> : vector<16xf32>
    %131 = vector.multi_reduction <add>, %130, %cst_45 [1] : vector<16x32xf32> to vector<16xf32>
    %132 = vector.shape_cast %131 : vector<16xf32> to vector<16x1xf32>
    %cst_46 = arith.constant 3.200000e+01 : f32
    %133 = vector.broadcast %cst_46 : f32 to vector<16x1xf32>
    %134 = arith.divf %132, %133 : vector<16x1xf32>
    %135 = vector.broadcast %127 : vector<16x1xf32> to vector<16x32xf32>
    %136 = arith.subf %123, %135 : vector<16x32xf32>
    %cst_47 = arith.constant 9.99999974E-6 : f32
    %137 = vector.broadcast %cst_47 : f32 to vector<16x1xf32>
    %138 = arith.addf %134, %137 : vector<16x1xf32>
    %139 = math.rsqrt %138 : vector<16x1xf32>
    %140 = vector.broadcast %139 : vector<16x1xf32> to vector<16x32xf32>
    %141 = arith.mulf %136, %140 : vector<16x32xf32>
    %142 = vector.broadcast %17 : vector<1x32xf32> to vector<16x32xf32>
    %143 = arith.mulf %141, %142 : vector<16x32xf32>
    %144 = vector.broadcast %18 : vector<1x32xf32> to vector<16x32xf32>
    %145 = arith.addf %143, %144 : vector<16x32xf32>
    %c1 = arith.constant 1 : index
    %c0_48 = arith.constant 0 : index
    %c0_49 = arith.constant 0 : index
    %146 = vector.load %arg3[%c1, %c0_48, %c0_49] : memref<2x32x96xf32, #tpu.memory_space<vmem>>, vector<1x32x96xf32>
    %147 = vector.shape_cast %146 : vector<1x32x96xf32> to vector<32x96xf32>
    %c1_50 = arith.constant 1 : index
    %c0_51 = arith.constant 0 : index
    %c0_52 = arith.constant 0 : index
    %148 = vector.load %arg4[%c1_50, %c0_51, %c0_52] : memref<2x32x32xf32, #tpu.memory_space<vmem>>, vector<1x32x32xf32>
    %149 = vector.shape_cast %148 : vector<1x32x32xf32> to vector<32x32xf32>
    %c1_53 = arith.constant 1 : index
    %c0_54 = arith.constant 0 : index
    %c0_55 = arith.constant 0 : index
    %150 = vector.load %arg5[%c1_53, %c0_54, %c0_55] : memref<2x32x64xf32, #tpu.memory_space<vmem>>, vector<1x32x64xf32>
    %151 = vector.shape_cast %150 : vector<1x32x64xf32> to vector<32x64xf32>
    %c1_56 = arith.constant 1 : index
    %c0_57 = arith.constant 0 : index
    %c0_58 = arith.constant 0 : index
    %152 = vector.load %arg6[%c1_56, %c0_57, %c0_58] : memref<2x64x32xf32, #tpu.memory_space<vmem>>, vector<1x64x32xf32>
    %153 = vector.shape_cast %152 : vector<1x64x32xf32> to vector<64x32xf32>
    %c1_59 = arith.constant 1 : index
    %c0_60 = arith.constant 0 : index
    %c0_61 = arith.constant 0 : index
    %154 = vector.load %arg7[%c1_59, %c0_60, %c0_61] : memref<2x8x64xf32, #tpu.memory_space<vmem>>, vector<1x8x64xf32>
    %155 = vector.shape_cast %154 : vector<1x8x64xf32> to vector<8x64xf32>
    %156 = vector.extract_strided_slice %155 {offsets = [0, 0], sizes = [1, 32], strides = [1, 1]} : vector<8x64xf32> to vector<1x32xf32>
    %157 = vector.extract_strided_slice %155 {offsets = [1, 0], sizes = [1, 32], strides = [1, 1]} : vector<8x64xf32> to vector<1x32xf32>
    %158 = vector.extract_strided_slice %155 {offsets = [2, 0], sizes = [1, 32], strides = [1, 1]} : vector<8x64xf32> to vector<1x32xf32>
    %159 = vector.extract_strided_slice %155 {offsets = [3, 0], sizes = [1, 64], strides = [1, 1]} : vector<8x64xf32> to vector<1x64xf32>
    %160 = vector.extract_strided_slice %155 {offsets = [4, 0], sizes = [1, 32], strides = [1, 1]} : vector<8x64xf32> to vector<1x32xf32>
    %161 = vector.extract_strided_slice %155 {offsets = [5, 0], sizes = [1, 32], strides = [1, 1]} : vector<8x64xf32> to vector<1x32xf32>
    %162 = vector.extract_strided_slice %155 {offsets = [6, 0], sizes = [1, 32], strides = [1, 1]} : vector<8x64xf32> to vector<1x32xf32>
    %cst_62 = arith.constant dense<0.000000e+00> : vector<16x96xf32>
    %163 = tpu.matmul %145, %147, %cst_62 {dimension_numbers = #tpu.dot_dimension_numbers<[1], [0], [0], [1], [0, 0, 1, 1], [], []>} : vector<16x32xf32>, vector<32x96xf32>, vector<16x96xf32> -> vector<16x96xf32>
    %164 = vector.extract_strided_slice %163 {offsets = [0, 0], sizes = [16, 8], strides = [1, 1]} : vector<16x96xf32> to vector<16x8xf32>
    %165 = vector.extract_strided_slice %163 {offsets = [0, 32], sizes = [16, 8], strides = [1, 1]} : vector<16x96xf32> to vector<16x8xf32>
    %166 = vector.extract_strided_slice %163 {offsets = [0, 64], sizes = [16, 8], strides = [1, 1]} : vector<16x96xf32> to vector<16x8xf32>
    %167 = tpu.transpose %165, [1, 0] : vector<16x8xf32> -> vector<8x16xf32>
    %cst_63 = arith.constant dense<0.000000e+00> : vector<16x16xf32>
    %168 = tpu.matmul %164, %167, %cst_63 {dimension_numbers = #tpu.dot_dimension_numbers<[1], [0], [0], [1], [0, 0, 1, 1], [], []>} : vector<16x8xf32>, vector<8x16xf32>, vector<16x16xf32> -> vector<16x16xf32>
    %169 = arith.addf %168, %1 : vector<16x16xf32>
    %cst_64 = arith.constant dense<0xFF800000> : vector<16xf32>
    %170 = vector.multi_reduction <maximumf>, %169, %cst_64 [1] : vector<16x16xf32> to vector<16xf32>
    %171 = vector.shape_cast %170 : vector<16xf32> to vector<16x1xf32>
    %172 = vector.broadcast %171 : vector<16x1xf32> to vector<16x16xf32>
    %173 = arith.subf %169, %172 : vector<16x16xf32>
    %174 = math.exp %173 : vector<16x16xf32>
    %cst_65 = arith.constant dense<0.000000e+00> : vector<16xf32>
    %175 = vector.multi_reduction <add>, %174, %cst_65 [1] : vector<16x16xf32> to vector<16xf32>
    %176 = vector.shape_cast %175 : vector<16xf32> to vector<16x1xf32>
    %177 = tpu.reciprocal %176 {approx = true} : vector<16x1xf32> -> vector<16x1xf32>
    %178 = vector.broadcast %177 : vector<16x1xf32> to vector<16x16xf32>
    %179 = arith.mulf %174, %178 : vector<16x16xf32>
    %cst_66 = arith.constant dense<0.000000e+00> : vector<16x8xf32>
    %180 = tpu.matmul %179, %166, %cst_66 {dimension_numbers = #tpu.dot_dimension_numbers<[1], [0], [0], [1], [0, 0, 1, 1], [], []>} : vector<16x16xf32>, vector<16x8xf32>, vector<16x8xf32> -> vector<16x8xf32>
    %181 = vector.extract_strided_slice %163 {offsets = [0, 8], sizes = [16, 8], strides = [1, 1]} : vector<16x96xf32> to vector<16x8xf32>
    %182 = vector.extract_strided_slice %163 {offsets = [0, 40], sizes = [16, 8], strides = [1, 1]} : vector<16x96xf32> to vector<16x8xf32>
    %183 = vector.extract_strided_slice %163 {offsets = [0, 72], sizes = [16, 8], strides = [1, 1]} : vector<16x96xf32> to vector<16x8xf32>
    %184 = tpu.transpose %182, [1, 0] : vector<16x8xf32> -> vector<8x16xf32>
    %cst_67 = arith.constant dense<0.000000e+00> : vector<16x16xf32>
    %185 = tpu.matmul %181, %184, %cst_67 {dimension_numbers = #tpu.dot_dimension_numbers<[1], [0], [0], [1], [0, 0, 1, 1], [], []>} : vector<16x8xf32>, vector<8x16xf32>, vector<16x16xf32> -> vector<16x16xf32>
    %186 = arith.addf %185, %1 : vector<16x16xf32>
    %cst_68 = arith.constant dense<0xFF800000> : vector<16xf32>
    %187 = vector.multi_reduction <maximumf>, %186, %cst_68 [1] : vector<16x16xf32> to vector<16xf32>
    %188 = vector.shape_cast %187 : vector<16xf32> to vector<16x1xf32>
    %189 = vector.broadcast %188 : vector<16x1xf32> to vector<16x16xf32>
    %190 = arith.subf %186, %189 : vector<16x16xf32>
    %191 = math.exp %190 : vector<16x16xf32>
    %cst_69 = arith.constant dense<0.000000e+00> : vector<16xf32>
    %192 = vector.multi_reduction <add>, %191, %cst_69 [1] : vector<16x16xf32> to vector<16xf32>
    %193 = vector.shape_cast %192 : vector<16xf32> to vector<16x1xf32>
    %194 = tpu.reciprocal %193 {approx = true} : vector<16x1xf32> -> vector<16x1xf32>
    %195 = vector.broadcast %194 : vector<16x1xf32> to vector<16x16xf32>
    %196 = arith.mulf %191, %195 : vector<16x16xf32>
    %cst_70 = arith.constant dense<0.000000e+00> : vector<16x8xf32>
    %197 = tpu.matmul %196, %183, %cst_70 {dimension_numbers = #tpu.dot_dimension_numbers<[1], [0], [0], [1], [0, 0, 1, 1], [], []>} : vector<16x16xf32>, vector<16x8xf32>, vector<16x8xf32> -> vector<16x8xf32>
    %198 = vector.extract_strided_slice %163 {offsets = [0, 16], sizes = [16, 8], strides = [1, 1]} : vector<16x96xf32> to vector<16x8xf32>
    %199 = vector.extract_strided_slice %163 {offsets = [0, 48], sizes = [16, 8], strides = [1, 1]} : vector<16x96xf32> to vector<16x8xf32>
    %200 = vector.extract_strided_slice %163 {offsets = [0, 80], sizes = [16, 8], strides = [1, 1]} : vector<16x96xf32> to vector<16x8xf32>
    %201 = tpu.transpose %199, [1, 0] : vector<16x8xf32> -> vector<8x16xf32>
    %cst_71 = arith.constant dense<0.000000e+00> : vector<16x16xf32>
    %202 = tpu.matmul %198, %201, %cst_71 {dimension_numbers = #tpu.dot_dimension_numbers<[1], [0], [0], [1], [0, 0, 1, 1], [], []>} : vector<16x8xf32>, vector<8x16xf32>, vector<16x16xf32> -> vector<16x16xf32>
    %203 = arith.addf %202, %1 : vector<16x16xf32>
    %cst_72 = arith.constant dense<0xFF800000> : vector<16xf32>
    %204 = vector.multi_reduction <maximumf>, %203, %cst_72 [1] : vector<16x16xf32> to vector<16xf32>
    %205 = vector.shape_cast %204 : vector<16xf32> to vector<16x1xf32>
    %206 = vector.broadcast %205 : vector<16x1xf32> to vector<16x16xf32>
    %207 = arith.subf %203, %206 : vector<16x16xf32>
    %208 = math.exp %207 : vector<16x16xf32>
    %cst_73 = arith.constant dense<0.000000e+00> : vector<16xf32>
    %209 = vector.multi_reduction <add>, %208, %cst_73 [1] : vector<16x16xf32> to vector<16xf32>
    %210 = vector.shape_cast %209 : vector<16xf32> to vector<16x1xf32>
    %211 = tpu.reciprocal %210 {approx = true} : vector<16x1xf32> -> vector<16x1xf32>
    %212 = vector.broadcast %211 : vector<16x1xf32> to vector<16x16xf32>
    %213 = arith.mulf %208, %212 : vector<16x16xf32>
    %cst_74 = arith.constant dense<0.000000e+00> : vector<16x8xf32>
    %214 = tpu.matmul %213, %200, %cst_74 {dimension_numbers = #tpu.dot_dimension_numbers<[1], [0], [0], [1], [0, 0, 1, 1], [], []>} : vector<16x16xf32>, vector<16x8xf32>, vector<16x8xf32> -> vector<16x8xf32>
    %215 = vector.extract_strided_slice %163 {offsets = [0, 24], sizes = [16, 8], strides = [1, 1]} : vector<16x96xf32> to vector<16x8xf32>
    %216 = vector.extract_strided_slice %163 {offsets = [0, 56], sizes = [16, 8], strides = [1, 1]} : vector<16x96xf32> to vector<16x8xf32>
    %217 = vector.extract_strided_slice %163 {offsets = [0, 88], sizes = [16, 8], strides = [1, 1]} : vector<16x96xf32> to vector<16x8xf32>
    %218 = tpu.transpose %216, [1, 0] : vector<16x8xf32> -> vector<8x16xf32>
    %cst_75 = arith.constant dense<0.000000e+00> : vector<16x16xf32>
    %219 = tpu.matmul %215, %218, %cst_75 {dimension_numbers = #tpu.dot_dimension_numbers<[1], [0], [0], [1], [0, 0, 1, 1], [], []>} : vector<16x8xf32>, vector<8x16xf32>, vector<16x16xf32> -> vector<16x16xf32>
    %220 = arith.addf %219, %1 : vector<16x16xf32>
    %cst_76 = arith.constant dense<0xFF800000> : vector<16xf32>
    %221 = vector.multi_reduction <maximumf>, %220, %cst_76 [1] : vector<16x16xf32> to vector<16xf32>
    %222 = vector.shape_cast %221 : vector<16xf32> to vector<16x1xf32>
    %223 = vector.broadcast %222 : vector<16x1xf32> to vector<16x16xf32>
    %224 = arith.subf %220, %223 : vector<16x16xf32>
    %225 = math.exp %224 : vector<16x16xf32>
    %cst_77 = arith.constant dense<0.000000e+00> : vector<16xf32>
    %226 = vector.multi_reduction <add>, %225, %cst_77 [1] : vector<16x16xf32> to vector<16xf32>
    %227 = vector.shape_cast %226 : vector<16xf32> to vector<16x1xf32>
    %228 = tpu.reciprocal %227 {approx = true} : vector<16x1xf32> -> vector<16x1xf32>
    %229 = vector.broadcast %228 : vector<16x1xf32> to vector<16x16xf32>
    %230 = arith.mulf %225, %229 : vector<16x16xf32>
    %cst_78 = arith.constant dense<0.000000e+00> : vector<16x8xf32>
    %231 = tpu.matmul %230, %217, %cst_78 {dimension_numbers = #tpu.dot_dimension_numbers<[1], [0], [0], [1], [0, 0, 1, 1], [], []>} : vector<16x16xf32>, vector<16x8xf32>, vector<16x8xf32> -> vector<16x8xf32>
    %232 = tpu.concatenate %180, %197, %214, %231 in 1 : vector<16x8xf32>, vector<16x8xf32>, vector<16x8xf32>, vector<16x8xf32> -> vector<16x32xf32>
    %cst_79 = arith.constant dense<0.000000e+00> : vector<16x32xf32>
    %233 = tpu.matmul %232, %149, %cst_79 {dimension_numbers = #tpu.dot_dimension_numbers<[1], [0], [0], [1], [0, 0, 1, 1], [], []>} : vector<16x32xf32>, vector<32x32xf32>, vector<16x32xf32> -> vector<16x32xf32>
    %234 = vector.broadcast %156 : vector<1x32xf32> to vector<16x32xf32>
    %235 = arith.addf %233, %234 : vector<16x32xf32>
    %236 = arith.addf %235, %145 : vector<16x32xf32>
    %cst_80 = arith.constant dense<0.000000e+00> : vector<16xf32>
    %237 = vector.multi_reduction <add>, %236, %cst_80 [1] : vector<16x32xf32> to vector<16xf32>
    %238 = vector.shape_cast %237 : vector<16xf32> to vector<16x1xf32>
    %cst_81 = arith.constant 3.200000e+01 : f32
    %239 = vector.broadcast %cst_81 : f32 to vector<16x1xf32>
    %240 = arith.divf %238, %239 : vector<16x1xf32>
    %241 = vector.broadcast %240 : vector<16x1xf32> to vector<16x32xf32>
    %242 = arith.subf %236, %241 : vector<16x32xf32>
    %243 = arith.mulf %242, %242 : vector<16x32xf32>
    %cst_82 = arith.constant dense<0.000000e+00> : vector<16xf32>
    %244 = vector.multi_reduction <add>, %243, %cst_82 [1] : vector<16x32xf32> to vector<16xf32>
    %245 = vector.shape_cast %244 : vector<16xf32> to vector<16x1xf32>
    %cst_83 = arith.constant 3.200000e+01 : f32
    %246 = vector.broadcast %cst_83 : f32 to vector<16x1xf32>
    %247 = arith.divf %245, %246 : vector<16x1xf32>
    %248 = vector.broadcast %240 : vector<16x1xf32> to vector<16x32xf32>
    %249 = arith.subf %236, %248 : vector<16x32xf32>
    %cst_84 = arith.constant 9.99999974E-6 : f32
    %250 = vector.broadcast %cst_84 : f32 to vector<16x1xf32>
    %251 = arith.addf %247, %250 : vector<16x1xf32>
    %252 = math.rsqrt %251 : vector<16x1xf32>
    %253 = vector.broadcast %252 : vector<16x1xf32> to vector<16x32xf32>
    %254 = arith.mulf %249, %253 : vector<16x32xf32>
    %255 = vector.broadcast %157 : vector<1x32xf32> to vector<16x32xf32>
    %256 = arith.mulf %254, %255 : vector<16x32xf32>
    %257 = vector.broadcast %158 : vector<1x32xf32> to vector<16x32xf32>
    %258 = arith.addf %256, %257 : vector<16x32xf32>
    %cst_85 = arith.constant dense<0.000000e+00> : vector<16x64xf32>
    %259 = tpu.matmul %258, %151, %cst_85 {dimension_numbers = #tpu.dot_dimension_numbers<[1], [0], [0], [1], [0, 0, 1, 1], [], []>} : vector<16x32xf32>, vector<32x64xf32>, vector<16x64xf32> -> vector<16x64xf32>
    %260 = vector.broadcast %159 : vector<1x64xf32> to vector<16x64xf32>
    %261 = arith.addf %259, %260 : vector<16x64xf32>
    %cst_86 = arith.constant 0.000000e+00 : f32
    %262 = vector.broadcast %cst_86 : f32 to vector<16x64xf32>
    %263 = arith.maximumf %261, %262 : vector<16x64xf32>
    %cst_87 = arith.constant dense<0.000000e+00> : vector<16x32xf32>
    %264 = tpu.matmul %263, %153, %cst_87 {dimension_numbers = #tpu.dot_dimension_numbers<[1], [0], [0], [1], [0, 0, 1, 1], [], []>} : vector<16x64xf32>, vector<64x32xf32>, vector<16x32xf32> -> vector<16x32xf32>
    %265 = vector.broadcast %160 : vector<1x32xf32> to vector<16x32xf32>
    %266 = arith.addf %264, %265 : vector<16x32xf32>
    %267 = arith.addf %266, %258 : vector<16x32xf32>
    %cst_88 = arith.constant dense<0.000000e+00> : vector<16xf32>
    %268 = vector.multi_reduction <add>, %267, %cst_88 [1] : vector<16x32xf32> to vector<16xf32>
    %269 = vector.shape_cast %268 : vector<16xf32> to vector<16x1xf32>
    %cst_89 = arith.constant 3.200000e+01 : f32
    %270 = vector.broadcast %cst_89 : f32 to vector<16x1xf32>
    %271 = arith.divf %269, %270 : vector<16x1xf32>
    %272 = vector.broadcast %271 : vector<16x1xf32> to vector<16x32xf32>
    %273 = arith.subf %267, %272 : vector<16x32xf32>
    %274 = arith.mulf %273, %273 : vector<16x32xf32>
    %cst_90 = arith.constant dense<0.000000e+00> : vector<16xf32>
    %275 = vector.multi_reduction <add>, %274, %cst_90 [1] : vector<16x32xf32> to vector<16xf32>
    %276 = vector.shape_cast %275 : vector<16xf32> to vector<16x1xf32>
    %cst_91 = arith.constant 3.200000e+01 : f32
    %277 = vector.broadcast %cst_91 : f32 to vector<16x1xf32>
    %278 = arith.divf %276, %277 : vector<16x1xf32>
    %279 = vector.broadcast %271 : vector<16x1xf32> to vector<16x32xf32>
    %280 = arith.subf %267, %279 : vector<16x32xf32>
    %cst_92 = arith.constant 9.99999974E-6 : f32
    %281 = vector.broadcast %cst_92 : f32 to vector<16x1xf32>
    %282 = arith.addf %278, %281 : vector<16x1xf32>
    %283 = math.rsqrt %282 : vector<16x1xf32>
    %284 = vector.broadcast %283 : vector<16x1xf32> to vector<16x32xf32>
    %285 = arith.mulf %280, %284 : vector<16x32xf32>
    %286 = vector.broadcast %161 : vector<1x32xf32> to vector<16x32xf32>
    %287 = arith.mulf %285, %286 : vector<16x32xf32>
    %288 = vector.broadcast %162 : vector<1x32xf32> to vector<16x32xf32>
    %289 = arith.addf %287, %288 : vector<16x32xf32>
    %c0_93 = arith.constant 0 : index
    %c0_94 = arith.constant 0 : index
    %290 = vector.load %arg8[%c0_93, %c0_94] : memref<16x32xf32, #tpu.memory_space<vmem>>, vector<16x32xf32>
    tpu.vector_store %arg8[%c0_93, %c0_94], %289 {strides = array<i32>} : memref<16x32xf32, #tpu.memory_space<vmem>>, vector<16x32xf32>,
    return
  }
  func.func @transform_0(%arg0: i32) -> (i32, i32) {
    %c0_i32 = arith.constant 0 : i32
    %c0_i32_0 = arith.constant 0 : i32
    %c0_i32_1 = arith.constant 0 : i32
    return %c0_i32, %c0_i32_0 : i32, i32
  }
  func.func @transform_1(%arg0: i32) -> (i32, i32) {
    %c0_i32 = arith.constant 0 : i32
    %c0_i32_0 = arith.constant 0 : i32
    %c0_i32_1 = arith.constant 0 : i32
    return %c0_i32, %c0_i32_0 : i32, i32
  }
  func.func @transform_2(%arg0: i32) -> (i32, i32, i32) {
    %c0_i32 = arith.constant 0 : i32
    %c0_i32_0 = arith.constant 0 : i32
    %c0_i32_1 = arith.constant 0 : i32
    %c0_i32_2 = arith.constant 0 : i32
    return %c0_i32, %c0_i32_0, %c0_i32_1 : i32, i32, i32
  }
  func.func @transform_3(%arg0: i32) -> (i32, i32, i32) {
    %c0_i32 = arith.constant 0 : i32
    %c0_i32_0 = arith.constant 0 : i32
    %c0_i32_1 = arith.constant 0 : i32
    %c0_i32_2 = arith.constant 0 : i32
    return %c0_i32, %c0_i32_0, %c0_i32_1 : i32, i32, i32
  }
  func.func @transform_4(%arg0: i32) -> (i32, i32, i32) {
    %c0_i32 = arith.constant 0 : i32
    %c0_i32_0 = arith.constant 0 : i32
    %c0_i32_1 = arith.constant 0 : i32
    %c0_i32_2 = arith.constant 0 : i32
    return %c0_i32, %c0_i32_0, %c0_i32_1 : i32, i32, i32
  }
  func.func @transform_5(%arg0: i32) -> (i32, i32, i32) {
    %c0_i32 = arith.constant 0 : i32
    %c0_i32_0 = arith.constant 0 : i32
    %c0_i32_1 = arith.constant 0 : i32
    %c0_i32_2 = arith.constant 0 : i32
    return %c0_i32, %c0_i32_0, %c0_i32_1 : i32, i32, i32
  }
  func.func @transform_6(%arg0: i32) -> (i32, i32, i32) {
    %c0_i32 = arith.constant 0 : i32
    %c0_i32_0 = arith.constant 0 : i32
    %c0_i32_1 = arith.constant 0 : i32
    %c0_i32_2 = arith.constant 0 : i32
    return %c0_i32, %c0_i32_0, %c0_i32_1 : i32, i32, i32
  }
  func.func @transform_7(%arg0: i32) -> (i32, i32) {
    %c0_i32 = arith.constant 0 : i32
    %c0_i32_0 = arith.constant 0 : i32
    %c0_i32_1 = arith.constant 0 : i32
    return %c0_i32, %c0_i32_0 : i32, i32
  }
}

</mosaic_0001>

<llo_original>
// kernel: tpu_custom_call.1
$region0: #{tpu_custom_call.1}
  #allocation0 [shape = 'u32[]', space=smem, size = 0x4, offset = 0x4, fixed_abs, tag = 'smem constant byte address 0x4 - core index']
  #allocation1 [shape = 'u32[144,128]{1,0:T(1,128)}', space=vmem, size = 0x12000, scoped, tag = 'internal scratch']
  %s0 = inlined_call_operand.hbm [shape: f32[16,32], index: 0, kind: input, shape index: {}]
  %s1 = inlined_call_operand.hbm [shape: f32[16,16], index: 1, kind: input, shape index: {}]
  %s2 = inlined_call_operand.vmem [shape: f32[2,32,96], index: 2, kind: input, shape index: {}]
  %s3 = inlined_call_operand.vmem [shape: f32[2,32,32], index: 3, kind: input, shape index: {}]
  %s4 = inlined_call_operand.vmem [shape: f32[2,32,64], index: 4, kind: input, shape index: {}]
  %s5 = inlined_call_operand.vmem [shape: f32[2,64,32], index: 5, kind: input, shape index: {}]
  %s6 = inlined_call_operand.hbm [shape: f32[2,8,64], index: 6, kind: input, shape index: {}]
  %s7 = inlined_call_operand.hbm [shape: f32[16,32], index: 7, kind: output, shape index: {}]
  %s8 = sld [smem:[#allocation0]]
  $region50: #{tpu_custom_call.1} parent=0
    _
  %s10 = ssub.s32 1, %s8
  %s11 = scalar_select 0, %s10, %s8
  $region1: #{tpu_custom_call.1} parent=0
    #allocation2 [shape = 'u8[8192]{0}', space=vmem, size = 0x2000, scoped, tag = 'input window, operand 0, single buffered']
    #allocation3 [shape = 's32[1]{0}', space=sflag, size = 0x4, scoped, tag = 'scoped memory for tpu_custom_call.1']
    #allocation4 [shape = 's32[1]{0}', space=sflag, size = 0x4, scoped, tag = 'scoped memory for tpu_custom_call.1']
    #allocation5 [shape = 'u8[8192]{0}', space=vmem, size = 0x2000, scoped, tag = 'input window, operand 1, single buffered']
    #allocation6 [shape = 's32[1]{0}', space=sflag, size = 0x4, scoped, tag = 'scoped memory for tpu_custom_call.1']
    #allocation7 [shape = 'u8[8192]{0}', space=vmem, size = 0x2000, scoped, tag = 'input window, operand 6, single buffered']
    #allocation8 [shape = 'u8[8192]{0}', space=vmem, size = 0x2000, scoped, tag = 'output window, operand 0, single buffered']
    %12 = vsyncpa [#allocation3], 0
    %13 = vsyncpa [#allocation6], 0
    %14 = vsyncpa [#allocation4], 0
    // Predicated region
    $region2: #{tpu_custom_call.1} parent=1 // pred_check
      _
    $region3: #{tpu_custom_call.1} parent=1 // pred_check_branch
      %16 = sbr.rel (0) target = $region5
    $region4: #{tpu_custom_call.1} parent=1 // pred_region
      %s18 = ssub.s32 256, 256
      %19 = vsyncadd [#allocation3], %s18
      %s20 = sshll.u32 [#allocation2], 4
      %s21 = int_to_ptr.vmem [resolvable:$true] %s20
      %26 = dma.hbm_to_vmem [thread:$0]  %s0, 256, %s21, [#allocation3], 128, 128, 8
    $region5: #{tpu_custom_call.1} parent=1 // pred_fallthru
      _
    // Predicated region
    $region6: #{tpu_custom_call.1} parent=1 // pred_check
      _
    $region7: #{tpu_custom_call.1} parent=1 // pred_check_branch
      %28 = sbr.rel (0) target = $region9
    $region8: #{tpu_custom_call.1} parent=1 // pred_region
      %s30 = ssub.s32 256, 256
      %31 = vsyncadd [#allocation6], %s30
      %s32 = sshll.u32 [#allocation5], 4
      %s33 = int_to_ptr.vmem [resolvable:$true] %s32
      %38 = dma.hbm_to_vmem [thread:$0]  %s1, 256, %s33, [#allocation6], 128, 128, 8
    $region9: #{tpu_custom_call.1} parent=1 // pred_fallthru
      _
    // Predicated region
    $region10: #{tpu_custom_call.1} parent=1 // pred_check
      _
    $region11: #{tpu_custom_call.1} parent=1 // pred_check_branch
      %40 = sbr.rel (0) target = $region13
    $region12: #{tpu_custom_call.1} parent=1 // pred_region
      _
    $region13: #{tpu_custom_call.1} parent=1 // pred_fallthru
      _
    // Predicated region
    $region14: #{tpu_custom_call.1} parent=1 // pred_check
      _
    $region15: #{tpu_custom_call.1} parent=1 // pred_check_branch
      %42 = sbr.rel (0) target = $region17
    $region16: #{tpu_custom_call.1} parent=1 // pred_region
      _
    $region17: #{tpu_custom_call.1} parent=1 // pred_fallthru
      _
    // Predicated region
    $region18: #{tpu_custom_call.1} parent=1 // pred_check
      _
    $region19: #{tpu_custom_call.1} parent=1 // pred_check_branch
      %44 = sbr.rel (0) target = $region21
    $region20: #{tpu_custom_call.1} parent=1 // pred_region
      _
    $region21: #{tpu_custom_call.1} parent=1 // pred_fallthru
      _
    // Predicated region
    $region22: #{tpu_custom_call.1} parent=1 // pred_check
      _
    $region23: #{tpu_custom_call.1} parent=1 // pred_check_branch
      %46 = sbr.rel (0) target = $region25
    $region24: #{tpu_custom_call.1} parent=1 // pred_region
      _
    $region25: #{tpu_custom_call.1} parent=1 // pred_fallthru
      _
    // Predicated region
    $region26: #{tpu_custom_call.1} parent=1 // pred_check
      _
    $region27: #{tpu_custom_call.1} parent=1 // pred_check_branch
      %48 = sbr.rel (0) target = $region29
    $region28: #{tpu_custom_call.1} parent=1 // pred_region
      %s50 = ssub.s32 256, 256
      %51 = vsyncadd [#allocation6], %s50
      %s52 = sshll.u32 [#allocation7], 4
      %s53 = int_to_ptr.vmem [resolvable:$true] %s52
      %58 = dma.hbm_to_vmem [thread:$0]  %s6, 256, %s53, [#allocation6], 128, 128, 8
    $region29: #{tpu_custom_call.1} parent=1 // pred_fallthru
      _
    // Predicated region
    $region30: #{tpu_custom_call.1} parent=1 // pred_check
      _
    $region31: #{tpu_custom_call.1} parent=1 // pred_check_branch
      %60 = sbr.rel (0) target = $region33
    $region32: #{tpu_custom_call.1} parent=1 // pred_region
      %61 = dma.done [#allocation3], 256
    $region33: #{tpu_custom_call.1} parent=1 // pred_fallthru
      _
    // Predicated region
    $region34: #{tpu_custom_call.1} parent=1 // pred_check
      _
    $region35: #{tpu_custom_call.1} parent=1 // pred_check_branch
      %63 = sbr.rel (0) target = $region37
    $region36: #{tpu_custom_call.1} parent=1 // pred_region
      %64 = dma.done [#allocation6], 256
    $region37: #{tpu_custom_call.1} parent=1 // pred_fallthru
      _
    // Predicated region
    $region38: #{tpu_custom_call.1} parent=1 // pred_check
      _
    $region39: #{tpu_custom_call.1} parent=1 // pred_check_branch
      %66 = sbr.rel (0) target = $region41
    $region40: #{tpu_custom_call.1} parent=1 // pred_region
      %67 = dma.done [#allocation6], 256
    $region41: #{tpu_custom_call.1} parent=1 // pred_fallthru
      _
    %v68 = vld [vmem:[#allocation2] sm:$0xff]
    %v69 = vld [vmem:[#allocation2 + $0x8] sm:$0xff]
    %v70 = vld [vmem:[#allocation5] sm:$0xff]
    %v71 = vld [vmem:[#allocation5 + $0x8] sm:$0xff]
    %v72 = vld [vmem:[%s2] sm:$0xff]
    %v73 = vld [vmem:[%s2 + $0x8] sm:$0xff]
    %v74 = vld [vmem:[%s2 + $0x10] sm:$0xff]
    %v75 = vld [vmem:[%s2 + $0x18] sm:$0xff]
    %v76 = vld [vmem:[%s3] sm:$0xff]
    %v77 = vld [vmem:[%s3 + $0x8] sm:$0xff]
    %v78 = vld [vmem:[%s3 + $0x10] sm:$0xff]
    %v79 = vld [vmem:[%s3 + $0x18] sm:$0xff]
    %v80 = vld [vmem:[%s4] sm:$0xff]
    %v81 = vld [vmem:[%s4 + $0x8] sm:$0xff]
    %v82 = vld [vmem:[%s4 + $0x10] sm:$0xff]
    %v83 = vld [vmem:[%s4 + $0x18] sm:$0xff]
    %v84 = vld [vmem:[%s5] sm:$0xff]
    %v85 = vld [vmem:[%s5 + $0x8] sm:$0xff]
    %v86 = vld [vmem:[%s5 + $0x10] sm:$0xff]
    %v87 = vld [vmem:[%s5 + $0x18] sm:$0xff]
    %v88 = vld [vmem:[%s5 + $0x20] sm:$0xff]
    %v89 = vld [vmem:[%s5 + $0x28] sm:$0xff]
    %v90 = vld [vmem:[%s5 + $0x30] sm:$0xff]
    %v91 = vld [vmem:[%s5 + $0x38] sm:$0xff]
    %v92 = vld [vmem:[#allocation7] sm:$0xff]
    %vm93 = vcmask 261120
    %v95 = vsel %vm93, %v68, 0
    %v98 = vsel %vm93, %v69, 0
    %100 = vmatprep.subr.mxu0 0.0
    %101 = vmatpush1.msra.mxu0 0.0
    %102 = vmatprep.subr.mxu0 0.0
    %103 = vmatpush1.msra.mxu0 0.0
    %104 = vmatprep.subr.mxu0 0.0
    %105 = vmatpush1.msra.mxu0 0.0
    %106 = vmatprep.subr.mxu0 0.0
    %107 = vmatpush1.msra.mxu0 0.0
    %108 = vmatprep.subr.mxu0 0.0
    %109 = vmatpush1.msra.mxu0 0.0
    %110 = vmatprep.subr.mxu0 0.0
    %111 = vmatpush1.msra.mxu0 0.0
    %112 = vmatprep.subr.mxu0 0.0
    %113 = vmatpush1.msra.mxu0 0.0
    %114 = vmatprep.subr.mxu0 0.0
    %115 = vmatpush1.msra.mxu0 0.0
    %116 = vmatprep.subr.mxu0 0.0
    %117 = vmatpush1.msra.mxu0 0.0
    %118 = vmatprep.subr.mxu0 0.0
    %119 = vmatpush1.msra.mxu0 0.0
    %120 = vmatprep.subr.mxu0 0.0
    %121 = vmatpush1.msra.mxu0 0.0
    %122 = vmatprep.subr.mxu0 0.0
    %123 = vmatpush1.msra.mxu0 0.0
    %124 = vmatprep.subr.mxu0 0.0
    %125 = vmatpush1.msra.mxu0 %v75
    %126 = vmatprep.subr.mxu0 0.0
    %127 = vmatpush1.msra.mxu0 %v74
    %128 = vmatprep.subr.mxu0 0.0
    %129 = vmatpush1.msra.mxu0 %v73
    %130 = vmatprep.subr.mxu0 0.0
    %131 = vmatpush1.msra.mxu0 %v72
    %132 = vmatprep.subr.mxu0 0.0
    %133 = vmatpush2.msra.mxu0 0.0
    %134 = vmatprep.subr.mxu0 0.0
    %135 = vmatpush2.msra.mxu0 0.0
    %136 = vmatprep.subr.mxu0 0.0
    %137 = vmatpush2.msra.mxu0 0.0
    %138 = vmatprep.subr.mxu0 0.0
    %139 = vmatpush2.msra.mxu0 0.0
    %140 = vmatprep.subr.mxu0 0.0
    %141 = vmatpush2.msra.mxu0 0.0
    %142 = vmatprep.subr.mxu0 0.0
    %143 = vmatpush2.msra.mxu0 0.0
    %144 = vmatprep.subr.mxu0 0.0
    %145 = vmatpush2.msra.mxu0 0.0
    %146 = vmatprep.subr.mxu0 0.0
    %147 = vmatpush2.msra.mxu0 0.0
    %148 = vmatprep.subr.mxu0 0.0
    %149 = vmatpush2.msra.mxu0 0.0
    %150 = vmatprep.subr.mxu0 0.0
    %151 = vmatpush2.msra.mxu0 0.0
    %152 = vmatprep.subr.mxu0 0.0
    %153 = vmatpush2.msra.mxu0 0.0
    %154 = vmatprep.subr.mxu0 0.0
    %155 = vmatpush2.msra.mxu0 0.0
    %156 = vmatprep.subr.mxu0 0.0
    %157 = vmatpush2.msra.mxu0 0.0
    %158 = vmatprep.subr.mxu0 0.0
    %159 = vmatpush2.msra.mxu0 0.0
    %160 = vmatprep.subr.mxu0 0.0
    %161 = vmatpush2.msra.mxu0 0.0
    %162 = vmatprep.subr.mxu0 0.0
    %163 = vmatpush2.msra.mxu0 0.0
    %164 = vmatprep.mubr.f32.mxu0 0.0
    %165 = vmatmul.mubr.f32.gmra.mxu0 %v95
    %v166 = vpop.f32.mrf.mxu0
    %v167 = vadd.f32 0.0, %v166
    %v168 = vpop.f32.mrf.mxu0
    %169 = vmatprep.mubr.f32.mxu0 0.0
    %170 = vmatmul.mubr.f32.gmra.mxu0 %v98
    %v171 = vpop.f32.mrf.mxu0
    %v172 = vadd.f32 0.0, %v171
    %v173 = vpop.f32.mrf.mxu0
    %174 = vdwg.mxu0
    %177 = vrot.lane.b32.xlu0 %v167, 96
    %v178 = vpop.permute.xlu0 %177
    %179 = vrot.lane.b32.xlu0 %v172, 96
    %v180 = vpop.permute.xlu0 %179
    %vm181 = vcmask 64512
    %v182 = vsel %vm181, %v167, 0
    %v184 = vsel %vm181, %v172, 0
    %v186 = vsel %vm181, %v178, 0
    %v188 = vsel %vm181, %v180, 0
    %190 = vmatprep.subr.mxu0 0.0
    %191 = vmatpush1.xpose.msra.mxu0 0.0
    %192 = vmatprep.subr.mxu0 0.0
    %193 = vmatpush1.xpose.msra.mxu0 0.0
    %194 = vmatprep.subr.mxu0 0.0
    %195 = vmatpush1.xpose.msra.mxu0 0.0
    %196 = vmatprep.subr.mxu0 0.0
    %197 = vmatpush1.xpose.msra.mxu0 0.0
    %198 = vmatprep.subr.mxu0 0.0
    %199 = vmatpush1.xpose.msra.mxu0 0.0
    %200 = vmatprep.subr.mxu0 0.0
    %201 = vmatpush1.xpose.msra.mxu0 0.0
    %202 = vmatprep.subr.mxu0 0.0
    %203 = vmatpush1.xpose.msra.mxu0 0.0
    %204 = vmatprep.subr.mxu0 0.0
    %205 = vmatpush1.xpose.msra.mxu0 0.0
    %206 = vmatprep.subr.mxu0 0.0
    %207 = vmatpush1.xpose.msra.mxu0 0.0
    %208 = vmatprep.subr.mxu0 0.0
    %209 = vmatpush1.xpose.msra.mxu0 0.0
    %210 = vmatprep.subr.mxu0 0.0
    %211 = vmatpush1.xpose.msra.mxu0 0.0
    %212 = vmatprep.subr.mxu0 0.0
    %213 = vmatpush1.xpose.msra.mxu0 0.0
    %214 = vmatprep.subr.mxu0 0.0
    %215 = vmatpush1.xpose.msra.mxu0 0.0
    %216 = vmatprep.subr.mxu0 0.0
    %217 = vmatpush1.xpose.msra.mxu0 0.0
    %218 = vmatprep.subr.mxu0 0.0
    %219 = vmatpush1.xpose.msra.mxu0 %v188
    %220 = vmatprep.subr.mxu0 0.0
    %221 = vmatpush1.xpose.msra.mxu0 %v186
    %222 = vmatprep.subr.mxu0 0.0
    %223 = vmatpush2.xpose.msra.mxu0 0.0
    %224 = vmatprep.subr.mxu0 0.0
    %225 = vmatpush2.xpose.msra.mxu0 0.0
    %226 = vmatprep.subr.mxu0 0.0
    %227 = vmatpush2.xpose.msra.mxu0 0.0
    %228 = vmatprep.subr.mxu0 0.0
    %229 = vmatpush2.xpose.msra.mxu0 0.0
    %230 = vmatprep.subr.mxu0 0.0
    %231 = vmatpush2.xpose.msra.mxu0 0.0
    %232 = vmatprep.subr.mxu0 0.0
    %233 = vmatpush2.xpose.msra.mxu0 0.0
    %234 = vmatprep.subr.mxu0 0.0
    %235 = vmatpush2.xpose.msra.mxu0 0.0
    %236 = vmatprep.subr.mxu0 0.0
    %237 = vmatpush2.xpose.msra.mxu0 0.0
    %238 = vmatprep.subr.mxu0 0.0
    %239 = vmatpush2.xpose.msra.mxu0 0.0
    %240 = vmatprep.subr.mxu0 0.0
    %241 = vmatpush2.xpose.msra.mxu0 0.0
    %242 = vmatprep.subr.mxu0 0.0
    %243 = vmatpush2.xpose.msra.mxu0 0.0
    %244 = vmatprep.subr.mxu0 0.0
    %245 = vmatpush2.xpose.msra.mxu0 0.0
    %246 = vmatprep.subr.mxu0 0.0
    %247 = vmatpush2.xpose.msra.mxu0 0.0
    %248 = vmatprep.subr.mxu0 0.0
    %249 = vmatpush2.xpose.msra.mxu0 0.0
    %250 = vmatprep.subr.mxu0 0.0
    %251 = vmatpush2.xpose.msra.mxu0 0.0
    %252 = vmatprep.subr.mxu0 0.0
    %253 = vmatpush2.xpose.msra.mxu0 0.0
    %254 = vmatprep.mubr.f32.mxu0 0.0
    %255 = vmatmul.mubr.f32.gmra.mxu0 %v182
    %v256 = vpop.f32.mrf.mxu0
    %v257 = vadd.f32 %v70, %v256
    %v258 = vpop.f32.mrf.mxu0
    %259 = vmatprep.mubr.f32.mxu0 0.0
    %260 = vmatmul.mubr.f32.gmra.mxu0 %v184
    %v261 = vpop.f32.mrf.mxu0
    %v262 = vadd.f32 %v71, %v261
    %v263 = vpop.f32.mrf.mxu0
    %264 = vdwg.mxu0
    %vm265 = vcmask 130048
    %v266 = vsel %vm265, %v257, -inf
    %267 = vmax.xlane.f32.xlu0 %v266
    %v268 = vpop.xlane.xlu0 %267
    %v269 = vsel %vm265, %v262, -inf
    %270 = vmax.xlane.f32.xlu0 %v269
    %v271 = vpop.xlane.xlu0 %270
    %v272 = vsub.f32 %v257, %v268
    %v273 = vsub.f32 %v262, %v271
    %v274 = vmul.f32 %v272, 1.442695
    %v275 = vpow.pop %v274
    %v276 = vmul.f32 %v273, 1.442695
    %v277 = vpow.pop %v276
    %v278 = vsel %vm265, %v275, 0.0
    %279 = vadd.xlane.f32.xlu0 %v278
    %v280 = vpop.xlane.xlu0 %279
    %v281 = vsel %vm265, %v277, 0.0
    %282 = vadd.xlane.f32.xlu0 %v281
    %v283 = vpop.xlane.xlu0 %282
    %v284 = vrcp.pop %v280
    %v285 = vrcp.pop %v283
    %v286 = vmul.f32 %v275, %v284
    %v287 = vmul.f32 %v277, %v285
    %288 = vrot.lane.b32.xlu0 %v167, 64
    %v289 = vpop.permute.xlu0 %288
    %290 = vrot.lane.b32.xlu0 %v172, 64
    %v291 = vpop.permute.xlu0 %290
    %v295 = vsel %vm265, %v286, 0
    %v298 = vsel %vm265, %v287, 0
    %300 = vmatprep.subr.mxu0 0.0
    %301 = vmatpush1.msra.mxu0 0.0
    %302 = vmatprep.subr.mxu0 0.0
    %303 = vmatpush1.msra.mxu0 0.0
    %304 = vmatprep.subr.mxu0 0.0
    %305 = vmatpush1.msra.mxu0 0.0
    %306 = vmatprep.subr.mxu0 0.0
    %307 = vmatpush1.msra.mxu0 0.0
    %308 = vmatprep.subr.mxu0 0.0
    %309 = vmatpush1.msra.mxu0 0.0
    %310 = vmatprep.subr.mxu0 0.0
    %311 = vmatpush1.msra.mxu0 0.0
    %312 = vmatprep.subr.mxu0 0.0
    %313 = vmatpush1.msra.mxu0 0.0
    %314 = vmatprep.subr.mxu0 0.0
    %315 = vmatpush1.msra.mxu0 0.0
    %316 = vmatprep.subr.mxu0 0.0
    %317 = vmatpush1.msra.mxu0 0.0
    %318 = vmatprep.subr.mxu0 0.0
    %319 = vmatpush1.msra.mxu0 0.0
    %320 = vmatprep.subr.mxu0 0.0
    %321 = vmatpush1.msra.mxu0 0.0
    %322 = vmatprep.subr.mxu0 0.0
    %323 = vmatpush1.msra.mxu0 0.0
    %324 = vmatprep.subr.mxu0 0.0
    %325 = vmatpush1.msra.mxu0 0.0
    %326 = vmatprep.subr.mxu0 0.0
    %327 = vmatpush1.msra.mxu0 0.0
    %328 = vmatprep.subr.mxu0 0.0
    %329 = vmatpush1.msra.mxu0 %v291
    %330 = vmatprep.subr.mxu0 0.0
    %331 = vmatpush1.msra.mxu0 %v289
    %332 = vmatprep.subr.mxu0 0.0
    %333 = vmatpush2.msra.mxu0 0.0
    %334 = vmatprep.subr.mxu0 0.0
    %335 = vmatpush2.msra.mxu0 0.0
    %336 = vmatprep.subr.mxu0 0.0
    %337 = vmatpush2.msra.mxu0 0.0
    %338 = vmatprep.subr.mxu0 0.0
    %339 = vmatpush2.msra.mxu0 0.0
    %340 = vmatprep.subr.mxu0 0.0
    %341 = vmatpush2.msra.mxu0 0.0
    %342 = vmatprep.subr.mxu0 0.0
    %343 = vmatpush2.msra.mxu0 0.0
    %344 = vmatprep.subr.mxu0 0.0
    %345 = vmatpush2.msra.mxu0 0.0
    %346 = vmatprep.subr.mxu0 0.0
    %347 = vmatpush2.msra.mxu0 0.0
    %348 = vmatprep.subr.mxu0 0.0
    %349 = vmatpush2.msra.mxu0 0.0
    %350 = vmatprep.subr.mxu0 0.0
    %351 = vmatpush2.msra.mxu0 0.0
    %352 = vmatprep.subr.mxu0 0.0
    %353 = vmatpush2.msra.mxu0 0.0
    %354 = vmatprep.subr.mxu0 0.0
    %355 = vmatpush2.msra.mxu0 0.0
    %356 = vmatprep.subr.mxu0 0.0
    %357 = vmatpush2.msra.mxu0 0.0
    %358 = vmatprep.subr.mxu0 0.0
    %359 = vmatpush2.msra.mxu0 0.0
    %360 = vmatprep.subr.mxu0 0.0
    %361 = vmatpush2.msra.mxu0 0.0
    %362 = vmatprep.subr.mxu0 0.0
    %363 = vmatpush2.msra.mxu0 0.0
    %364 = vmatprep.mubr.f32.mxu0 0.0
    %365 = vmatmul.mubr.f32.gmra.mxu0 %v295
    %v366 = vpop.f32.mrf.mxu0
    %v367 = vadd.f32 0.0, %v366
    %v368 = vpop.f32.mrf.mxu0
    %369 = vmatprep.mubr.f32.mxu0 0.0
    %370 = vmatmul.mubr.f32.gmra.mxu0 %v298
    %v371 = vpop.f32.mrf.mxu0
    %v372 = vadd.f32 0.0, %v371
    %v373 = vpop.f32.mrf.mxu0
    %374 = vdwg.mxu0
    %375 = vrot.lane.b32.xlu0 %v167, 120
    %v376 = vpop.permute.xlu0 %375
    %377 = vrot.lane.b32.xlu0 %v172, 120
    %v378 = vpop.permute.xlu0 %377
    %379 = vrot.lane.b32.xlu0 %v167, 88
    %v380 = vpop.permute.xlu0 %379
    %381 = vrot.lane.b32.xlu0 %v172, 88
    %v382 = vpop.permute.xlu0 %381
    %v383 = vsel %vm181, %v376, 0
    %v385 = vsel %vm181, %v378, 0
    %v387 = vsel %vm181, %v380, 0
    %v389 = vsel %vm181, %v382, 0
    %391 = vmatprep.subr.mxu0 0.0
    %392 = vmatpush1.xpose.msra.mxu0 0.0
    %393 = vmatprep.subr.mxu0 0.0
    %394 = vmatpush1.xpose.msra.mxu0 0.0
    %395 = vmatprep.subr.mxu0 0.0
    %396 = vmatpush1.xpose.msra.mxu0 0.0
    %397 = vmatprep.subr.mxu0 0.0
    %398 = vmatpush1.xpose.msra.mxu0 0.0
    %399 = vmatprep.subr.mxu0 0.0
    %400 = vmatpush1.xpose.msra.mxu0 0.0
    %401 = vmatprep.subr.mxu0 0.0
    %402 = vmatpush1.xpose.msra.mxu0 0.0
    %403 = vmatprep.subr.mxu0 0.0
    %404 = vmatpush1.xpose.msra.mxu0 0.0
    %405 = vmatprep.subr.mxu0 0.0
    %406 = vmatpush1.xpose.msra.mxu0 0.0
    %407 = vmatprep.subr.mxu0 0.0
    %408 = vmatpush1.xpose.msra.mxu0 0.0
    %409 = vmatprep.subr.mxu0 0.0
    %410 = vmatpush1.xpose.msra.mxu0 0.0
    %411 = vmatprep.subr.mxu0 0.0
    %412 = vmatpush1.xpose.msra.mxu0 0.0
    %413 = vmatprep.subr.mxu0 0.0
    %414 = vmatpush1.xpose.msra.mxu0 0.0
    %415 = vmatprep.subr.mxu0 0.0
    %416 = vmatpush1.xpose.msra.mxu0 0.0
    %417 = vmatprep.subr.mxu0 0.0
    %418 = vmatpush1.xpose.msra.mxu0 0.0
    %419 = vmatprep.subr.mxu0 0.0
    %420 = vmatpush1.xpose.msra.mxu0 %v389
    %421 = vmatprep.subr.mxu0 0.0
    %422 = vmatpush1.xpose.msra.mxu0 %v387
    %423 = vmatprep.subr.mxu0 0.0
    %424 = vmatpush2.xpose.msra.mxu0 0.0
    %425 = vmatprep.subr.mxu0 0.0
    %426 = vmatpush2.xpose.msra.mxu0 0.0
    %427 = vmatprep.subr.mxu0 0.0
    %428 = vmatpush2.xpose.msra.mxu0 0.0
    %429 = vmatprep.subr.mxu0 0.0
    %430 = vmatpush2.xpose.msra.mxu0 0.0
    %431 = vmatprep.subr.mxu0 0.0
    %432 = vmatpush2.xpose.msra.mxu0 0.0
    %433 = vmatprep.subr.mxu0 0.0
    %434 = vmatpush2.xpose.msra.mxu0 0.0
    %435 = vmatprep.subr.mxu0 0.0
    %436 = vmatpush2.xpose.msra.mxu0 0.0
    %437 = vmatprep.subr.mxu0 0.0
    %438 = vmatpush2.xpose.msra.mxu0 0.0
    %439 = vmatprep.subr.mxu0 0.0
    %440 = vmatpush2.xpose.msra.mxu0 0.0
    %441 = vmatprep.subr.mxu0 0.0
    %442 = vmatpush2.xpose.msra.mxu0 0.0
    %443 = vmatprep.subr.mxu0 0.0
    %444 = vmatpush2.xpose.msra.mxu0 0.0
    %445 = vmatprep.subr.mxu0 0.0
    %446 = vmatpush2.xpose.msra.mxu0 0.0
    %447 = vmatprep.subr.mxu0 0.0
    %448 = vmatpush2.xpose.msra.mxu0 0.0
    %449 = vmatprep.subr.mxu0 0.0
    %450 = vmatpush2.xpose.msra.mxu0 0.0
    %451 = vmatprep.subr.mxu0 0.0
    %452 = vmatpush2.xpose.msra.mxu0 0.0
    %453 = vmatprep.subr.mxu0 0.0
    %454 = vmatpush2.xpose.msra.mxu0 0.0
    %455 = vmatprep.mubr.f32.mxu0 0.0
    %456 = vmatmul.mubr.f32.gmra.mxu0 %v383
    %v457 = vpop.f32.mrf.mxu0
    %v458 = vadd.f32 %v70, %v457
    %v459 = vpop.f32.mrf.mxu0
    %460 = vmatprep.mubr.f32.mxu0 0.0
    %461 = vmatmul.mubr.f32.gmra.mxu0 %v385
    %v462 = vpop.f32.mrf.mxu0
    %v463 = vadd.f32 %v71, %v462
    %v464 = vpop.f32.mrf.mxu0
    %465 = vdwg.mxu0
    %v466 = vsel %vm265, %v458, -inf
    %467 = vmax.xlane.f32.xlu0 %v466
    %v468 = vpop.xlane.xlu0 %467
    %v469 = vsel %vm265, %v463, -inf
    %470 = vmax.xlane.f32.xlu0 %v469
    %v471 = vpop.xlane.xlu0 %470
    %v472 = vsub.f32 %v458, %v468
    %v473 = vsub.f32 %v463, %v471
    %v474 = vmul.f32 %v472, 1.442695
    %v475 = vpow.pop %v474
    %v476 = vmul.f32 %v473, 1.442695
    %v477 = vpow.pop %v476
    %v478 = vsel %vm265, %v475, 0.0
    %479 = vadd.xlane.f32.xlu0 %v478
    %v480 = vpop.xlane.xlu0 %479
    %v481 = vsel %vm265, %v477, 0.0
    %482 = vadd.xlane.f32.xlu0 %v481
    %v483 = vpop.xlane.xlu0 %482
    %v484 = vrcp.pop %v480
    %v485 = vrcp.pop %v483
    %v486 = vmul.f32 %v475, %v484
    %v487 = vmul.f32 %v477, %v485
    %488 = vrot.lane.b32.xlu0 %v167, 56
    %v489 = vpop.permute.xlu0 %488
    %490 = vrot.lane.b32.xlu0 %v172, 56
    %v491 = vpop.permute.xlu0 %490
    %v495 = vsel %vm265, %v486, 0
    %v498 = vsel %vm265, %v487, 0
    %500 = vmatprep.subr.mxu0 0.0
    %501 = vmatpush1.msra.mxu0 0.0
    %502 = vmatprep.subr.mxu0 0.0
    %503 = vmatpush1.msra.mxu0 0.0
    %504 = vmatprep.subr.mxu0 0.0
    %505 = vmatpush1.msra.mxu0 0.0
    %506 = vmatprep.subr.mxu0 0.0
    %507 = vmatpush1.msra.mxu0 0.0
    %508 = vmatprep.subr.mxu0 0.0
    %509 = vmatpush1.msra.mxu0 0.0
    %510 = vmatprep.subr.mxu0 0.0
    %511 = vmatpush1.msra.mxu0 0.0
    %512 = vmatprep.subr.mxu0 0.0
    %513 = vmatpush1.msra.mxu0 0.0
    %514 = vmatprep.subr.mxu0 0.0
    %515 = vmatpush1.msra.mxu0 0.0
    %516 = vmatprep.subr.mxu0 0.0
    %517 = vmatpush1.msra.mxu0 0.0
    %518 = vmatprep.subr.mxu0 0.0
    %519 = vmatpush1.msra.mxu0 0.0
    %520 = vmatprep.subr.mxu0 0.0
    %521 = vmatpush1.msra.mxu0 0.0
    %522 = vmatprep.subr.mxu0 0.0
    %523 = vmatpush1.msra.mxu0 0.0
    %524 = vmatprep.subr.mxu0 0.0
    %525 = vmatpush1.msra.mxu0 0.0
    %526 = vmatprep.subr.mxu0 0.0
    %527 = vmatpush1.msra.mxu0 0.0
    %528 = vmatprep.subr.mxu0 0.0
    %529 = vmatpush1.msra.mxu0 %v491
    %530 = vmatprep.subr.mxu0 0.0
    %531 = vmatpush1.msra.mxu0 %v489
    %532 = vmatprep.subr.mxu0 0.0
    %533 = vmatpush2.msra.mxu0 0.0
    %534 = vmatprep.subr.mxu0 0.0
    %535 = vmatpush2.msra.mxu0 0.0
    %536 = vmatprep.subr.mxu0 0.0
    %537 = vmatpush2.msra.mxu0 0.0
    %538 = vmatprep.subr.mxu0 0.0
    %539 = vmatpush2.msra.mxu0 0.0
    %540 = vmatprep.subr.mxu0 0.0
    %541 = vmatpush2.msra.mxu0 0.0
    %542 = vmatprep.subr.mxu0 0.0
    %543 = vmatpush2.msra.mxu0 0.0
    %544 = vmatprep.subr.mxu0 0.0
    %545 = vmatpush2.msra.mxu0 0.0
    %546 = vmatprep.subr.mxu0 0.0
    %547 = vmatpush2.msra.mxu0 0.0
    %548 = vmatprep.subr.mxu0 0.0
    %549 = vmatpush2.msra.mxu0 0.0
    %550 = vmatprep.subr.mxu0 0.0
    %551 = vmatpush2.msra.mxu0 0.0
    %552 = vmatprep.subr.mxu0 0.0
    %553 = vmatpush2.msra.mxu0 0.0
    %554 = vmatprep.subr.mxu0 0.0
    %555 = vmatpush2.msra.mxu0 0.0
    %556 = vmatprep.subr.mxu0 0.0
    %557 = vmatpush2.msra.mxu0 0.0
    %558 = vmatprep.subr.mxu0 0.0
    %559 = vmatpush2.msra.mxu0 0.0
    %560 = vmatprep.subr.mxu0 0.0
    %561 = vmatpush2.msra.mxu0 0.0
    %562 = vmatprep.subr.mxu0 0.0
    %563 = vmatpush2.msra.mxu0 0.0
    %564 = vmatprep.mubr.f32.mxu0 0.0
    %565 = vmatmul.mubr.f32.gmra.mxu0 %v495
    %v566 = vpop.f32.mrf.mxu0
    %v567 = vadd.f32 0.0, %v566
    %v568 = vpop.f32.mrf.mxu0
    %569 = vmatprep.mubr.f32.mxu0 0.0
    %570 = vmatmul.mubr.f32.gmra.mxu0 %v498
    %v571 = vpop.f32.mrf.mxu0
    %v572 = vadd.f32 0.0, %v571
    %v573 = vpop.f32.mrf.mxu0
    %574 = vdwg.mxu0
    %575 = vrot.lane.b32.xlu0 %v167, 112
    %v576 = vpop.permute.xlu0 %575
    %577 = vrot.lane.b32.xlu0 %v172, 112
    %v578 = vpop.permute.xlu0 %577
    %579 = vrot.lane.b32.xlu0 %v167, 80
    %v580 = vpop.permute.xlu0 %579
    %581 = vrot.lane.b32.xlu0 %v172, 80
    %v582 = vpop.permute.xlu0 %581
    %v583 = vsel %vm181, %v576, 0
    %v585 = vsel %vm181, %v578, 0
    %v587 = vsel %vm181, %v580, 0
    %v589 = vsel %vm181, %v582, 0
    %591 = vmatprep.subr.mxu0 0.0
    %592 = vmatpush1.xpose.msra.mxu0 0.0
    %593 = vmatprep.subr.mxu0 0.0
    %594 = vmatpush1.xpose.msra.mxu0 0.0
    %595 = vmatprep.subr.mxu0 0.0
    %596 = vmatpush1.xpose.msra.mxu0 0.0
    %597 = vmatprep.subr.mxu0 0.0
    %598 = vmatpush1.xpose.msra.mxu0 0.0
    %599 = vmatprep.subr.mxu0 0.0
    %600 = vmatpush1.xpose.msra.mxu0 0.0
    %601 = vmatprep.subr.mxu0 0.0
    %602 = vmatpush1.xpose.msra.mxu0 0.0
    %603 = vmatprep.subr.mxu0 0.0
    %604 = vmatpush1.xpose.msra.mxu0 0.0
    %605 = vmatprep.subr.mxu0 0.0
    %606 = vmatpush1.xpose.msra.mxu0 0.0
    %607 = vmatprep.subr.mxu0 0.0
    %608 = vmatpush1.xpose.msra.mxu0 0.0
    %609 = vmatprep.subr.mxu0 0.0
    %610 = vmatpush1.xpose.msra.mxu0 0.0
    %611 = vmatprep.subr.mxu0 0.0
    %612 = vmatpush1.xpose.msra.mxu0 0.0
    %613 = vmatprep.subr.mxu0 0.0
    %614 = vmatpush1.xpose.msra.mxu0 0.0
    %615 = vmatprep.subr.mxu0 0.0
    %616 = vmatpush1.xpose.msra.mxu0 0.0
    %617 = vmatprep.subr.mxu0 0.0
    %618 = vmatpush1.xpose.msra.mxu0 0.0
    %619 = vmatprep.subr.mxu0 0.0
    %620 = vmatpush1.xpose.msra.mxu0 %v589
    %621 = vmatprep.subr.mxu0 0.0
    %622 = vmatpush1.xpose.msra.mxu0 %v587
    %623 = vmatprep.subr.mxu0 0.0
    %624 = vmatpush2.xpose.msra.mxu0 0.0
    %625 = vmatprep.subr.mxu0 0.0
    %626 = vmatpush2.xpose.msra.mxu0 0.0
    %627 = vmatprep.subr.mxu0 0.0
    %628 = vmatpush2.xpose.msra.mxu0 0.0
    %629 = vmatprep.subr.mxu0 0.0
    %630 = vmatpush2.xpose.msra.mxu0 0.0
    %631 = vmatprep.subr.mxu0 0.0
    %632 = vmatpush2.xpose.msra.mxu0 0.0
    %633 = vmatprep.subr.mxu0 0.0
    %634 = vmatpush2.xpose.msra.mxu0 0.0
    %635 = vmatprep.subr.mxu0 0.0
    %636 = vmatpush2.xpose.msra.mxu0 0.0
    %637 = vmatprep.subr.mxu0 0.0
    %638 = vmatpush2.xpose.msra.mxu0 0.0
    %639 = vmatprep.subr.mxu0 0.0
    %640 = vmatpush2.xpose.msra.mxu0 0.0
    %641 = vmatprep.subr.mxu0 0.0
    %642 = vmatpush2.xpose.msra.mxu0 0.0
    %643 = vmatprep.subr.mxu0 0.0
    %644 = vmatpush2.xpose.msra.mxu0 0.0
    %645 = vmatprep.subr.mxu0 0.0
    %646 = vmatpush2.xpose.msra.mxu0 0.0
    %647 = vmatprep.subr.mxu0 0.0
    %648 = vmatpush2.xpose.msra.mxu0 0.0
    %649 = vmatprep.subr.mxu0 0.0
    %650 = vmatpush2.xpose.msra.mxu0 0.0
    %651 = vmatprep.subr.mxu0 0.0
    %652 = vmatpush2.xpose.msra.mxu0 0.0
    %653 = vmatprep.subr.mxu0 0.0
    %654 = vmatpush2.xpose.msra.mxu0 0.0
    %655 = vmatprep.mubr.f32.mxu0 0.0
    %656 = vmatmul.mubr.f32.gmra.mxu0 %v583
    %v657 = vpop.f32.mrf.mxu0
    %v658 = vadd.f32 %v70, %v657
    %v659 = vpop.f32.mrf.mxu0
    %660 = vmatprep.mubr.f32.mxu0 0.0
    %661 = vmatmul.mubr.f32.gmra.mxu0 %v585
    %v662 = vpop.f32.mrf.mxu0
    %v663 = vadd.f32 %v71, %v662
    %v664 = vpop.f32.mrf.mxu0
    %665 = vdwg.mxu0
    %v666 = vsel %vm265, %v658, -inf
    %667 = vmax.xlane.f32.xlu0 %v666
    %v668 = vpop.xlane.xlu0 %667
    %v669 = vsel %vm265, %v663, -inf
    %670 = vmax.xlane.f32.xlu0 %v669
    %v671 = vpop.xlane.xlu0 %670
    %v672 = vsub.f32 %v658, %v668
    %v673 = vsub.f32 %v663, %v671
    %v674 = vmul.f32 %v672, 1.442695
    %v675 = vpow.pop %v674
    %v676 = vmul.f32 %v673, 1.442695
    %v677 = vpow.pop %v676
    %v678 = vsel %vm265, %v675, 0.0
    %679 = vadd.xlane.f32.xlu0 %v678
    %v680 = vpop.xlane.xlu0 %679
    %v681 = vsel %vm265, %v677, 0.0
    %682 = vadd.xlane.f32.xlu0 %v681
    %v683 = vpop.xlane.xlu0 %682
    %v684 = vrcp.pop %v680
    %v685 = vrcp.pop %v683
    %v686 = vmul.f32 %v675, %v684
    %v687 = vmul.f32 %v677, %v685
    %688 = vrot.lane.b32.xlu0 %v167, 48
    %v689 = vpop.permute.xlu0 %688
    %690 = vrot.lane.b32.xlu0 %v172, 48
    %v691 = vpop.permute.xlu0 %690
    %v695 = vsel %vm265, %v686, 0
    %v698 = vsel %vm265, %v687, 0
    %700 = vmatprep.subr.mxu0 0.0
    %701 = vmatpush1.msra.mxu0 0.0
    %702 = vmatprep.subr.mxu0 0.0
    %703 = vmatpush1.msra.mxu0 0.0
    %704 = vmatprep.subr.mxu0 0.0
    %705 = vmatpush1.msra.mxu0 0.0
    %706 = vmatprep.subr.mxu0 0.0
    %707 = vmatpush1.msra.mxu0 0.0
    %708 = vmatprep.subr.mxu0 0.0
    %709 = vmatpush1.msra.mxu0 0.0
    %710 = vmatprep.subr.mxu0 0.0
    %711 = vmatpush1.msra.mxu0 0.0
    %712 = vmatprep.subr.mxu0 0.0
    %713 = vmatpush1.msra.mxu0 0.0
    %714 = vmatprep.subr.mxu0 0.0
    %715 = vmatpush1.msra.mxu0 0.0
    %716 = vmatprep.subr.mxu0 0.0
    %717 = vmatpush1.msra.mxu0 0.0
    %718 = vmatprep.subr.mxu0 0.0
    %719 = vmatpush1.msra.mxu0 0.0
    %720 = vmatprep.subr.mxu0 0.0
    %721 = vmatpush1.msra.mxu0 0.0
    %722 = vmatprep.subr.mxu0 0.0
    %723 = vmatpush1.msra.mxu0 0.0
    %724 = vmatprep.subr.mxu0 0.0
    %725 = vmatpush1.msra.mxu0 0.0
    %726 = vmatprep.subr.mxu0 0.0
    %727 = vmatpush1.msra.mxu0 0.0
    %728 = vmatprep.subr.mxu0 0.0
    %729 = vmatpush1.msra.mxu0 %v691
    %730 = vmatprep.subr.mxu0 0.0
    %731 = vmatpush1.msra.mxu0 %v689
    %732 = vmatprep.subr.mxu0 0.0
    %733 = vmatpush2.msra.mxu0 0.0
    %734 = vmatprep.subr.mxu0 0.0
    %735 = vmatpush2.msra.mxu0 0.0
    %736 = vmatprep.subr.mxu0 0.0
    %737 = vmatpush2.msra.mxu0 0.0
    %738 = vmatprep.subr.mxu0 0.0
    %739 = vmatpush2.msra.mxu0 0.0
    %740 = vmatprep.subr.mxu0 0.0
    %741 = vmatpush2.msra.mxu0 0.0
    %742 = vmatprep.subr.mxu0 0.0
    %743 = vmatpush2.msra.mxu0 0.0
    %744 = vmatprep.subr.mxu0 0.0
    %745 = vmatpush2.msra.mxu0 0.0
    %746 = vmatprep.subr.mxu0 0.0
    %747 = vmatpush2.msra.mxu0 0.0
    %748 = vmatprep.subr.mxu0 0.0
    %749 = vmatpush2.msra.mxu0 0.0
    %750 = vmatprep.subr.mxu0 0.0
    %751 = vmatpush2.msra.mxu0 0.0
    %752 = vmatprep.subr.mxu0 0.0
    %753 = vmatpush2.msra.mxu0 0.0
    %754 = vmatprep.subr.mxu0 0.0
    %755 = vmatpush2.msra.mxu0 0.0
    %756 = vmatprep.subr.mxu0 0.0
    %757 = vmatpush2.msra.mxu0 0.0
    %758 = vmatprep.subr.mxu0 0.0
    %759 = vmatpush2.msra.mxu0 0.0
    %760 = vmatprep.subr.mxu0 0.0
    %761 = vmatpush2.msra.mxu0 0.0
    %762 = vmatprep.subr.mxu0 0.0
    %763 = vmatpush2.msra.mxu0 0.0
    %764 = vmatprep.mubr.f32.mxu0 0.0
    %765 = vmatmul.mubr.f32.gmra.mxu0 %v695
    %v766 = vpop.f32.mrf.mxu0
    %v767 = vadd.f32 0.0, %v766
    %v768 = vpop.f32.mrf.mxu0
    %769 = vmatprep.mubr.f32.mxu0 0.0
    %770 = vmatmul.mubr.f32.gmra.mxu0 %v698
    %v771 = vpop.f32.mrf.mxu0
    %v772 = vadd.f32 0.0, %v771
    %v773 = vpop.f32.mrf.mxu0
    %774 = vdwg.mxu0
    %775 = vrot.lane.b32.xlu0 %v167, 104
    %v776 = vpop.permute.xlu0 %775
    %777 = vrot.lane.b32.xlu0 %v172, 104
    %v778 = vpop.permute.xlu0 %777
    %779 = vrot.lane.b32.xlu0 %v167, 72
    %v780 = vpop.permute.xlu0 %779
    %781 = vrot.lane.b32.xlu0 %v172, 72
    %v782 = vpop.permute.xlu0 %781
    %v783 = vsel %vm181, %v776, 0
    %v785 = vsel %vm181, %v778, 0
    %v787 = vsel %vm181, %v780, 0
    %v789 = vsel %vm181, %v782, 0
    %791 = vmatprep.subr.mxu0 0.0
    %792 = vmatpush1.xpose.msra.mxu0 0.0
    %793 = vmatprep.subr.mxu0 0.0
    %794 = vmatpush1.xpose.msra.mxu0 0.0
    %795 = vmatprep.subr.mxu0 0.0
    %796 = vmatpush1.xpose.msra.mxu0 0.0
    %797 = vmatprep.subr.mxu0 0.0
    %798 = vmatpush1.xpose.msra.mxu0 0.0
    %799 = vmatprep.subr.mxu0 0.0
    %800 = vmatpush1.xpose.msra.mxu0 0.0
    %801 = vmatprep.subr.mxu0 0.0
    %802 = vmatpush1.xpose.msra.mxu0 0.0
    %803 = vmatprep.subr.mxu0 0.0
    %804 = vmatpush1.xpose.msra.mxu0 0.0
    %805 = vmatprep.subr.mxu0 0.0
    %806 = vmatpush1.xpose.msra.mxu0 0.0
    %807 = vmatprep.subr.mxu0 0.0
    %808 = vmatpush1.xpose.msra.mxu0 0.0
    %809 = vmatprep.subr.mxu0 0.0
    %810 = vmatpush1.xpose.msra.mxu0 0.0
    %811 = vmatprep.subr.mxu0 0.0
    %812 = vmatpush1.xpose.msra.mxu0 0.0
    %813 = vmatprep.subr.mxu0 0.0
    %814 = vmatpush1.xpose.msra.mxu0 0.0
    %815 = vmatprep.subr.mxu0 0.0
    %816 = vmatpush1.xpose.msra.mxu0 0.0
    %817 = vmatprep.subr.mxu0 0.0
    %818 = vmatpush1.xpose.msra.mxu0 0.0
    %819 = vmatprep.subr.mxu0 0.0
    %820 = vmatpush1.xpose.msra.mxu0 %v789
    %821 = vmatprep.subr.mxu0 0.0
    %822 = vmatpush1.xpose.msra.mxu0 %v787
    %823 = vmatprep.subr.mxu0 0.0
    %824 = vmatpush2.xpose.msra.mxu0 0.0
    %825 = vmatprep.subr.mxu0 0.0
    %826 = vmatpush2.xpose.msra.mxu0 0.0
    %827 = vmatprep.subr.mxu0 0.0
    %828 = vmatpush2.xpose.msra.mxu0 0.0
    %829 = vmatprep.subr.mxu0 0.0
    %830 = vmatpush2.xpose.msra.mxu0 0.0
    %831 = vmatprep.subr.mxu0 0.0
    %832 = vmatpush2.xpose.msra.mxu0 0.0
    %833 = vmatprep.subr.mxu0 0.0
    %834 = vmatpush2.xpose.msra.mxu0 0.0
    %835 = vmatprep.subr.mxu0 0.0
    %836 = vmatpush2.xpose.msra.mxu0 0.0
    %837 = vmatprep.subr.mxu0 0.0
    %838 = vmatpush2.xpose.msra.mxu0 0.0
    %839 = vmatprep.subr.mxu0 0.0
    %840 = vmatpush2.xpose.msra.mxu0 0.0
    %841 = vmatprep.subr.mxu0 0.0
    %842 = vmatpush2.xpose.msra.mxu0 0.0
    %843 = vmatprep.subr.mxu0 0.0
    %844 = vmatpush2.xpose.msra.mxu0 0.0
    %845 = vmatprep.subr.mxu0 0.0
    %846 = vmatpush2.xpose.msra.mxu0 0.0
    %847 = vmatprep.subr.mxu0 0.0
    %848 = vmatpush2.xpose.msra.mxu0 0.0
    %849 = vmatprep.subr.mxu0 0.0
    %850 = vmatpush2.xpose.msra.mxu0 0.0
    %851 = vmatprep.subr.mxu0 0.0
    %852 = vmatpush2.xpose.msra.mxu0 0.0
    %853 = vmatprep.subr.mxu0 0.0
    %854 = vmatpush2.xpose.msra.mxu0 0.0
    %855 = vmatprep.mubr.f32.mxu0 0.0
    %856 = vmatmul.mubr.f32.gmra.mxu0 %v783
    %v857 = vpop.f32.mrf.mxu0
    %v858 = vadd.f32 %v70, %v857
    %v859 = vpop.f32.mrf.mxu0
    %860 = vmatprep.mubr.f32.mxu0 0.0
    %861 = vmatmul.mubr.f32.gmra.mxu0 %v785
    %v862 = vpop.f32.mrf.mxu0
    %v863 = vadd.f32 %v71, %v862
    %v864 = vpop.f32.mrf.mxu0
    %865 = vdwg.mxu0
    %v866 = vsel %vm265, %v858, -inf
    %867 = vmax.xlane.f32.xlu0 %v866
    %v868 = vpop.xlane.xlu0 %867
    %v869 = vsel %vm265, %v863, -inf
    %870 = vmax.xlane.f32.xlu0 %v869
    %v871 = vpop.xlane.xlu0 %870
    %v872 = vsub.f32 %v858, %v868
    %v873 = vsub.f32 %v863, %v871
    %v874 = vmul.f32 %v872, 1.442695
    %v875 = vpow.pop %v874
    %v876 = vmul.f32 %v873, 1.442695
    %v877 = vpow.pop %v876
    %v878 = vsel %vm265, %v875, 0.0
    %879 = vadd.xlane.f32.xlu0 %v878
    %v880 = vpop.xlane.xlu0 %879
    %v881 = vsel %vm265, %v877, 0.0
    %882 = vadd.xlane.f32.xlu0 %v881
    %v883 = vpop.xlane.xlu0 %882
    %v884 = vrcp.pop %v880
    %v885 = vrcp.pop %v883
    %v886 = vmul.f32 %v875, %v884
    %v887 = vmul.f32 %v877, %v885
    %888 = vrot.lane.b32.xlu0 %v167, 40
    %v889 = vpop.permute.xlu0 %888
    %890 = vrot.lane.b32.xlu0 %v172, 40
    %v891 = vpop.permute.xlu0 %890
    %v895 = vsel %vm265, %v886, 0
    %v898 = vsel %vm265, %v887, 0
    %900 = vmatprep.subr.mxu0 0.0
    %901 = vmatpush1.msra.mxu0 0.0
    %902 = vmatprep.subr.mxu0 0.0
    %903 = vmatpush1.msra.mxu0 0.0
    %904 = vmatprep.subr.mxu0 0.0
    %905 = vmatpush1.msra.mxu0 0.0
    %906 = vmatprep.subr.mxu0 0.0
    %907 = vmatpush1.msra.mxu0 0.0
    %908 = vmatprep.subr.mxu0 0.0
    %909 = vmatpush1.msra.mxu0 0.0
    %910 = vmatprep.subr.mxu0 0.0
    %911 = vmatpush1.msra.mxu0 0.0
    %912 = vmatprep.subr.mxu0 0.0
    %913 = vmatpush1.msra.mxu0 0.0
    %914 = vmatprep.subr.mxu0 0.0
    %915 = vmatpush1.msra.mxu0 0.0
    %916 = vmatprep.subr.mxu0 0.0
    %917 = vmatpush1.msra.mxu0 0.0
    %918 = vmatprep.subr.mxu0 0.0
    %919 = vmatpush1.msra.mxu0 0.0
    %920 = vmatprep.subr.mxu0 0.0
    %921 = vmatpush1.msra.mxu0 0.0
    %922 = vmatprep.subr.mxu0 0.0
    %923 = vmatpush1.msra.mxu0 0.0
    %924 = vmatprep.subr.mxu0 0.0
    %925 = vmatpush1.msra.mxu0 0.0
    %926 = vmatprep.subr.mxu0 0.0
    %927 = vmatpush1.msra.mxu0 0.0
    %928 = vmatprep.subr.mxu0 0.0
    %929 = vmatpush1.msra.mxu0 %v891
    %930 = vmatprep.subr.mxu0 0.0
    %931 = vmatpush1.msra.mxu0 %v889
    %932 = vmatprep.subr.mxu0 0.0
    %933 = vmatpush2.msra.mxu0 0.0
    %934 = vmatprep.subr.mxu0 0.0
    %935 = vmatpush2.msra.mxu0 0.0
    %936 = vmatprep.subr.mxu0 0.0
    %937 = vmatpush2.msra.mxu0 0.0
    %938 = vmatprep.subr.mxu0 0.0
    %939 = vmatpush2.msra.mxu0 0.0
    %940 = vmatprep.subr.mxu0 0.0
    %941 = vmatpush2.msra.mxu0 0.0
    %942 = vmatprep.subr.mxu0 0.0
    %943 = vmatpush2.msra.mxu0 0.0
    %944 = vmatprep.subr.mxu0 0.0
    %945 = vmatpush2.msra.mxu0 0.0
    %946 = vmatprep.subr.mxu0 0.0
    %947 = vmatpush2.msra.mxu0 0.0
    %948 = vmatprep.subr.mxu0 0.0
    %949 = vmatpush2.msra.mxu0 0.0
    %950 = vmatprep.subr.mxu0 0.0
    %951 = vmatpush2.msra.mxu0 0.0
    %952 = vmatprep.subr.mxu0 0.0
    %953 = vmatpush2.msra.mxu0 0.0
    %954 = vmatprep.subr.mxu0 0.0
    %955 = vmatpush2.msra.mxu0 0.0
    %956 = vmatprep.subr.mxu0 0.0
    %957 = vmatpush2.msra.mxu0 0.0
    %958 = vmatprep.subr.mxu0 0.0
    %959 = vmatpush2.msra.mxu0 0.0
    %960 = vmatprep.subr.mxu0 0.0
    %961 = vmatpush2.msra.mxu0 0.0
    %962 = vmatprep.subr.mxu0 0.0
    %963 = vmatpush2.msra.mxu0 0.0
    %964 = vmatprep.mubr.f32.mxu0 0.0
    %965 = vmatmul.mubr.f32.gmra.mxu0 %v895
    %v966 = vpop.f32.mrf.mxu0
    %v967 = vadd.f32 0.0, %v966
    %v968 = vpop.f32.mrf.mxu0
    %969 = vmatprep.mubr.f32.mxu0 0.0
    %970 = vmatmul.mubr.f32.gmra.mxu0 %v898
    %v971 = vpop.f32.mrf.mxu0
    %v972 = vadd.f32 0.0, %v971
    %v973 = vpop.f32.mrf.mxu0
    %974 = vdwg.mxu0
    %977 = vrot.lane.b32.xlu0 %v567, 8
    %v978 = vpop.permute.xlu0 %977
    %979 = vrot.lane.b32.xlu0 %v572, 8
    %v980 = vpop.permute.xlu0 %979
    %985 = vrot.lane.b32.xlu0 %v767, 16
    %v986 = vpop.permute.xlu0 %985
    %987 = vrot.lane.b32.xlu0 %v772, 16
    %v988 = vpop.permute.xlu0 %987
    %993 = vrot.lane.b32.xlu0 %v967, 24
    %v994 = vpop.permute.xlu0 %993
    %995 = vrot.lane.b32.xlu0 %v972, 24
    %v996 = vpop.permute.xlu0 %995
    %v999 = vsel %vm181, %v367, %v978
    %v1000 = vsel %vm181, %v372, %v980
    %v1001 = vsel %vm265, %v999, %v986
    %v1002 = vsel %vm265, %v1000, %v988
    %vm1003 = vcmask 195584
    %v1004 = vsel %vm1003, %v1001, %v994
    %v1005 = vsel %vm1003, %v1002, %v996
    %v1006 = vlaneseq
    %v1007 = vshrl.u32 %v1006, 7
    %v1008 = vsub.s32 0, %v1007
    %v1009 = vrot.slane %v92, %v1008
    %v1011 = vsel %vm93, %v1004, 0
    %v1014 = vsel %vm93, %v1005, 0
    %1016 = vmatprep.subr.mxu0 0.0
    %1017 = vmatpush1.msra.mxu0 0.0
    %1018 = vmatprep.subr.mxu0 0.0
    %1019 = vmatpush1.msra.mxu0 0.0
    %1020 = vmatprep.subr.mxu0 0.0
    %1021 = vmatpush1.msra.mxu0 0.0
    %1022 = vmatprep.subr.mxu0 0.0
    %1023 = vmatpush1.msra.mxu0 0.0
    %1024 = vmatprep.subr.mxu0 0.0
    %1025 = vmatpush1.msra.mxu0 0.0
    %1026 = vmatprep.subr.mxu0 0.0
    %1027 = vmatpush1.msra.mxu0 0.0
    %1028 = vmatprep.subr.mxu0 0.0
    %1029 = vmatpush1.msra.mxu0 0.0
    %1030 = vmatprep.subr.mxu0 0.0
    %1031 = vmatpush1.msra.mxu0 0.0
    %1032 = vmatprep.subr.mxu0 0.0
    %1033 = vmatpush1.msra.mxu0 0.0
    %1034 = vmatprep.subr.mxu0 0.0
    %1035 = vmatpush1.msra.mxu0 0.0
    %1036 = vmatprep.subr.mxu0 0.0
    %1037 = vmatpush1.msra.mxu0 0.0
    %1038 = vmatprep.subr.mxu0 0.0
    %1039 = vmatpush1.msra.mxu0 0.0
    %1040 = vmatprep.subr.mxu0 0.0
    %1041 = vmatpush1.msra.mxu0 %v79
    %1042 = vmatprep.subr.mxu0 0.0
    %1043 = vmatpush1.msra.mxu0 %v78
    %1044 = vmatprep.subr.mxu0 0.0
    %1045 = vmatpush1.msra.mxu0 %v77
    %1046 = vmatprep.subr.mxu0 0.0
    %1047 = vmatpush1.msra.mxu0 %v76
    %1048 = vmatprep.subr.mxu0 0.0
    %1049 = vmatpush2.msra.mxu0 0.0
    %1050 = vmatprep.subr.mxu0 0.0
    %1051 = vmatpush2.msra.mxu0 0.0
    %1052 = vmatprep.subr.mxu0 0.0
    %1053 = vmatpush2.msra.mxu0 0.0
    %1054 = vmatprep.subr.mxu0 0.0
    %1055 = vmatpush2.msra.mxu0 0.0
    %1056 = vmatprep.subr.mxu0 0.0
    %1057 = vmatpush2.msra.mxu0 0.0
    %1058 = vmatprep.subr.mxu0 0.0
    %1059 = vmatpush2.msra.mxu0 0.0
    %1060 = vmatprep.subr.mxu0 0.0
    %1061 = vmatpush2.msra.mxu0 0.0
    %1062 = vmatprep.subr.mxu0 0.0
    %1063 = vmatpush2.msra.mxu0 0.0
    %1064 = vmatprep.subr.mxu0 0.0
    %1065 = vmatpush2.msra.mxu0 0.0
    %1066 = vmatprep.subr.mxu0 0.0
    %1067 = vmatpush2.msra.mxu0 0.0
    %1068 = vmatprep.subr.mxu0 0.0
    %1069 = vmatpush2.msra.mxu0 0.0
    %1070 = vmatprep.subr.mxu0 0.0
    %1071 = vmatpush2.msra.mxu0 0.0
    %1072 = vmatprep.subr.mxu0 0.0
    %1073 = vmatpush2.msra.mxu0 0.0
    %1074 = vmatprep.subr.mxu0 0.0
    %1075 = vmatpush2.msra.mxu0 0.0
    %1076 = vmatprep.subr.mxu0 0.0
    %1077 = vmatpush2.msra.mxu0 0.0
    %1078 = vmatprep.subr.mxu0 0.0
    %1079 = vmatpush2.msra.mxu0 0.0
    %1080 = vmatprep.mubr.f32.mxu0 0.0
    %1081 = vmatmul.mubr.f32.gmra.mxu0 %v1011
    %v1082 = vpop.f32.mrf.mxu0
    %v1083 = vadd.f32 %v1009, %v1082
    %v1084 = vpop.f32.mrf.mxu0
    %1085 = vmatprep.mubr.f32.mxu0 0.0
    %1086 = vmatmul.mubr.f32.gmra.mxu0 %v1014
    %v1087 = vpop.f32.mrf.mxu0
    %v1088 = vadd.f32 %v1009, %v1087
    %v1089 = vpop.f32.mrf.mxu0
    %1090 = vdwg.mxu0
    %v1091 = vadd.f32 %v1083, %v68
    %v1092 = vadd.f32 %v1088, %v69
    %v1093 = vsel %vm93, %v1091, 0.0
    %1094 = vadd.xlane.f32.xlu0 %v1093
    %v1095 = vpop.xlane.xlu0 %1094
    %v1096 = vsel %vm93, %v1092, 0.0
    %1097 = vadd.xlane.f32.xlu0 %v1096
    %v1098 = vpop.xlane.xlu0 %1097
    %v1099 = vrcp.pop 32.0
    %v1100 = vmul.f32 %v1095, %v1099
    %v1101 = vmul.f32 %v1098, %v1099
    %v1102 = vsub.f32 %v1091, %v1100
    %v1103 = vsub.f32 %v1092, %v1101
    %v1104 = vmul.f32 %v1102, %v1102
    %v1105 = vmul.f32 %v1103, %v1103
    %v1106 = vsel %vm93, %v1104, 0.0
    %1107 = vadd.xlane.f32.xlu0 %v1106
    %v1108 = vpop.xlane.xlu0 %1107
    %v1109 = vsel %vm93, %v1105, 0.0
    %1110 = vadd.xlane.f32.xlu0 %v1109
    %v1111 = vpop.xlane.xlu0 %1110
    %v1112 = vmul.f32 %v1108, %v1099
    %v1113 = vmul.f32 %v1111, %v1099
    %v1114 = vadd.f32 %v1112, 1e-05
    %v1115 = vadd.f32 %v1113, 1e-05
    %v1116 = vrsqrt.pop %v1114
    %v1117 = vrsqrt.pop %v1115
    %v1118 = vmul.f32 %v1102, %v1116
    %v1119 = vmul.f32 %v1103, %v1117
    %v1120 = vlaneseq
    %v1121 = vshrl.u32 %v1120, 7
    %v1122 = vsub.s32 1, %v1121
    %v1123 = vrot.slane %v92, %v1122
    %v1124 = vmul.f32 %v1118, %v1123
    %v1125 = vmul.f32 %v1119, %v1123
    %v1126 = vlaneseq
    %v1127 = vshrl.u32 %v1126, 7
    %v1128 = vsub.s32 2, %v1127
    %v1129 = vrot.slane %v92, %v1128
    %v1130 = vadd.f32 %v1124, %v1129
    %v1131 = vadd.f32 %v1125, %v1129
    %v1132 = vlaneseq
    %v1133 = vshrl.u32 %v1132, 7
    %v1134 = vsub.s32 3, %v1133
    %v1135 = vrot.slane %v92, %v1134
    %v1137 = vsel %vm93, %v1130, 0
    %v1140 = vsel %vm93, %v1131, 0
    %1142 = vmatprep.subr.mxu0 0.0
    %1143 = vmatpush1.msra.mxu0 0.0
    %1144 = vmatprep.subr.mxu0 0.0
    %1145 = vmatpush1.msra.mxu0 0.0
    %1146 = vmatprep.subr.mxu0 0.0
    %1147 = vmatpush1.msra.mxu0 0.0
    %1148 = vmatprep.subr.mxu0 0.0
    %1149 = vmatpush1.msra.mxu0 0.0
    %1150 = vmatprep.subr.mxu0 0.0
    %1151 = vmatpush1.msra.mxu0 0.0
    %1152 = vmatprep.subr.mxu0 0.0
    %1153 = vmatpush1.msra.mxu0 0.0
    %1154 = vmatprep.subr.mxu0 0.0
    %1155 = vmatpush1.msra.mxu0 0.0
    %1156 = vmatprep.subr.mxu0 0.0
    %1157 = vmatpush1.msra.mxu0 0.0
    %1158 = vmatprep.subr.mxu0 0.0
    %1159 = vmatpush1.msra.mxu0 0.0
    %1160 = vmatprep.subr.mxu0 0.0
    %1161 = vmatpush1.msra.mxu0 0.0
    %1162 = vmatprep.subr.mxu0 0.0
    %1163 = vmatpush1.msra.mxu0 0.0
    %1164 = vmatprep.subr.mxu0 0.0
    %1165 = vmatpush1.msra.mxu0 0.0
    %1166 = vmatprep.subr.mxu0 0.0
    %1167 = vmatpush1.msra.mxu0 %v83
    %1168 = vmatprep.subr.mxu0 0.0
    %1169 = vmatpush1.msra.mxu0 %v82
    %1170 = vmatprep.subr.mxu0 0.0
    %1171 = vmatpush1.msra.mxu0 %v81
    %1172 = vmatprep.subr.mxu0 0.0
    %1173 = vmatpush1.msra.mxu0 %v80
    %1174 = vmatprep.subr.mxu0 0.0
    %1175 = vmatpush2.msra.mxu0 0.0
    %1176 = vmatprep.subr.mxu0 0.0
    %1177 = vmatpush2.msra.mxu0 0.0
    %1178 = vmatprep.subr.mxu0 0.0
    %1179 = vmatpush2.msra.mxu0 0.0
    %1180 = vmatprep.subr.mxu0 0.0
    %1181 = vmatpush2.msra.mxu0 0.0
    %1182 = vmatprep.subr.mxu0 0.0
    %1183 = vmatpush2.msra.mxu0 0.0
    %1184 = vmatprep.subr.mxu0 0.0
    %1185 = vmatpush2.msra.mxu0 0.0
    %1186 = vmatprep.subr.mxu0 0.0
    %1187 = vmatpush2.msra.mxu0 0.0
    %1188 = vmatprep.subr.mxu0 0.0
    %1189 = vmatpush2.msra.mxu0 0.0
    %1190 = vmatprep.subr.mxu0 0.0
    %1191 = vmatpush2.msra.mxu0 0.0
    %1192 = vmatprep.subr.mxu0 0.0
    %1193 = vmatpush2.msra.mxu0 0.0
    %1194 = vmatprep.subr.mxu0 0.0
    %1195 = vmatpush2.msra.mxu0 0.0
    %1196 = vmatprep.subr.mxu0 0.0
    %1197 = vmatpush2.msra.mxu0 0.0
    %1198 = vmatprep.subr.mxu0 0.0
    %1199 = vmatpush2.msra.mxu0 0.0
    %1200 = vmatprep.subr.mxu0 0.0
    %1201 = vmatpush2.msra.mxu0 0.0
    %1202 = vmatprep.subr.mxu0 0.0
    %1203 = vmatpush2.msra.mxu0 0.0
    %1204 = vmatprep.subr.mxu0 0.0
    %1205 = vmatpush2.msra.mxu0 0.0
    %1206 = vmatprep.mubr.f32.mxu0 0.0
    %1207 = vmatmul.mubr.f32.gmra.mxu0 %v1137
    %v1208 = vpop.f32.mrf.mxu0
    %v1209 = vadd.f32 %v1135, %v1208
    %v1210 = vpop.f32.mrf.mxu0
    %1211 = vmatprep.mubr.f32.mxu0 0.0
    %1212 = vmatmul.mubr.f32.gmra.mxu0 %v1140
    %v1213 = vpop.f32.mrf.mxu0
    %v1214 = vadd.f32 %v1135, %v1213
    %v1215 = vpop.f32.mrf.mxu0
    %1216 = vdwg.mxu0
    %v1217 = vmax.f32 %v1209, 0.0
    %v1218 = vmax.f32 %v1214, 0.0
    %v1219 = vlaneseq
    %v1220 = vshrl.u32 %v1219, 7
    %v1221 = vsub.s32 4, %v1220
    %v1222 = vrot.slane %v92, %v1221
    %vm1223 = vcmask 523264
    %v1225 = vsel %vm1223, %v1217, 0
    %v1228 = vsel %vm1223, %v1218, 0
    %1230 = vmatprep.subr.mxu0 0.0
    %1231 = vmatpush1.msra.mxu0 0.0
    %1232 = vmatprep.subr.mxu0 0.0
    %1233 = vmatpush1.msra.mxu0 0.0
    %1234 = vmatprep.subr.mxu0 0.0
    %1235 = vmatpush1.msra.mxu0 0.0
    %1236 = vmatprep.subr.mxu0 0.0
    %1237 = vmatpush1.msra.mxu0 0.0
    %1238 = vmatprep.subr.mxu0 0.0
    %1239 = vmatpush1.msra.mxu0 0.0
    %1240 = vmatprep.subr.mxu0 0.0
    %1241 = vmatpush1.msra.mxu0 0.0
    %1242 = vmatprep.subr.mxu0 0.0
    %1243 = vmatpush1.msra.mxu0 0.0
    %1244 = vmatprep.subr.mxu0 0.0
    %1245 = vmatpush1.msra.mxu0 0.0
    %1246 = vmatprep.subr.mxu0 0.0
    %1247 = vmatpush1.msra.mxu0 %v91
    %1248 = vmatprep.subr.mxu0 0.0
    %1249 = vmatpush1.msra.mxu0 %v90
    %1250 = vmatprep.subr.mxu0 0.0
    %1251 = vmatpush1.msra.mxu0 %v89
    %1252 = vmatprep.subr.mxu0 0.0
    %1253 = vmatpush1.msra.mxu0 %v88
    %1254 = vmatprep.subr.mxu0 0.0
    %1255 = vmatpush1.msra.mxu0 %v87
    %1256 = vmatprep.subr.mxu0 0.0
    %1257 = vmatpush1.msra.mxu0 %v86
    %1258 = vmatprep.subr.mxu0 0.0
    %1259 = vmatpush1.msra.mxu0 %v85
    %1260 = vmatprep.subr.mxu0 0.0
    %1261 = vmatpush1.msra.mxu0 %v84
    %1262 = vmatprep.subr.mxu0 0.0
    %1263 = vmatpush2.msra.mxu0 0.0
    %1264 = vmatprep.subr.mxu0 0.0
    %1265 = vmatpush2.msra.mxu0 0.0
    %1266 = vmatprep.subr.mxu0 0.0
    %1267 = vmatpush2.msra.mxu0 0.0
    %1268 = vmatprep.subr.mxu0 0.0
    %1269 = vmatpush2.msra.mxu0 0.0
    %1270 = vmatprep.subr.mxu0 0.0
    %1271 = vmatpush2.msra.mxu0 0.0
    %1272 = vmatprep.subr.mxu0 0.0
    %1273 = vmatpush2.msra.mxu0 0.0
    %1274 = vmatprep.subr.mxu0 0.0
    %1275 = vmatpush2.msra.mxu0 0.0
    %1276 = vmatprep.subr.mxu0 0.0
    %1277 = vmatpush2.msra.mxu0 0.0
    %1278 = vmatprep.subr.mxu0 0.0
    %1279 = vmatpush2.msra.mxu0 0.0
    %1280 = vmatprep.subr.mxu0 0.0
    %1281 = vmatpush2.msra.mxu0 0.0
    %1282 = vmatprep.subr.mxu0 0.0
    %1283 = vmatpush2.msra.mxu0 0.0
    %1284 = vmatprep.subr.mxu0 0.0
    %1285 = vmatpush2.msra.mxu0 0.0
    %1286 = vmatprep.subr.mxu0 0.0
    %1287 = vmatpush2.msra.mxu0 0.0
    %1288 = vmatprep.subr.mxu0 0.0
    %1289 = vmatpush2.msra.mxu0 0.0
    %1290 = vmatprep.subr.mxu0 0.0
    %1291 = vmatpush2.msra.mxu0 0.0
    %1292 = vmatprep.subr.mxu0 0.0
    %1293 = vmatpush2.msra.mxu0 0.0
    %1294 = vmatprep.mubr.f32.mxu0 0.0
    %1295 = vmatmul.mubr.f32.gmra.mxu0 %v1225
    %v1296 = vpop.f32.mrf.mxu0
    %v1297 = vadd.f32 %v1222, %v1296
    %v1298 = vpop.f32.mrf.mxu0
    %1299 = vmatprep.mubr.f32.mxu0 0.0
    %1300 = vmatmul.mubr.f32.gmra.mxu0 %v1228
    %v1301 = vpop.f32.mrf.mxu0
    %v1302 = vadd.f32 %v1222, %v1301
    %v1303 = vpop.f32.mrf.mxu0
    %1304 = vdwg.mxu0
    %v1305 = vadd.f32 %v1297, %v1130
    %v1306 = vadd.f32 %v1302, %v1131
    %v1307 = vsel %vm93, %v1305, 0.0
    %1308 = vadd.xlane.f32.xlu0 %v1307
    %v1309 = vpop.xlane.xlu0 %1308
    %v1310 = vsel %vm93, %v1306, 0.0
    %1311 = vadd.xlane.f32.xlu0 %v1310
    %v1312 = vpop.xlane.xlu0 %1311
    %v1313 = vmul.f32 %v1309, %v1099
    %v1314 = vmul.f32 %v1312, %v1099
    %v1315 = vsub.f32 %v1305, %v1313
    %v1316 = vsub.f32 %v1306, %v1314
    %v1317 = vmul.f32 %v1315, %v1315
    %v1318 = vmul.f32 %v1316, %v1316
    %v1319 = vsel %vm93, %v1317, 0.0
    %1320 = vadd.xlane.f32.xlu0 %v1319
    %v1321 = vpop.xlane.xlu0 %1320
    %v1322 = vsel %vm93, %v1318, 0.0
    %1323 = vadd.xlane.f32.xlu0 %v1322
    %v1324 = vpop.xlane.xlu0 %1323
    %v1325 = vmul.f32 %v1321, %v1099
    %v1326 = vmul.f32 %v1324, %v1099
    %v1327 = vadd.f32 %v1325, 1e-05
    %v1328 = vadd.f32 %v1326, 1e-05
    %v1329 = vrsqrt.pop %v1327
    %v1330 = vrsqrt.pop %v1328
    %v1331 = vmul.f32 %v1315, %v1329
    %v1332 = vmul.f32 %v1316, %v1330
    %v1333 = vlaneseq
    %v1334 = vshrl.u32 %v1333, 7
    %v1335 = vsub.s32 5, %v1334
    %v1336 = vrot.slane %v92, %v1335
    %v1337 = vmul.f32 %v1331, %v1336
    %v1338 = vmul.f32 %v1332, %v1336
    %v1339 = vlaneseq
    %v1340 = vshrl.u32 %v1339, 7
    %v1341 = vsub.s32 6, %v1340
    %v1342 = vrot.slane %v92, %v1341
    %v1343 = vadd.f32 %v1337, %v1342
    %v1344 = vadd.f32 %v1338, %v1342
    %s1345 = scalar_lea.vmem %s2, 32
    %v1346 = vld [vmem:[%s1345] sm:$0xff]
    %v1347 = vld [vmem:[%s1345 + $0x8] sm:$0xff]
    %v1348 = vld [vmem:[%s1345 + $0x10] sm:$0xff]
    %v1349 = vld [vmem:[%s1345 + $0x18] sm:$0xff]
    %s1350 = scalar_lea.vmem %s3, 32
    %v1351 = vld [vmem:[%s1350] sm:$0xff]
    %v1352 = vld [vmem:[%s1350 + $0x8] sm:$0xff]
    %v1353 = vld [vmem:[%s1350 + $0x10] sm:$0xff]
    %v1354 = vld [vmem:[%s1350 + $0x18] sm:$0xff]
    %s1355 = scalar_lea.vmem %s4, 32
    %v1356 = vld [vmem:[%s1355] sm:$0xff]
    %v1357 = vld [vmem:[%s1355 + $0x8] sm:$0xff]
    %v1358 = vld [vmem:[%s1355 + $0x10] sm:$0xff]
    %v1359 = vld [vmem:[%s1355 + $0x18] sm:$0xff]
    %s1360 = scalar_lea.vmem %s5, 64
    %v1361 = vld [vmem:[%s1360] sm:$0xff]
    %v1362 = vld [vmem:[%s1360 + $0x8] sm:$0xff]
    %v1363 = vld [vmem:[%s1360 + $0x10] sm:$0xff]
    %v1364 = vld [vmem:[%s1360 + $0x18] sm:$0xff]
    %v1365 = vld [vmem:[%s1360 + $0x20] sm:$0xff]
    %v1366 = vld [vmem:[%s1360 + $0x28] sm:$0xff]
    %v1367 = vld [vmem:[%s1360 + $0x30] sm:$0xff]
    %v1368 = vld [vmem:[%s1360 + $0x38] sm:$0xff]
    %s1369 = scalar_lea.vmem [#allocation7], 8
    %v1370 = vld [vmem:[%s1369] sm:$0xff]
    %v1372 = vsel %vm93, %v1343, 0
    %v1375 = vsel %vm93, %v1344, 0
    %1377 = vmatprep.subr.mxu0 0.0
    %1378 = vmatpush1.msra.mxu0 0.0
    %1379 = vmatprep.subr.mxu0 0.0
    %1380 = vmatpush1.msra.mxu0 0.0
    %1381 = vmatprep.subr.mxu0 0.0
    %1382 = vmatpush1.msra.mxu0 0.0
    %1383 = vmatprep.subr.mxu0 0.0
    %1384 = vmatpush1.msra.mxu0 0.0
    %1385 = vmatprep.subr.mxu0 0.0
    %1386 = vmatpush1.msra.mxu0 0.0
    %1387 = vmatprep.subr.mxu0 0.0
    %1388 = vmatpush1.msra.mxu0 0.0
    %1389 = vmatprep.subr.mxu0 0.0
    %1390 = vmatpush1.msra.mxu0 0.0
    %1391 = vmatprep.subr.mxu0 0.0
    %1392 = vmatpush1.msra.mxu0 0.0
    %1393 = vmatprep.subr.mxu0 0.0
    %1394 = vmatpush1.msra.mxu0 0.0
    %1395 = vmatprep.subr.mxu0 0.0
    %1396 = vmatpush1.msra.mxu0 0.0
    %1397 = vmatprep.subr.mxu0 0.0
    %1398 = vmatpush1.msra.mxu0 0.0
    %1399 = vmatprep.subr.mxu0 0.0
    %1400 = vmatpush1.msra.mxu0 0.0
    %1401 = vmatprep.subr.mxu0 0.0
    %1402 = vmatpush1.msra.mxu0 %v1349
    %1403 = vmatprep.subr.mxu0 0.0
    %1404 = vmatpush1.msra.mxu0 %v1348
    %1405 = vmatprep.subr.mxu0 0.0
    %1406 = vmatpush1.msra.mxu0 %v1347
    %1407 = vmatprep.subr.mxu0 0.0
    %1408 = vmatpush1.msra.mxu0 %v1346
    %1409 = vmatprep.subr.mxu0 0.0
    %1410 = vmatpush2.msra.mxu0 0.0
    %1411 = vmatprep.subr.mxu0 0.0
    %1412 = vmatpush2.msra.mxu0 0.0
    %1413 = vmatprep.subr.mxu0 0.0
    %1414 = vmatpush2.msra.mxu0 0.0
    %1415 = vmatprep.subr.mxu0 0.0
    %1416 = vmatpush2.msra.mxu0 0.0
    %1417 = vmatprep.subr.mxu0 0.0
    %1418 = vmatpush2.msra.mxu0 0.0
    %1419 = vmatprep.subr.mxu0 0.0
    %1420 = vmatpush2.msra.mxu0 0.0
    %1421 = vmatprep.subr.mxu0 0.0
    %1422 = vmatpush2.msra.mxu0 0.0
    %1423 = vmatprep.subr.mxu0 0.0
    %1424 = vmatpush2.msra.mxu0 0.0
    %1425 = vmatprep.subr.mxu0 0.0
    %1426 = vmatpush2.msra.mxu0 0.0
    %1427 = vmatprep.subr.mxu0 0.0
    %1428 = vmatpush2.msra.mxu0 0.0
    %1429 = vmatprep.subr.mxu0 0.0
    %1430 = vmatpush2.msra.mxu0 0.0
    %1431 = vmatprep.subr.mxu0 0.0
    %1432 = vmatpush2.msra.mxu0 0.0
    %1433 = vmatprep.subr.mxu0 0.0
    %1434 = vmatpush2.msra.mxu0 0.0
    %1435 = vmatprep.subr.mxu0 0.0
    %1436 = vmatpush2.msra.mxu0 0.0
    %1437 = vmatprep.subr.mxu0 0.0
    %1438 = vmatpush2.msra.mxu0 0.0
    %1439 = vmatprep.subr.mxu0 0.0
    %1440 = vmatpush2.msra.mxu0 0.0
    %1441 = vmatprep.mubr.f32.mxu0 0.0
    %1442 = vmatmul.mubr.f32.gmra.mxu0 %v1372
    %v1443 = vpop.f32.mrf.mxu0
    %v1444 = vadd.f32 0.0, %v1443
    %v1445 = vpop.f32.mrf.mxu0
    %1446 = vmatprep.mubr.f32.mxu0 0.0
    %1447 = vmatmul.mubr.f32.gmra.mxu0 %v1375
    %v1448 = vpop.f32.mrf.mxu0
    %v1449 = vadd.f32 0.0, %v1448
    %v1450 = vpop.f32.mrf.mxu0
    %1451 = vdwg.mxu0
    %1454 = vrot.lane.b32.xlu0 %v1444, 96
    %v1455 = vpop.permute.xlu0 %1454
    %1456 = vrot.lane.b32.xlu0 %v1449, 96
    %v1457 = vpop.permute.xlu0 %1456
    %v1458 = vsel %vm181, %v1444, 0
    %v1460 = vsel %vm181, %v1449, 0
    %v1462 = vsel %vm181, %v1455, 0
    %v1464 = vsel %vm181, %v1457, 0
    %1466 = vmatprep.subr.mxu0 0.0
    %1467 = vmatpush1.xpose.msra.mxu0 0.0
    %1468 = vmatprep.subr.mxu0 0.0
    %1469 = vmatpush1.xpose.msra.mxu0 0.0
    %1470 = vmatprep.subr.mxu0 0.0
    %1471 = vmatpush1.xpose.msra.mxu0 0.0
    %1472 = vmatprep.subr.mxu0 0.0
    %1473 = vmatpush1.xpose.msra.mxu0 0.0
    %1474 = vmatprep.subr.mxu0 0.0
    %1475 = vmatpush1.xpose.msra.mxu0 0.0
    %1476 = vmatprep.subr.mxu0 0.0
    %1477 = vmatpush1.xpose.msra.mxu0 0.0
    %1478 = vmatprep.subr.mxu0 0.0
    %1479 = vmatpush1.xpose.msra.mxu0 0.0
    %1480 = vmatprep.subr.mxu0 0.0
    %1481 = vmatpush1.xpose.msra.mxu0 0.0
    %1482 = vmatprep.subr.mxu0 0.0
    %1483 = vmatpush1.xpose.msra.mxu0 0.0
    %1484 = vmatprep.subr.mxu0 0.0
    %1485 = vmatpush1.xpose.msra.mxu0 0.0
    %1486 = vmatprep.subr.mxu0 0.0
    %1487 = vmatpush1.xpose.msra.mxu0 0.0
    %1488 = vmatprep.subr.mxu0 0.0
    %1489 = vmatpush1.xpose.msra.mxu0 0.0
    %1490 = vmatprep.subr.mxu0 0.0
    %1491 = vmatpush1.xpose.msra.mxu0 0.0
    %1492 = vmatprep.subr.mxu0 0.0
    %1493 = vmatpush1.xpose.msra.mxu0 0.0
    %1494 = vmatprep.subr.mxu0 0.0
    %1495 = vmatpush1.xpose.msra.mxu0 %v1464
    %1496 = vmatprep.subr.mxu0 0.0
    %1497 = vmatpush1.xpose.msra.mxu0 %v1462
    %1498 = vmatprep.subr.mxu0 0.0
    %1499 = vmatpush2.xpose.msra.mxu0 0.0
    %1500 = vmatprep.subr.mxu0 0.0
    %1501 = vmatpush2.xpose.msra.mxu0 0.0
    %1502 = vmatprep.subr.mxu0 0.0
    %1503 = vmatpush2.xpose.msra.mxu0 0.0
    %1504 = vmatprep.subr.mxu0 0.0
    %1505 = vmatpush2.xpose.msra.mxu0 0.0
    %1506 = vmatprep.subr.mxu0 0.0
    %1507 = vmatpush2.xpose.msra.mxu0 0.0
    %1508 = vmatprep.subr.mxu0 0.0
    %1509 = vmatpush2.xpose.msra.mxu0 0.0
    %1510 = vmatprep.subr.mxu0 0.0
    %1511 = vmatpush2.xpose.msra.mxu0 0.0
    %1512 = vmatprep.subr.mxu0 0.0
    %1513 = vmatpush2.xpose.msra.mxu0 0.0
    %1514 = vmatprep.subr.mxu0 0.0
    %1515 = vmatpush2.xpose.msra.mxu0 0.0
    %1516 = vmatprep.subr.mxu0 0.0
    %1517 = vmatpush2.xpose.msra.mxu0 0.0
    %1518 = vmatprep.subr.mxu0 0.0
    %1519 = vmatpush2.xpose.msra.mxu0 0.0
    %1520 = vmatprep.subr.mxu0 0.0
    %1521 = vmatpush2.xpose.msra.mxu0 0.0
    %1522 = vmatprep.subr.mxu0 0.0
    %1523 = vmatpush2.xpose.msra.mxu0 0.0
    %1524 = vmatprep.subr.mxu0 0.0
    %1525 = vmatpush2.xpose.msra.mxu0 0.0
    %1526 = vmatprep.subr.mxu0 0.0
    %1527 = vmatpush2.xpose.msra.mxu0 0.0
    %1528 = vmatprep.subr.mxu0 0.0
    %1529 = vmatpush2.xpose.msra.mxu0 0.0
    %1530 = vmatprep.mubr.f32.mxu0 0.0
    %1531 = vmatmul.mubr.f32.gmra.mxu0 %v1458
    %v1532 = vpop.f32.mrf.mxu0
    %v1533 = vadd.f32 %v70, %v1532
    %v1534 = vpop.f32.mrf.mxu0
    %1535 = vmatprep.mubr.f32.mxu0 0.0
    %1536 = vmatmul.mubr.f32.gmra.mxu0 %v1460
    %v1537 = vpop.f32.mrf.mxu0
    %v1538 = vadd.f32 %v71, %v1537
    %v1539 = vpop.f32.mrf.mxu0
    %1540 = vdwg.mxu0
    %v1541 = vsel %vm265, %v1533, -inf
    %1542 = vmax.xlane.f32.xlu0 %v1541
    %v1543 = vpop.xlane.xlu0 %1542
    %v1544 = vsel %vm265, %v1538, -inf
    %1545 = vmax.xlane.f32.xlu0 %v1544
    %v1546 = vpop.xlane.xlu0 %1545
    %v1547 = vsub.f32 %v1533, %v1543
    %v1548 = vsub.f32 %v1538, %v1546
    %v1549 = vmul.f32 %v1547, 1.442695
    %v1550 = vpow.pop %v1549
    %v1551 = vmul.f32 %v1548, 1.442695
    %v1552 = vpow.pop %v1551
    %v1553 = vsel %vm265, %v1550, 0.0
    %1554 = vadd.xlane.f32.xlu0 %v1553
    %v1555 = vpop.xlane.xlu0 %1554
    %v1556 = vsel %vm265, %v1552, 0.0
    %1557 = vadd.xlane.f32.xlu0 %v1556
    %v1558 = vpop.xlane.xlu0 %1557
    %v1559 = vrcp.pop %v1555
    %v1560 = vrcp.pop %v1558
    %v1561 = vmul.f32 %v1550, %v1559
    %v1562 = vmul.f32 %v1552, %v1560
    %1563 = vrot.lane.b32.xlu0 %v1444, 64
    %v1564 = vpop.permute.xlu0 %1563
    %1565 = vrot.lane.b32.xlu0 %v1449, 64
    %v1566 = vpop.permute.xlu0 %1565
    %v1570 = vsel %vm265, %v1561, 0
    %v1573 = vsel %vm265, %v1562, 0
    %1575 = vmatprep.subr.mxu0 0.0
    %1576 = vmatpush1.msra.mxu0 0.0
    %1577 = vmatprep.subr.mxu0 0.0
    %1578 = vmatpush1.msra.mxu0 0.0
    %1579 = vmatprep.subr.mxu0 0.0
    %1580 = vmatpush1.msra.mxu0 0.0
    %1581 = vmatprep.subr.mxu0 0.0
    %1582 = vmatpush1.msra.mxu0 0.0
    %1583 = vmatprep.subr.mxu0 0.0
    %1584 = vmatpush1.msra.mxu0 0.0
    %1585 = vmatprep.subr.mxu0 0.0
    %1586 = vmatpush1.msra.mxu0 0.0
    %1587 = vmatprep.subr.mxu0 0.0
    %1588 = vmatpush1.msra.mxu0 0.0
    %1589 = vmatprep.subr.mxu0 0.0
    %1590 = vmatpush1.msra.mxu0 0.0
    %1591 = vmatprep.subr.mxu0 0.0
    %1592 = vmatpush1.msra.mxu0 0.0
    %1593 = vmatprep.subr.mxu0 0.0
    %1594 = vmatpush1.msra.mxu0 0.0
    %1595 = vmatprep.subr.mxu0 0.0
    %1596 = vmatpush1.msra.mxu0 0.0
    %1597 = vmatprep.subr.mxu0 0.0
    %1598 = vmatpush1.msra.mxu0 0.0
    %1599 = vmatprep.subr.mxu0 0.0
    %1600 = vmatpush1.msra.mxu0 0.0
    %1601 = vmatprep.subr.mxu0 0.0
    %1602 = vmatpush1.msra.mxu0 0.0
    %1603 = vmatprep.subr.mxu0 0.0
    %1604 = vmatpush1.msra.mxu0 %v1566
    %1605 = vmatprep.subr.mxu0 0.0
    %1606 = vmatpush1.msra.mxu0 %v1564
    %1607 = vmatprep.subr.mxu0 0.0
    %1608 = vmatpush2.msra.mxu0 0.0
    %1609 = vmatprep.subr.mxu0 0.0
    %1610 = vmatpush2.msra.mxu0 0.0
    %1611 = vmatprep.subr.mxu0 0.0
    %1612 = vmatpush2.msra.mxu0 0.0
    %1613 = vmatprep.subr.mxu0 0.0
    %1614 = vmatpush2.msra.mxu0 0.0
    %1615 = vmatprep.subr.mxu0 0.0
    %1616 = vmatpush2.msra.mxu0 0.0
    %1617 = vmatprep.subr.mxu0 0.0
    %1618 = vmatpush2.msra.mxu0 0.0
    %1619 = vmatprep.subr.mxu0 0.0
    %1620 = vmatpush2.msra.mxu0 0.0
    %1621 = vmatprep.subr.mxu0 0.0
    %1622 = vmatpush2.msra.mxu0 0.0
    %1623 = vmatprep.subr.mxu0 0.0
    %1624 = vmatpush2.msra.mxu0 0.0
    %1625 = vmatprep.subr.mxu0 0.0
    %1626 = vmatpush2.msra.mxu0 0.0
    %1627 = vmatprep.subr.mxu0 0.0
    %1628 = vmatpush2.msra.mxu0 0.0
    %1629 = vmatprep.subr.mxu0 0.0
    %1630 = vmatpush2.msra.mxu0 0.0
    %1631 = vmatprep.subr.mxu0 0.0
    %1632 = vmatpush2.msra.mxu0 0.0
    %1633 = vmatprep.subr.mxu0 0.0
    %1634 = vmatpush2.msra.mxu0 0.0
    %1635 = vmatprep.subr.mxu0 0.0
    %1636 = vmatpush2.msra.mxu0 0.0
    %1637 = vmatprep.subr.mxu0 0.0
    %1638 = vmatpush2.msra.mxu0 0.0
    %1639 = vmatprep.mubr.f32.mxu0 0.0
    %1640 = vmatmul.mubr.f32.gmra.mxu0 %v1570
    %v1641 = vpop.f32.mrf.mxu0
    %v1642 = vadd.f32 0.0, %v1641
    %v1643 = vpop.f32.mrf.mxu0
    %1644 = vmatprep.mubr.f32.mxu0 0.0
    %1645 = vmatmul.mubr.f32.gmra.mxu0 %v1573
    %v1646 = vpop.f32.mrf.mxu0
    %v1647 = vadd.f32 0.0, %v1646
    %v1648 = vpop.f32.mrf.mxu0
    %1649 = vdwg.mxu0
    %1650 = vrot.lane.b32.xlu0 %v1444, 120
    %v1651 = vpop.permute.xlu0 %1650
    %1652 = vrot.lane.b32.xlu0 %v1449, 120
    %v1653 = vpop.permute.xlu0 %1652
    %1654 = vrot.lane.b32.xlu0 %v1444, 88
    %v1655 = vpop.permute.xlu0 %1654
    %1656 = vrot.lane.b32.xlu0 %v1449, 88
    %v1657 = vpop.permute.xlu0 %1656
    %v1658 = vsel %vm181, %v1651, 0
    %v1660 = vsel %vm181, %v1653, 0
    %v1662 = vsel %vm181, %v1655, 0
    %v1664 = vsel %vm181, %v1657, 0
    %1666 = vmatprep.subr.mxu0 0.0
    %1667 = vmatpush1.xpose.msra.mxu0 0.0
    %1668 = vmatprep.subr.mxu0 0.0
    %1669 = vmatpush1.xpose.msra.mxu0 0.0
    %1670 = vmatprep.subr.mxu0 0.0
    %1671 = vmatpush1.xpose.msra.mxu0 0.0
    %1672 = vmatprep.subr.mxu0 0.0
    %1673 = vmatpush1.xpose.msra.mxu0 0.0
    %1674 = vmatprep.subr.mxu0 0.0
    %1675 = vmatpush1.xpose.msra.mxu0 0.0
    %1676 = vmatprep.subr.mxu0 0.0
    %1677 = vmatpush1.xpose.msra.mxu0 0.0
    %1678 = vmatprep.subr.mxu0 0.0
    %1679 = vmatpush1.xpose.msra.mxu0 0.0
    %1680 = vmatprep.subr.mxu0 0.0
    %1681 = vmatpush1.xpose.msra.mxu0 0.0
    %1682 = vmatprep.subr.mxu0 0.0
    %1683 = vmatpush1.xpose.msra.mxu0 0.0
    %1684 = vmatprep.subr.mxu0 0.0
    %1685 = vmatpush1.xpose.msra.mxu0 0.0
    %1686 = vmatprep.subr.mxu0 0.0
    %1687 = vmatpush1.xpose.msra.mxu0 0.0
    %1688 = vmatprep.subr.mxu0 0.0
    %1689 = vmatpush1.xpose.msra.mxu0 0.0
    %1690 = vmatprep.subr.mxu0 0.0
    %1691 = vmatpush1.xpose.msra.mxu0 0.0
    %1692 = vmatprep.subr.mxu0 0.0
    %1693 = vmatpush1.xpose.msra.mxu0 0.0
    %1694 = vmatprep.subr.mxu0 0.0
    %1695 = vmatpush1.xpose.msra.mxu0 %v1664
    %1696 = vmatprep.subr.mxu0 0.0
    %1697 = vmatpush1.xpose.msra.mxu0 %v1662
    %1698 = vmatprep.subr.mxu0 0.0
    %1699 = vmatpush2.xpose.msra.mxu0 0.0
    %1700 = vmatprep.subr.mxu0 0.0
    %1701 = vmatpush2.xpose.msra.mxu0 0.0
    %1702 = vmatprep.subr.mxu0 0.0
    %1703 = vmatpush2.xpose.msra.mxu0 0.0
    %1704 = vmatprep.subr.mxu0 0.0
    %1705 = vmatpush2.xpose.msra.mxu0 0.0
    %1706 = vmatprep.subr.mxu0 0.0
    %1707 = vmatpush2.xpose.msra.mxu0 0.0
    %1708 = vmatprep.subr.mxu0 0.0
    %1709 = vmatpush2.xpose.msra.mxu0 0.0
    %1710 = vmatprep.subr.mxu0 0.0
    %1711 = vmatpush2.xpose.msra.mxu0 0.0
    %1712 = vmatprep.subr.mxu0 0.0
    %1713 = vmatpush2.xpose.msra.mxu0 0.0
    %1714 = vmatprep.subr.mxu0 0.0
    %1715 = vmatpush2.xpose.msra.mxu0 0.0
    %1716 = vmatprep.subr.mxu0 0.0
    %1717 = vmatpush2.xpose.msra.mxu0 0.0
    %1718 = vmatprep.subr.mxu0 0.0
    %1719 = vmatpush2.xpose.msra.mxu0 0.0
    %1720 = vmatprep.subr.mxu0 0.0
    %1721 = vmatpush2.xpose.msra.mxu0 0.0
    %1722 = vmatprep.subr.mxu0 0.0
    %1723 = vmatpush2.xpose.msra.mxu0 0.0
    %1724 = vmatprep.subr.mxu0 0.0
    %1725 = vmatpush2.xpose.msra.mxu0 0.0
    %1726 = vmatprep.subr.mxu0 0.0
    %1727 = vmatpush2.xpose.msra.mxu0 0.0
    %1728 = vmatprep.subr.mxu0 0.0
    %1729 = vmatpush2.xpose.msra.mxu0 0.0
    %1730 = vmatprep.mubr.f32.mxu0 0.0
    %1731 = vmatmul.mubr.f32.gmra.mxu0 %v1658
    %v1732 = vpop.f32.mrf.mxu0
    %v1733 = vadd.f32 %v70, %v1732
    %v1734 = vpop.f32.mrf.mxu0
    %1735 = vmatprep.mubr.f32.mxu0 0.0
    %1736 = vmatmul.mubr.f32.gmra.mxu0 %v1660
    %v1737 = vpop.f32.mrf.mxu0
    %v1738 = vadd.f32 %v71, %v1737
    %v1739 = vpop.f32.mrf.mxu0
    %1740 = vdwg.mxu0
    %v1741 = vsel %vm265, %v1733, -inf
    %1742 = vmax.xlane.f32.xlu0 %v1741
    %v1743 = vpop.xlane.xlu0 %1742
    %v1744 = vsel %vm265, %v1738, -inf
    %1745 = vmax.xlane.f32.xlu0 %v1744
    %v1746 = vpop.xlane.xlu0 %1745
    %v1747 = vsub.f32 %v1733, %v1743
    %v1748 = vsub.f32 %v1738, %v1746
    %v1749 = vmul.f32 %v1747, 1.442695
    %v1750 = vpow.pop %v1749
    %v1751 = vmul.f32 %v1748, 1.442695
    %v1752 = vpow.pop %v1751
    %v1753 = vsel %vm265, %v1750, 0.0
    %1754 = vadd.xlane.f32.xlu0 %v1753
    %v1755 = vpop.xlane.xlu0 %1754
    %v1756 = vsel %vm265, %v1752, 0.0
    %1757 = vadd.xlane.f32.xlu0 %v1756
    %v1758 = vpop.xlane.xlu0 %1757
    %v1759 = vrcp.pop %v1755
    %v1760 = vrcp.pop %v1758
    %v1761 = vmul.f32 %v1750, %v1759
    %v1762 = vmul.f32 %v1752, %v1760
    %1763 = vrot.lane.b32.xlu0 %v1444, 56
    %v1764 = vpop.permute.xlu0 %1763
    %1765 = vrot.lane.b32.xlu0 %v1449, 56
    %v1766 = vpop.permute.xlu0 %1765
    %v1770 = vsel %vm265, %v1761, 0
    %v1773 = vsel %vm265, %v1762, 0
    %1775 = vmatprep.subr.mxu0 0.0
    %1776 = vmatpush1.msra.mxu0 0.0
    %1777 = vmatprep.subr.mxu0 0.0
    %1778 = vmatpush1.msra.mxu0 0.0
    %1779 = vmatprep.subr.mxu0 0.0
    %1780 = vmatpush1.msra.mxu0 0.0
    %1781 = vmatprep.subr.mxu0 0.0
    %1782 = vmatpush1.msra.mxu0 0.0
    %1783 = vmatprep.subr.mxu0 0.0
    %1784 = vmatpush1.msra.mxu0 0.0
    %1785 = vmatprep.subr.mxu0 0.0
    %1786 = vmatpush1.msra.mxu0 0.0
    %1787 = vmatprep.subr.mxu0 0.0
    %1788 = vmatpush1.msra.mxu0 0.0
    %1789 = vmatprep.subr.mxu0 0.0
    %1790 = vmatpush1.msra.mxu0 0.0
    %1791 = vmatprep.subr.mxu0 0.0
    %1792 = vmatpush1.msra.mxu0 0.0
    %1793 = vmatprep.subr.mxu0 0.0
    %1794 = vmatpush1.msra.mxu0 0.0
    %1795 = vmatprep.subr.mxu0 0.0
    %1796 = vmatpush1.msra.mxu0 0.0
    %1797 = vmatprep.subr.mxu0 0.0
    %1798 = vmatpush1.msra.mxu0 0.0
    %1799 = vmatprep.subr.mxu0 0.0
    %1800 = vmatpush1.msra.mxu0 0.0
    %1801 = vmatprep.subr.mxu0 0.0
    %1802 = vmatpush1.msra.mxu0 0.0
    %1803 = vmatprep.subr.mxu0 0.0
    %1804 = vmatpush1.msra.mxu0 %v1766
    %1805 = vmatprep.subr.mxu0 0.0
    %1806 = vmatpush1.msra.mxu0 %v1764
    %1807 = vmatprep.subr.mxu0 0.0
    %1808 = vmatpush2.msra.mxu0 0.0
    %1809 = vmatprep.subr.mxu0 0.0
    %1810 = vmatpush2.msra.mxu0 0.0
    %1811 = vmatprep.subr.mxu0 0.0
    %1812 = vmatpush2.msra.mxu0 0.0
    %1813 = vmatprep.subr.mxu0 0.0
    %1814 = vmatpush2.msra.mxu0 0.0
    %1815 = vmatprep.subr.mxu0 0.0
    %1816 = vmatpush2.msra.mxu0 0.0
    %1817 = vmatprep.subr.mxu0 0.0
    %1818 = vmatpush2.msra.mxu0 0.0
    %1819 = vmatprep.subr.mxu0 0.0
    %1820 = vmatpush2.msra.mxu0 0.0
    %1821 = vmatprep.subr.mxu0 0.0
    %1822 = vmatpush2.msra.mxu0 0.0
    %1823 = vmatprep.subr.mxu0 0.0
    %1824 = vmatpush2.msra.mxu0 0.0
    %1825 = vmatprep.subr.mxu0 0.0
    %1826 = vmatpush2.msra.mxu0 0.0
    %1827 = vmatprep.subr.mxu0 0.0
    %1828 = vmatpush2.msra.mxu0 0.0
    %1829 = vmatprep.subr.mxu0 0.0
    %1830 = vmatpush2.msra.mxu0 0.0
    %1831 = vmatprep.subr.mxu0 0.0
    %1832 = vmatpush2.msra.mxu0 0.0
    %1833 = vmatprep.subr.mxu0 0.0
    %1834 = vmatpush2.msra.mxu0 0.0
    %1835 = vmatprep.subr.mxu0 0.0
    %1836 = vmatpush2.msra.mxu0 0.0
    %1837 = vmatprep.subr.mxu0 0.0
    %1838 = vmatpush2.msra.mxu0 0.0
    %1839 = vmatprep.mubr.f32.mxu0 0.0
    %1840 = vmatmul.mubr.f32.gmra.mxu0 %v1770
    %v1841 = vpop.f32.mrf.mxu0
    %v1842 = vadd.f32 0.0, %v1841
    %v1843 = vpop.f32.mrf.mxu0
    %1844 = vmatprep.mubr.f32.mxu0 0.0
    %1845 = vmatmul.mubr.f32.gmra.mxu0 %v1773
    %v1846 = vpop.f32.mrf.mxu0
    %v1847 = vadd.f32 0.0, %v1846
    %v1848 = vpop.f32.mrf.mxu0
    %1849 = vdwg.mxu0
    %1850 = vrot.lane.b32.xlu0 %v1444, 112
    %v1851 = vpop.permute.xlu0 %1850
    %1852 = vrot.lane.b32.xlu0 %v1449, 112
    %v1853 = vpop.permute.xlu0 %1852
    %1854 = vrot.lane.b32.xlu0 %v1444, 80
    %v1855 = vpop.permute.xlu0 %1854
    %1856 = vrot.lane.b32.xlu0 %v1449, 80
    %v1857 = vpop.permute.xlu0 %1856
    %v1858 = vsel %vm181, %v1851, 0
    %v1860 = vsel %vm181, %v1853, 0
    %v1862 = vsel %vm181, %v1855, 0
    %v1864 = vsel %vm181, %v1857, 0
    %1866 = vmatprep.subr.mxu0 0.0
    %1867 = vmatpush1.xpose.msra.mxu0 0.0
    %1868 = vmatprep.subr.mxu0 0.0
    %1869 = vmatpush1.xpose.msra.mxu0 0.0
    %1870 = vmatprep.subr.mxu0 0.0
    %1871 = vmatpush1.xpose.msra.mxu0 0.0
    %1872 = vmatprep.subr.mxu0 0.0
    %1873 = vmatpush1.xpose.msra.mxu0 0.0
    %1874 = vmatprep.subr.mxu0 0.0
    %1875 = vmatpush1.xpose.msra.mxu0 0.0
    %1876 = vmatprep.subr.mxu0 0.0
    %1877 = vmatpush1.xpose.msra.mxu0 0.0
    %1878 = vmatprep.subr.mxu0 0.0
    %1879 = vmatpush1.xpose.msra.mxu0 0.0
    %1880 = vmatprep.subr.mxu0 0.0
    %1881 = vmatpush1.xpose.msra.mxu0 0.0
    %1882 = vmatprep.subr.mxu0 0.0
    %1883 = vmatpush1.xpose.msra.mxu0 0.0
    %1884 = vmatprep.subr.mxu0 0.0
    %1885 = vmatpush1.xpose.msra.mxu0 0.0
    %1886 = vmatprep.subr.mxu0 0.0
    %1887 = vmatpush1.xpose.msra.mxu0 0.0
    %1888 = vmatprep.subr.mxu0 0.0
    %1889 = vmatpush1.xpose.msra.mxu0 0.0
    %1890 = vmatprep.subr.mxu0 0.0
    %1891 = vmatpush1.xpose.msra.mxu0 0.0
    %1892 = vmatprep.subr.mxu0 0.0
    %1893 = vmatpush1.xpose.msra.mxu0 0.0
    %1894 = vmatprep.subr.mxu0 0.0
    %1895 = vmatpush1.xpose.msra.mxu0 %v1864
    %1896 = vmatprep.subr.mxu0 0.0
    %1897 = vmatpush1.xpose.msra.mxu0 %v1862
    %1898 = vmatprep.subr.mxu0 0.0
    %1899 = vmatpush2.xpose.msra.mxu0 0.0
    %1900 = vmatprep.subr.mxu0 0.0
    %1901 = vmatpush2.xpose.msra.mxu0 0.0
    %1902 = vmatprep.subr.mxu0 0.0
    %1903 = vmatpush2.xpose.msra.mxu0 0.0
    %1904 = vmatprep.subr.mxu0 0.0
    %1905 = vmatpush2.xpose.msra.mxu0 0.0
    %1906 = vmatprep.subr.mxu0 0.0
    %1907 = vmatpush2.xpose.msra.mxu0 0.0
    %1908 = vmatprep.subr.mxu0 0.0
    %1909 = vmatpush2.xpose.msra.mxu0 0.0
    %1910 = vmatprep.subr.mxu0 0.0
    %1911 = vmatpush2.xpose.msra.mxu0 0.0
    %1912 = vmatprep.subr.mxu0 0.0
    %1913 = vmatpush2.xpose.msra.mxu0 0.0
    %1914 = vmatprep.subr.mxu0 0.0
    %1915 = vmatpush2.xpose.msra.mxu0 0.0
    %1916 = vmatprep.subr.mxu0 0.0
    %1917 = vmatpush2.xpose.msra.mxu0 0.0
    %1918 = vmatprep.subr.mxu0 0.0
    %1919 = vmatpush2.xpose.msra.mxu0 0.0
    %1920 = vmatprep.subr.mxu0 0.0
    %1921 = vmatpush2.xpose.msra.mxu0 0.0
    %1922 = vmatprep.subr.mxu0 0.0
    %1923 = vmatpush2.xpose.msra.mxu0 0.0
    %1924 = vmatprep.subr.mxu0 0.0
    %1925 = vmatpush2.xpose.msra.mxu0 0.0
    %1926 = vmatprep.subr.mxu0 0.0
    %1927 = vmatpush2.xpose.msra.mxu0 0.0
    %1928 = vmatprep.subr.mxu0 0.0
    %1929 = vmatpush2.xpose.msra.mxu0 0.0
    %1930 = vmatprep.mubr.f32.mxu0 0.0
    %1931 = vmatmul.mubr.f32.gmra.mxu0 %v1858
    %v1932 = vpop.f32.mrf.mxu0
    %v1933 = vadd.f32 %v70, %v1932
    %v1934 = vpop.f32.mrf.mxu0
    %1935 = vmatprep.mubr.f32.mxu0 0.0
    %1936 = vmatmul.mubr.f32.gmra.mxu0 %v1860
    %v1937 = vpop.f32.mrf.mxu0
    %v1938 = vadd.f32 %v71, %v1937
    %v1939 = vpop.f32.mrf.mxu0
    %1940 = vdwg.mxu0
    %v1941 = vsel %vm265, %v1933, -inf
    %1942 = vmax.xlane.f32.xlu0 %v1941
    %v1943 = vpop.xlane.xlu0 %1942
    %v1944 = vsel %vm265, %v1938, -inf
    %1945 = vmax.xlane.f32.xlu0 %v1944
    %v1946 = vpop.xlane.xlu0 %1945
    %v1947 = vsub.f32 %v1933, %v1943
    %v1948 = vsub.f32 %v1938, %v1946
    %v1949 = vmul.f32 %v1947, 1.442695
    %v1950 = vpow.pop %v1949
    %v1951 = vmul.f32 %v1948, 1.442695
    %v1952 = vpow.pop %v1951
    %v1953 = vsel %vm265, %v1950, 0.0
    %1954 = vadd.xlane.f32.xlu0 %v1953
    %v1955 = vpop.xlane.xlu0 %1954
    %v1956 = vsel %vm265, %v1952, 0.0
    %1957 = vadd.xlane.f32.xlu0 %v1956
    %v1958 = vpop.xlane.xlu0 %1957
    %v1959 = vrcp.pop %v1955
    %v1960 = vrcp.pop %v1958
    %v1961 = vmul.f32 %v1950, %v1959
    %v1962 = vmul.f32 %v1952, %v1960
    %1963 = vrot.lane.b32.xlu0 %v1444, 48
    %v1964 = vpop.permute.xlu0 %1963
    %1965 = vrot.lane.b32.xlu0 %v1449, 48
    %v1966 = vpop.permute.xlu0 %1965
    %v1970 = vsel %vm265, %v1961, 0
    %v1973 = vsel %vm265, %v1962, 0
    %1975 = vmatprep.subr.mxu0 0.0
    %1976 = vmatpush1.msra.mxu0 0.0
    %1977 = vmatprep.subr.mxu0 0.0
    %1978 = vmatpush1.msra.mxu0 0.0
    %1979 = vmatprep.subr.mxu0 0.0
    %1980 = vmatpush1.msra.mxu0 0.0
    %1981 = vmatprep.subr.mxu0 0.0
    %1982 = vmatpush1.msra.mxu0 0.0
    %1983 = vmatprep.subr.mxu0 0.0
    %1984 = vmatpush1.msra.mxu0 0.0
    %1985 = vmatprep.subr.mxu0 0.0
    %1986 = vmatpush1.msra.mxu0 0.0
    %1987 = vmatprep.subr.mxu0 0.0
    %1988 = vmatpush1.msra.mxu0 0.0
    %1989 = vmatprep.subr.mxu0 0.0
    %1990 = vmatpush1.msra.mxu0 0.0
    %1991 = vmatprep.subr.mxu0 0.0
    %1992 = vmatpush1.msra.mxu0 0.0
    %1993 = vmatprep.subr.mxu0 0.0
    %1994 = vmatpush1.msra.mxu0 0.0
    %1995 = vmatprep.subr.mxu0 0.0
    %1996 = vmatpush1.msra.mxu0 0.0
    %1997 = vmatprep.subr.mxu0 0.0
    %1998 = vmatpush1.msra.mxu0 0.0
    %1999 = vmatprep.subr.mxu0 0.0
    %2000 = vmatpush1.msra.mxu0 0.0
    %2001 = vmatprep.subr.mxu0 0.0
    %2002 = vmatpush1.msra.mxu0 0.0
    %2003 = vmatprep.subr.mxu0 0.0
    %2004 = vmatpush1.msra.mxu0 %v1966
    %2005 = vmatprep.subr.mxu0 0.0
    %2006 = vmatpush1.msra.mxu0 %v1964
    %2007 = vmatprep.subr.mxu0 0.0
    %2008 = vmatpush2.msra.mxu0 0.0
    %2009 = vmatprep.subr.mxu0 0.0
    %2010 = vmatpush2.msra.mxu0 0.0
    %2011 = vmatprep.subr.mxu0 0.0
    %2012 = vmatpush2.msra.mxu0 0.0
    %2013 = vmatprep.subr.mxu0 0.0
    %2014 = vmatpush2.msra.mxu0 0.0
    %2015 = vmatprep.subr.mxu0 0.0
    %2016 = vmatpush2.msra.mxu0 0.0
    %2017 = vmatprep.subr.mxu0 0.0
    %2018 = vmatpush2.msra.mxu0 0.0
    %2019 = vmatprep.subr.mxu0 0.0
    %2020 = vmatpush2.msra.mxu0 0.0
    %2021 = vmatprep.subr.mxu0 0.0
    %2022 = vmatpush2.msra.mxu0 0.0
    %2023 = vmatprep.subr.mxu0 0.0
    %2024 = vmatpush2.msra.mxu0 0.0
    %2025 = vmatprep.subr.mxu0 0.0
    %2026 = vmatpush2.msra.mxu0 0.0
    %2027 = vmatprep.subr.mxu0 0.0
    %2028 = vmatpush2.msra.mxu0 0.0
    %2029 = vmatprep.subr.mxu0 0.0
    %2030 = vmatpush2.msra.mxu0 0.0
    %2031 = vmatprep.subr.mxu0 0.0
    %2032 = vmatpush2.msra.mxu0 0.0
    %2033 = vmatprep.subr.mxu0 0.0
    %2034 = vmatpush2.msra.mxu0 0.0
    %2035 = vmatprep.subr.mxu0 0.0
    %2036 = vmatpush2.msra.mxu0 0.0
    %2037 = vmatprep.subr.mxu0 0.0
    %2038 = vmatpush2.msra.mxu0 0.0
    %2039 = vmatprep.mubr.f32.mxu0 0.0
    %2040 = vmatmul.mubr.f32.gmra.mxu0 %v1970
    %v2041 = vpop.f32.mrf.mxu0
    %v2042 = vadd.f32 0.0, %v2041
    %v2043 = vpop.f32.mrf.mxu0
    %2044 = vmatprep.mubr.f32.mxu0 0.0
    %2045 = vmatmul.mubr.f32.gmra.mxu0 %v1973
    %v2046 = vpop.f32.mrf.mxu0
    %v2047 = vadd.f32 0.0, %v2046
    %v2048 = vpop.f32.mrf.mxu0
    %2049 = vdwg.mxu0
    %2050 = vrot.lane.b32.xlu0 %v1444, 104
    %v2051 = vpop.permute.xlu0 %2050
    %2052 = vrot.lane.b32.xlu0 %v1449, 104
    %v2053 = vpop.permute.xlu0 %2052
    %2054 = vrot.lane.b32.xlu0 %v1444, 72
    %v2055 = vpop.permute.xlu0 %2054
    %2056 = vrot.lane.b32.xlu0 %v1449, 72
    %v2057 = vpop.permute.xlu0 %2056
    %v2058 = vsel %vm181, %v2051, 0
    %v2060 = vsel %vm181, %v2053, 0
    %v2062 = vsel %vm181, %v2055, 0
    %v2064 = vsel %vm181, %v2057, 0
    %2066 = vmatprep.subr.mxu0 0.0
    %2067 = vmatpush1.xpose.msra.mxu0 0.0
    %2068 = vmatprep.subr.mxu0 0.0
    %2069 = vmatpush1.xpose.msra.mxu0 0.0
    %2070 = vmatprep.subr.mxu0 0.0
    %2071 = vmatpush1.xpose.msra.mxu0 0.0
    %2072 = vmatprep.subr.mxu0 0.0
    %2073 = vmatpush1.xpose.msra.mxu0 0.0
    %2074 = vmatprep.subr.mxu0 0.0
    %2075 = vmatpush1.xpose.msra.mxu0 0.0
    %2076 = vmatprep.subr.mxu0 0.0
    %2077 = vmatpush1.xpose.msra.mxu0 0.0
    %2078 = vmatprep.subr.mxu0 0.0
    %2079 = vmatpush1.xpose.msra.mxu0 0.0
    %2080 = vmatprep.subr.mxu0 0.0
    %2081 = vmatpush1.xpose.msra.mxu0 0.0
    %2082 = vmatprep.subr.mxu0 0.0
    %2083 = vmatpush1.xpose.msra.mxu0 0.0
    %2084 = vmatprep.subr.mxu0 0.0
    %2085 = vmatpush1.xpose.msra.mxu0 0.0
    %2086 = vmatprep.subr.mxu0 0.0
    %2087 = vmatpush1.xpose.msra.mxu0 0.0
    %2088 = vmatprep.subr.mxu0 0.0
    %2089 = vmatpush1.xpose.msra.mxu0 0.0
    %2090 = vmatprep.subr.mxu0 0.0
    %2091 = vmatpush1.xpose.msra.mxu0 0.0
    %2092 = vmatprep.subr.mxu0 0.0
    %2093 = vmatpush1.xpose.msra.mxu0 0.0
    %2094 = vmatprep.subr.mxu0 0.0
    %2095 = vmatpush1.xpose.msra.mxu0 %v2064
    %2096 = vmatprep.subr.mxu0 0.0
    %2097 = vmatpush1.xpose.msra.mxu0 %v2062
    %2098 = vmatprep.subr.mxu0 0.0
    %2099 = vmatpush2.xpose.msra.mxu0 0.0
    %2100 = vmatprep.subr.mxu0 0.0
    %2101 = vmatpush2.xpose.msra.mxu0 0.0
    %2102 = vmatprep.subr.mxu0 0.0
    %2103 = vmatpush2.xpose.msra.mxu0 0.0
    %2104 = vmatprep.subr.mxu0 0.0
    %2105 = vmatpush2.xpose.msra.mxu0 0.0
    %2106 = vmatprep.subr.mxu0 0.0
    %2107 = vmatpush2.xpose.msra.mxu0 0.0
    %2108 = vmatprep.subr.mxu0 0.0
    %2109 = vmatpush2.xpose.msra.mxu0 0.0
    %2110 = vmatprep.subr.mxu0 0.0
    %2111 = vmatpush2.xpose.msra.mxu0 0.0
    %2112 = vmatprep.subr.mxu0 0.0
    %2113 = vmatpush2.xpose.msra.mxu0 0.0
    %2114 = vmatprep.subr.mxu0 0.0
    %2115 = vmatpush2.xpose.msra.mxu0 0.0
    %2116 = vmatprep.subr.mxu0 0.0
    %2117 = vmatpush2.xpose.msra.mxu0 0.0
    %2118 = vmatprep.subr.mxu0 0.0
    %2119 = vmatpush2.xpose.msra.mxu0 0.0
    %2120 = vmatprep.subr.mxu0 0.0
    %2121 = vmatpush2.xpose.msra.mxu0 0.0
    %2122 = vmatprep.subr.mxu0 0.0
    %2123 = vmatpush2.xpose.msra.mxu0 0.0
    %2124 = vmatprep.subr.mxu0 0.0
    %2125 = vmatpush2.xpose.msra.mxu0 0.0
    %2126 = vmatprep.subr.mxu0 0.0
    %2127 = vmatpush2.xpose.msra.mxu0 0.0
    %2128 = vmatprep.subr.mxu0 0.0
    %2129 = vmatpush2.xpose.msra.mxu0 0.0
    %2130 = vmatprep.mubr.f32.mxu0 0.0
    %2131 = vmatmul.mubr.f32.gmra.mxu0 %v2058
    %v2132 = vpop.f32.mrf.mxu0
    %v2133 = vadd.f32 %v70, %v2132
    %v2134 = vpop.f32.mrf.mxu0
    %2135 = vmatprep.mubr.f32.mxu0 0.0
    %2136 = vmatmul.mubr.f32.gmra.mxu0 %v2060
    %v2137 = vpop.f32.mrf.mxu0
    %v2138 = vadd.f32 %v71, %v2137
    %v2139 = vpop.f32.mrf.mxu0
    %2140 = vdwg.mxu0
    %v2141 = vsel %vm265, %v2133, -inf
    %2142 = vmax.xlane.f32.xlu0 %v2141
    %v2143 = vpop.xlane.xlu0 %2142
    %v2144 = vsel %vm265, %v2138, -inf
    %2145 = vmax.xlane.f32.xlu0 %v2144
    %v2146 = vpop.xlane.xlu0 %2145
    %v2147 = vsub.f32 %v2133, %v2143
    %v2148 = vsub.f32 %v2138, %v2146
    %v2149 = vmul.f32 %v2147, 1.442695
    %v2150 = vpow.pop %v2149
    %v2151 = vmul.f32 %v2148, 1.442695
    %v2152 = vpow.pop %v2151
    %v2153 = vsel %vm265, %v2150, 0.0
    %2154 = vadd.xlane.f32.xlu0 %v2153
    %v2155 = vpop.xlane.xlu0 %2154
    %v2156 = vsel %vm265, %v2152, 0.0
    %2157 = vadd.xlane.f32.xlu0 %v2156
    %v2158 = vpop.xlane.xlu0 %2157
    %v2159 = vrcp.pop %v2155
    %v2160 = vrcp.pop %v2158
    %v2161 = vmul.f32 %v2150, %v2159
    %v2162 = vmul.f32 %v2152, %v2160
    %2163 = vrot.lane.b32.xlu0 %v1444, 40
    %v2164 = vpop.permute.xlu0 %2163
    %2165 = vrot.lane.b32.xlu0 %v1449, 40
    %v2166 = vpop.permute.xlu0 %2165
    %v2170 = vsel %vm265, %v2161, 0
    %v2173 = vsel %vm265, %v2162, 0
    %2175 = vmatprep.subr.mxu0 0.0
    %2176 = vmatpush1.msra.mxu0 0.0
    %2177 = vmatprep.subr.mxu0 0.0
    %2178 = vmatpush1.msra.mxu0 0.0
    %2179 = vmatprep.subr.mxu0 0.0
    %2180 = vmatpush1.msra.mxu0 0.0
    %2181 = vmatprep.subr.mxu0 0.0
    %2182 = vmatpush1.msra.mxu0 0.0
    %2183 = vmatprep.subr.mxu0 0.0
    %2184 = vmatpush1.msra.mxu0 0.0
    %2185 = vmatprep.subr.mxu0 0.0
    %2186 = vmatpush1.msra.mxu0 0.0
    %2187 = vmatprep.subr.mxu0 0.0
    %2188 = vmatpush1.msra.mxu0 0.0
    %2189 = vmatprep.subr.mxu0 0.0
    %2190 = vmatpush1.msra.mxu0 0.0
    %2191 = vmatprep.subr.mxu0 0.0
    %2192 = vmatpush1.msra.mxu0 0.0
    %2193 = vmatprep.subr.mxu0 0.0
    %2194 = vmatpush1.msra.mxu0 0.0
    %2195 = vmatprep.subr.mxu0 0.0
    %2196 = vmatpush1.msra.mxu0 0.0
    %2197 = vmatprep.subr.mxu0 0.0
    %2198 = vmatpush1.msra.mxu0 0.0
    %2199 = vmatprep.subr.mxu0 0.0
    %2200 = vmatpush1.msra.mxu0 0.0
    %2201 = vmatprep.subr.mxu0 0.0
    %2202 = vmatpush1.msra.mxu0 0.0
    %2203 = vmatprep.subr.mxu0 0.0
    %2204 = vmatpush1.msra.mxu0 %v2166
    %2205 = vmatprep.subr.mxu0 0.0
    %2206 = vmatpush1.msra.mxu0 %v2164
    %2207 = vmatprep.subr.mxu0 0.0
    %2208 = vmatpush2.msra.mxu0 0.0
    %2209 = vmatprep.subr.mxu0 0.0
    %2210 = vmatpush2.msra.mxu0 0.0
    %2211 = vmatprep.subr.mxu0 0.0
    %2212 = vmatpush2.msra.mxu0 0.0
    %2213 = vmatprep.subr.mxu0 0.0
    %2214 = vmatpush2.msra.mxu0 0.0
    %2215 = vmatprep.subr.mxu0 0.0
    %2216 = vmatpush2.msra.mxu0 0.0
    %2217 = vmatprep.subr.mxu0 0.0
    %2218 = vmatpush2.msra.mxu0 0.0
    %2219 = vmatprep.subr.mxu0 0.0
    %2220 = vmatpush2.msra.mxu0 0.0
    %2221 = vmatprep.subr.mxu0 0.0
    %2222 = vmatpush2.msra.mxu0 0.0
    %2223 = vmatprep.subr.mxu0 0.0
    %2224 = vmatpush2.msra.mxu0 0.0
    %2225 = vmatprep.subr.mxu0 0.0
    %2226 = vmatpush2.msra.mxu0 0.0
    %2227 = vmatprep.subr.mxu0 0.0
    %2228 = vmatpush2.msra.mxu0 0.0
    %2229 = vmatprep.subr.mxu0 0.0
    %2230 = vmatpush2.msra.mxu0 0.0
    %2231 = vmatprep.subr.mxu0 0.0
    %2232 = vmatpush2.msra.mxu0 0.0
    %2233 = vmatprep.subr.mxu0 0.0
    %2234 = vmatpush2.msra.mxu0 0.0
    %2235 = vmatprep.subr.mxu0 0.0
    %2236 = vmatpush2.msra.mxu0 0.0
    %2237 = vmatprep.subr.mxu0 0.0
    %2238 = vmatpush2.msra.mxu0 0.0
    %2239 = vmatprep.mubr.f32.mxu0 0.0
    %2240 = vmatmul.mubr.f32.gmra.mxu0 %v2170
    %v2241 = vpop.f32.mrf.mxu0
    %v2242 = vadd.f32 0.0, %v2241
    %v2243 = vpop.f32.mrf.mxu0
    %2244 = vmatprep.mubr.f32.mxu0 0.0
    %2245 = vmatmul.mubr.f32.gmra.mxu0 %v2173
    %v2246 = vpop.f32.mrf.mxu0
    %v2247 = vadd.f32 0.0, %v2246
    %v2248 = vpop.f32.mrf.mxu0
    %2249 = vdwg.mxu0
    %2252 = vrot.lane.b32.xlu0 %v1842, 8
    %v2253 = vpop.permute.xlu0 %2252
    %2254 = vrot.lane.b32.xlu0 %v1847, 8
    %v2255 = vpop.permute.xlu0 %2254
    %2260 = vrot.lane.b32.xlu0 %v2042, 16
    %v2261 = vpop.permute.xlu0 %2260
    %2262 = vrot.lane.b32.xlu0 %v2047, 16
    %v2263 = vpop.permute.xlu0 %2262
    %2268 = vrot.lane.b32.xlu0 %v2242, 24
    %v2269 = vpop.permute.xlu0 %2268
    %2270 = vrot.lane.b32.xlu0 %v2247, 24
    %v2271 = vpop.permute.xlu0 %2270
    %v2274 = vsel %vm181, %v1642, %v2253
    %v2275 = vsel %vm181, %v1647, %v2255
    %v2276 = vsel %vm265, %v2274, %v2261
    %v2277 = vsel %vm265, %v2275, %v2263
    %v2278 = vsel %vm1003, %v2276, %v2269
    %v2279 = vsel %vm1003, %v2277, %v2271
    %v2280 = vlaneseq
    %v2281 = vshrl.u32 %v2280, 7
    %v2282 = vsub.s32 0, %v2281
    %v2283 = vrot.slane %v1370, %v2282
    %v2285 = vsel %vm93, %v2278, 0
    %v2288 = vsel %vm93, %v2279, 0
    %2290 = vmatprep.subr.mxu0 0.0
    %2291 = vmatpush1.msra.mxu0 0.0
    %2292 = vmatprep.subr.mxu0 0.0
    %2293 = vmatpush1.msra.mxu0 0.0
    %2294 = vmatprep.subr.mxu0 0.0
    %2295 = vmatpush1.msra.mxu0 0.0
    %2296 = vmatprep.subr.mxu0 0.0
    %2297 = vmatpush1.msra.mxu0 0.0
    %2298 = vmatprep.subr.mxu0 0.0
    %2299 = vmatpush1.msra.mxu0 0.0
    %2300 = vmatprep.subr.mxu0 0.0
    %2301 = vmatpush1.msra.mxu0 0.0
    %2302 = vmatprep.subr.mxu0 0.0
    %2303 = vmatpush1.msra.mxu0 0.0
    %2304 = vmatprep.subr.mxu0 0.0
    %2305 = vmatpush1.msra.mxu0 0.0
    %2306 = vmatprep.subr.mxu0 0.0
    %2307 = vmatpush1.msra.mxu0 0.0
    %2308 = vmatprep.subr.mxu0 0.0
    %2309 = vmatpush1.msra.mxu0 0.0
    %2310 = vmatprep.subr.mxu0 0.0
    %2311 = vmatpush1.msra.mxu0 0.0
    %2312 = vmatprep.subr.mxu0 0.0
    %2313 = vmatpush1.msra.mxu0 0.0
    %2314 = vmatprep.subr.mxu0 0.0
    %2315 = vmatpush1.msra.mxu0 %v1354
    %2316 = vmatprep.subr.mxu0 0.0
    %2317 = vmatpush1.msra.mxu0 %v1353
    %2318 = vmatprep.subr.mxu0 0.0
    %2319 = vmatpush1.msra.mxu0 %v1352
    %2320 = vmatprep.subr.mxu0 0.0
    %2321 = vmatpush1.msra.mxu0 %v1351
    %2322 = vmatprep.subr.mxu0 0.0
    %2323 = vmatpush2.msra.mxu0 0.0
    %2324 = vmatprep.subr.mxu0 0.0
    %2325 = vmatpush2.msra.mxu0 0.0
    %2326 = vmatprep.subr.mxu0 0.0
    %2327 = vmatpush2.msra.mxu0 0.0
    %2328 = vmatprep.subr.mxu0 0.0
    %2329 = vmatpush2.msra.mxu0 0.0
    %2330 = vmatprep.subr.mxu0 0.0
    %2331 = vmatpush2.msra.mxu0 0.0
    %2332 = vmatprep.subr.mxu0 0.0
    %2333 = vmatpush2.msra.mxu0 0.0
    %2334 = vmatprep.subr.mxu0 0.0
    %2335 = vmatpush2.msra.mxu0 0.0
    %2336 = vmatprep.subr.mxu0 0.0
    %2337 = vmatpush2.msra.mxu0 0.0
    %2338 = vmatprep.subr.mxu0 0.0
    %2339 = vmatpush2.msra.mxu0 0.0
    %2340 = vmatprep.subr.mxu0 0.0
    %2341 = vmatpush2.msra.mxu0 0.0
    %2342 = vmatprep.subr.mxu0 0.0
    %2343 = vmatpush2.msra.mxu0 0.0
    %2344 = vmatprep.subr.mxu0 0.0
    %2345 = vmatpush2.msra.mxu0 0.0
    %2346 = vmatprep.subr.mxu0 0.0
    %2347 = vmatpush2.msra.mxu0 0.0
    %2348 = vmatprep.subr.mxu0 0.0
    %2349 = vmatpush2.msra.mxu0 0.0
    %2350 = vmatprep.subr.mxu0 0.0
    %2351 = vmatpush2.msra.mxu0 0.0
    %2352 = vmatprep.subr.mxu0 0.0
    %2353 = vmatpush2.msra.mxu0 0.0
    %2354 = vmatprep.mubr.f32.mxu0 0.0
    %2355 = vmatmul.mubr.f32.gmra.mxu0 %v2285
    %v2356 = vpop.f32.mrf.mxu0
    %v2357 = vadd.f32 %v2283, %v2356
    %v2358 = vpop.f32.mrf.mxu0
    %2359 = vmatprep.mubr.f32.mxu0 0.0
    %2360 = vmatmul.mubr.f32.gmra.mxu0 %v2288
    %v2361 = vpop.f32.mrf.mxu0
    %v2362 = vadd.f32 %v2283, %v2361
    %v2363 = vpop.f32.mrf.mxu0
    %2364 = vdwg.mxu0
    %v2365 = vadd.f32 %v2357, %v1343
    %v2366 = vadd.f32 %v2362, %v1344
    %v2367 = vsel %vm93, %v2365, 0.0
    %2368 = vadd.xlane.f32.xlu0 %v2367
    %v2369 = vpop.xlane.xlu0 %2368
    %v2370 = vsel %vm93, %v2366, 0.0
    %2371 = vadd.xlane.f32.xlu0 %v2370
    %v2372 = vpop.xlane.xlu0 %2371
    %v2373 = vmul.f32 %v2369, %v1099
    %v2374 = vmul.f32 %v2372, %v1099
    %v2375 = vsub.f32 %v2365, %v2373
    %v2376 = vsub.f32 %v2366, %v2374
    %v2377 = vmul.f32 %v2375, %v2375
    %v2378 = vmul.f32 %v2376, %v2376
    %v2379 = vsel %vm93, %v2377, 0.0
    %2380 = vadd.xlane.f32.xlu0 %v2379
    %v2381 = vpop.xlane.xlu0 %2380
    %v2382 = vsel %vm93, %v2378, 0.0
    %2383 = vadd.xlane.f32.xlu0 %v2382
    %v2384 = vpop.xlane.xlu0 %2383
    %v2385 = vmul.f32 %v2381, %v1099
    %v2386 = vmul.f32 %v2384, %v1099
    %v2387 = vadd.f32 %v2385, 1e-05
    %v2388 = vadd.f32 %v2386, 1e-05
    %v2389 = vrsqrt.pop %v2387
    %v2390 = vrsqrt.pop %v2388
    %v2391 = vmul.f32 %v2375, %v2389
    %v2392 = vmul.f32 %v2376, %v2390
    %v2393 = vlaneseq
    %v2394 = vshrl.u32 %v2393, 7
    %v2395 = vsub.s32 1, %v2394
    %v2396 = vrot.slane %v1370, %v2395
    %v2397 = vmul.f32 %v2391, %v2396
    %v2398 = vmul.f32 %v2392, %v2396
    %v2399 = vlaneseq
    %v2400 = vshrl.u32 %v2399, 7
    %v2401 = vsub.s32 2, %v2400
    %v2402 = vrot.slane %v1370, %v2401
    %v2403 = vadd.f32 %v2397, %v2402
    %v2404 = vadd.f32 %v2398, %v2402
    %v2405 = vlaneseq
    %v2406 = vshrl.u32 %v2405, 7
    %v2407 = vsub.s32 3, %v2406
    %v2408 = vrot.slane %v1370, %v2407
    %v2410 = vsel %vm93, %v2403, 0
    %v2413 = vsel %vm93, %v2404, 0
    %2415 = vmatprep.subr.mxu0 0.0
    %2416 = vmatpush1.msra.mxu0 0.0
    %2417 = vmatprep.subr.mxu0 0.0
    %2418 = vmatpush1.msra.mxu0 0.0
    %2419 = vmatprep.subr.mxu0 0.0
    %2420 = vmatpush1.msra.mxu0 0.0
    %2421 = vmatprep.subr.mxu0 0.0
    %2422 = vmatpush1.msra.mxu0 0.0
    %2423 = vmatprep.subr.mxu0 0.0
    %2424 = vmatpush1.msra.mxu0 0.0
    %2425 = vmatprep.subr.mxu0 0.0
    %2426 = vmatpush1.msra.mxu0 0.0
    %2427 = vmatprep.subr.mxu0 0.0
    %2428 = vmatpush1.msra.mxu0 0.0
    %2429 = vmatprep.subr.mxu0 0.0
    %2430 = vmatpush1.msra.mxu0 0.0
    %2431 = vmatprep.subr.mxu0 0.0
    %2432 = vmatpush1.msra.mxu0 0.0
    %2433 = vmatprep.subr.mxu0 0.0
    %2434 = vmatpush1.msra.mxu0 0.0
    %2435 = vmatprep.subr.mxu0 0.0
    %2436 = vmatpush1.msra.mxu0 0.0
    %2437 = vmatprep.subr.mxu0 0.0
    %2438 = vmatpush1.msra.mxu0 0.0
    %2439 = vmatprep.subr.mxu0 0.0
    %2440 = vmatpush1.msra.mxu0 %v1359
    %2441 = vmatprep.subr.mxu0 0.0
    %2442 = vmatpush1.msra.mxu0 %v1358
    %2443 = vmatprep.subr.mxu0 0.0
    %2444 = vmatpush1.msra.mxu0 %v1357
    %2445 = vmatprep.subr.mxu0 0.0
    %2446 = vmatpush1.msra.mxu0 %v1356
    %2447 = vmatprep.subr.mxu0 0.0
    %2448 = vmatpush2.msra.mxu0 0.0
    %2449 = vmatprep.subr.mxu0 0.0
    %2450 = vmatpush2.msra.mxu0 0.0
    %2451 = vmatprep.subr.mxu0 0.0
    %2452 = vmatpush2.msra.mxu0 0.0
    %2453 = vmatprep.subr.mxu0 0.0
    %2454 = vmatpush2.msra.mxu0 0.0
    %2455 = vmatprep.subr.mxu0 0.0
    %2456 = vmatpush2.msra.mxu0 0.0
    %2457 = vmatprep.subr.mxu0 0.0
    %2458 = vmatpush2.msra.mxu0 0.0
    %2459 = vmatprep.subr.mxu0 0.0
    %2460 = vmatpush2.msra.mxu0 0.0
    %2461 = vmatprep.subr.mxu0 0.0
    %2462 = vmatpush2.msra.mxu0 0.0
    %2463 = vmatprep.subr.mxu0 0.0
    %2464 = vmatpush2.msra.mxu0 0.0
    %2465 = vmatprep.subr.mxu0 0.0
    %2466 = vmatpush2.msra.mxu0 0.0
    %2467 = vmatprep.subr.mxu0 0.0
    %2468 = vmatpush2.msra.mxu0 0.0
    %2469 = vmatprep.subr.mxu0 0.0
    %2470 = vmatpush2.msra.mxu0 0.0
    %2471 = vmatprep.subr.mxu0 0.0
    %2472 = vmatpush2.msra.mxu0 0.0
    %2473 = vmatprep.subr.mxu0 0.0
    %2474 = vmatpush2.msra.mxu0 0.0
    %2475 = vmatprep.subr.mxu0 0.0
    %2476 = vmatpush2.msra.mxu0 0.0
    %2477 = vmatprep.subr.mxu0 0.0
    %2478 = vmatpush2.msra.mxu0 0.0
    %2479 = vmatprep.mubr.f32.mxu0 0.0
    %2480 = vmatmul.mubr.f32.gmra.mxu0 %v2410
    %v2481 = vpop.f32.mrf.mxu0
    %v2482 = vadd.f32 %v2408, %v2481
    %v2483 = vpop.f32.mrf.mxu0
    %2484 = vmatprep.mubr.f32.mxu0 0.0
    %2485 = vmatmul.mubr.f32.gmra.mxu0 %v2413
    %v2486 = vpop.f32.mrf.mxu0
    %v2487 = vadd.f32 %v2408, %v2486
    %v2488 = vpop.f32.mrf.mxu0
    %2489 = vdwg.mxu0
    %v2490 = vmax.f32 %v2482, 0.0
    %v2491 = vmax.f32 %v2487, 0.0
    %v2492 = vlaneseq
    %v2493 = vshrl.u32 %v2492, 7
    %v2494 = vsub.s32 4, %v2493
    %v2495 = vrot.slane %v1370, %v2494
    %v2497 = vsel %vm1223, %v2490, 0
    %v2500 = vsel %vm1223, %v2491, 0
    %2502 = vmatprep.subr.mxu0 0.0
    %2503 = vmatpush1.msra.mxu0 0.0
    %2504 = vmatprep.subr.mxu0 0.0
    %2505 = vmatpush1.msra.mxu0 0.0
    %2506 = vmatprep.subr.mxu0 0.0
    %2507 = vmatpush1.msra.mxu0 0.0
    %2508 = vmatprep.subr.mxu0 0.0
    %2509 = vmatpush1.msra.mxu0 0.0
    %2510 = vmatprep.subr.mxu0 0.0
    %2511 = vmatpush1.msra.mxu0 0.0
    %2512 = vmatprep.subr.mxu0 0.0
    %2513 = vmatpush1.msra.mxu0 0.0
    %2514 = vmatprep.subr.mxu0 0.0
    %2515 = vmatpush1.msra.mxu0 0.0
    %2516 = vmatprep.subr.mxu0 0.0
    %2517 = vmatpush1.msra.mxu0 0.0
    %2518 = vmatprep.subr.mxu0 0.0
    %2519 = vmatpush1.msra.mxu0 %v1368
    %2520 = vmatprep.subr.mxu0 0.0
    %2521 = vmatpush1.msra.mxu0 %v1367
    %2522 = vmatprep.subr.mxu0 0.0
    %2523 = vmatpush1.msra.mxu0 %v1366
    %2524 = vmatprep.subr.mxu0 0.0
    %2525 = vmatpush1.msra.mxu0 %v1365
    %2526 = vmatprep.subr.mxu0 0.0
    %2527 = vmatpush1.msra.mxu0 %v1364
    %2528 = vmatprep.subr.mxu0 0.0
    %2529 = vmatpush1.msra.mxu0 %v1363
    %2530 = vmatprep.subr.mxu0 0.0
    %2531 = vmatpush1.msra.mxu0 %v1362
    %2532 = vmatprep.subr.mxu0 0.0
    %2533 = vmatpush1.msra.mxu0 %v1361
    %2534 = vmatprep.subr.mxu0 0.0
    %2535 = vmatpush2.msra.mxu0 0.0
    %2536 = vmatprep.subr.mxu0 0.0
    %2537 = vmatpush2.msra.mxu0 0.0
    %2538 = vmatprep.subr.mxu0 0.0
    %2539 = vmatpush2.msra.mxu0 0.0
    %2540 = vmatprep.subr.mxu0 0.0
    %2541 = vmatpush2.msra.mxu0 0.0
    %2542 = vmatprep.subr.mxu0 0.0
    %2543 = vmatpush2.msra.mxu0 0.0
    %2544 = vmatprep.subr.mxu0 0.0
    %2545 = vmatpush2.msra.mxu0 0.0
    %2546 = vmatprep.subr.mxu0 0.0
    %2547 = vmatpush2.msra.mxu0 0.0
    %2548 = vmatprep.subr.mxu0 0.0
    %2549 = vmatpush2.msra.mxu0 0.0
    %2550 = vmatprep.subr.mxu0 0.0
    %2551 = vmatpush2.msra.mxu0 0.0
    %2552 = vmatprep.subr.mxu0 0.0
    %2553 = vmatpush2.msra.mxu0 0.0
    %2554 = vmatprep.subr.mxu0 0.0
    %2555 = vmatpush2.msra.mxu0 0.0
    %2556 = vmatprep.subr.mxu0 0.0
    %2557 = vmatpush2.msra.mxu0 0.0
    %2558 = vmatprep.subr.mxu0 0.0
    %2559 = vmatpush2.msra.mxu0 0.0
    %2560 = vmatprep.subr.mxu0 0.0
    %2561 = vmatpush2.msra.mxu0 0.0
    %2562 = vmatprep.subr.mxu0 0.0
    %2563 = vmatpush2.msra.mxu0 0.0
    %2564 = vmatprep.subr.mxu0 0.0
    %2565 = vmatpush2.msra.mxu0 0.0
    %2566 = vmatprep.mubr.f32.mxu0 0.0
    %2567 = vmatmul.mubr.f32.gmra.mxu0 %v2497
    %v2568 = vpop.f32.mrf.mxu0
    %v2569 = vadd.f32 %v2495, %v2568
    %v2570 = vpop.f32.mrf.mxu0
    %2571 = vmatprep.mubr.f32.mxu0 0.0
    %2572 = vmatmul.mubr.f32.gmra.mxu0 %v2500
    %v2573 = vpop.f32.mrf.mxu0
    %v2574 = vadd.f32 %v2495, %v2573
    %v2575 = vpop.f32.mrf.mxu0
    %2576 = vdwg.mxu0
    %v2577 = vadd.f32 %v2569, %v2403
    %v2578 = vadd.f32 %v2574, %v2404
    %v2579 = vsel %vm93, %v2577, 0.0
    %2580 = vadd.xlane.f32.xlu0 %v2579
    %v2581 = vpop.xlane.xlu0 %2580
    %v2582 = vsel %vm93, %v2578, 0.0
    %2583 = vadd.xlane.f32.xlu0 %v2582
    %v2584 = vpop.xlane.xlu0 %2583
    %v2585 = vmul.f32 %v2581, %v1099
    %v2586 = vmul.f32 %v2584, %v1099
    %v2587 = vsub.f32 %v2577, %v2585
    %v2588 = vsub.f32 %v2578, %v2586
    %v2589 = vmul.f32 %v2587, %v2587
    %v2590 = vmul.f32 %v2588, %v2588
    %v2591 = vsel %vm93, %v2589, 0.0
    %2592 = vadd.xlane.f32.xlu0 %v2591
    %v2593 = vpop.xlane.xlu0 %2592
    %v2594 = vsel %vm93, %v2590, 0.0
    %2595 = vadd.xlane.f32.xlu0 %v2594
    %v2596 = vpop.xlane.xlu0 %2595
    %v2597 = vmul.f32 %v2593, %v1099
    %v2598 = vmul.f32 %v2596, %v1099
    %v2599 = vadd.f32 %v2597, 1e-05
    %v2600 = vadd.f32 %v2598, 1e-05
    %v2601 = vrsqrt.pop %v2599
    %v2602 = vrsqrt.pop %v2600
    %v2603 = vmul.f32 %v2587, %v2601
    %v2604 = vmul.f32 %v2588, %v2602
    %v2605 = vlaneseq
    %v2606 = vshrl.u32 %v2605, 7
    %v2607 = vsub.s32 5, %v2606
    %v2608 = vrot.slane %v1370, %v2607
    %v2609 = vmul.f32 %v2603, %v2608
    %v2610 = vmul.f32 %v2604, %v2608
    %v2611 = vlaneseq
    %v2612 = vshrl.u32 %v2611, 7
    %v2613 = vsub.s32 6, %v2612
    %v2614 = vrot.slane %v1370, %v2613
    %v2615 = vadd.f32 %v2609, %v2614
    %v2616 = vadd.f32 %v2610, %v2614
    %2617 = vst.msk [vmem:[#allocation8] sm:$0xff] %vm93, %v2615
    %2618 = vst.msk [vmem:[#allocation8 + $0x8] sm:$0xff] %vm93, %v2616
    // Predicated region
    $region42: #{tpu_custom_call.1} parent=1 // pred_check
      _
    $region43: #{tpu_custom_call.1} parent=1 // pred_check_branch
      %2620 = sbr.rel (0) target = $region45
    $region44: #{tpu_custom_call.1} parent=1 // pred_region
      %s2622 = ssub.s32 256, 256
      %2623 = vsyncadd [#allocation4], %s2622
      %s2624 = sshll.u32 [#allocation8], 4
      %s2625 = int_to_ptr.vmem [resolvable:$true] %s2624
      %2630 = dma.vmem_to_hbm [thread:$0]  %s2625, 256, %s7, [#allocation4], 128, 128, 8
    $region45: #{tpu_custom_call.1} parent=1 // pred_fallthru
      _
    // Predicated region
    $region46: #{tpu_custom_call.1} parent=1 // pred_check
      _
    $region47: #{tpu_custom_call.1} parent=1 // pred_check_branch
      %2632 = sbr.rel (0) target = $region49
    $region48: #{tpu_custom_call.1} parent=1 // pred_region
      %2633 = dma.done [#allocation4], 256
    $region49: #{tpu_custom_call.1} parent=1 // pred_fallthru
      _
    %2634 = vsyncpa [#allocation3], 1
    %2635 = vsyncpa [#allocation6], 1
    %2636 = vsyncpa [#allocation4], 1

</llo_original>
